<compile_context>
chip_gen: v7x
topology: tpu7x:2x2x1
jax: 0.10.0
libtpu: 0.0.40
codegen_flags: <defaults>
</compile_context>

<pallas_src>
import functools

import jax
import jax.numpy as jnp
from jax.experimental import pallas as pl
from jax.experimental.pallas import tpu as pltpu


def _round_up(n, m):
    return ((n + m - 1) // m) * m


def _pick_time_block(sp):
    """sp is a multiple of 8.  Cap at 32 so the static inner unroll stays small
    (past ~32 a lax.fori_loop with partial unroll would be preferable)."""
    for cand in (32, 16, 8):
        if sp % cand == 0:
            return cand
    return 8


def _pick_batch_block(bp):
    """Largest block <= 128 dividing bp; keep >= 2 batch blocks when bp >= 16
    so the batch-parallel grid axis can shard across TensorCores."""
    for cand in (128, 64, 32, 16, 8):
        if bp % cand == 0 and (bp // cand >= 2 or bp <= 8):
            return cand
    return 8


# --------------------------------------------------------------------------
# Fused kernel: one grid step = one (batch block, time block)
# --------------------------------------------------------------------------
def _lstm_fused_kernel(x_ref, wx_ref, wh_ref, b_ref, h0_ref, c0_ref,
                       h_hist_ref, c_out_ref, gx_s, h_s, c_s, *, seq_len):
    """Refs per grid step:
      x_ref      (T_blk*B_blk, D)    time-major input slab (matmul dtype)
      wx_ref     (D, 4*Lp)           input  -> gates weights
      wh_ref     (Lp, 4*Lp)          hidden -> gates weights
      b_ref      (1, 4*Lp)           fused gate bias (f32)
      h0_ref/c0_ref (B_blk, Lp)      initial state (f32)
      h_hist_ref (T_blk, B_blk, Lp)  hidden-state history output
      c_out_ref  (B_blk, Lp)         final cell state output
      gx_s       (T_blk*B_blk, 4*Lp) f32 scratch: input projection for the slab
      h_s, c_s   (B_blk, Lp)         f32 recurrent carries
    """
    t_blk = pl.program_id(1)
    n_tblk = pl.num_programs(1)
    B_blk, Lp = h_s.shape
    T_blk = h_hist_ref.shape[0]
    # The true last timestep always falls in the last time block (pad < T_blk).
    last_tt = (seq_len - 1) % T_blk

    # Initialize the recurrent state at the first time block of each batch block.
    @pl.when(t_blk == 0)
    def _():
        h_s[...] = h0_ref[...]
        c_s[...] = c0_ref[...]

    # Hoisted input projection for the whole (T_blk, B_blk) slab: one MXU call.
    # This stays off the sequential critical path and never touches HBM.
    gx_s[...] = (
        jnp.dot(x_ref[...], wx_ref[...], preferred_element_type=jnp.float32)
        + b_ref[...]
    )

    # Sequential recurrence over the time block (static unroll, T_blk <= 32).
    # Every slice below is static and aligned: rows on 8-sublane boundaries
    # (B_blk multiple of 8), gate columns on 128-lane boundaries (Lp mult. 128).
    for tt in range(T_blk):
        gx_t = gx_s[tt * B_blk:(tt + 1) * B_blk, :]            # (B_blk, 4*Lp)
        gates = gx_t + jnp.dot(h_s[...].astype(wh_ref.dtype), wh_ref[...],
                               preferred_element_type=jnp.float32)
        keep   = jax.nn.sigmoid(gates[:, 0 * Lp:1 * Lp])       # self.i
        forget = jax.nn.sigmoid(gates[:, 1 * Lp:2 * Lp])       # self.f
        out    = jax.nn.sigmoid(gates[:, 2 * Lp:3 * Lp])       # self.o
        g      = jnp.tanh(gates[:, 3 * Lp:4 * Lp])             # self.in_layer
        c_new = forget * c_s[...] + keep * g
        h_new = out * jnp.tanh(c_new)
        c_s[...] = c_new
        h_s[...] = h_new
        h_hist_ref[tt] = h_new.astype(h_hist_ref.dtype)        # lane-dense store
        if tt == last_tt:
            # Capture the final cell state at the true last timestep; padded
            # tail timesteps beyond it are computed but ignored.
            @pl.when(t_blk == n_tblk - 1)
            def _():
                c_out_ref[...] = c_new


def lstm_forward(x, wx, wh, b, h0=None, c0=None, *, matmul_dtype=jnp.bfloat16):
    """x: (batch, seq, dim).  Returns (h_hist (seq, batch, latent), C (batch, latent))."""
    B, S, D = x.shape
    L = wh.shape[0]
    assert wx.shape == (D, 4 * L) and wh.shape == (L, 4 * L) and b.shape == (4 * L,)

    if h0 is None:
        h0 = jnp.zeros((B, L), jnp.float32)
    if c0 is None:
        c0 = jnp.zeros((B, L), jnp.float32)

    Bp = _round_up(B, 8)            # sublane-aligned batch
    Lp = _round_up(L, 128)          # lane-aligned latent (per gate)
    Sp = _round_up(S, 8)            # padded sequence (tail ignored)
    B_blk = _pick_batch_block(Bp)
    T_blk = _pick_time_block(Sp)
    NB, NT = Bp // B_blk, Sp // T_blk

    # --- pad parameters gate-wise so each gate slice lands on a 128-lane boundary
    def pad_gate_cols(w):           # (R, 4L) -> (R, 4*Lp)
        r = w.shape[0]
        return jnp.pad(w.reshape(r, 4, L),
                       ((0, 0), (0, 0), (0, Lp - L))).reshape(r, 4 * Lp)

    wx_p = pad_gate_cols(wx.astype(jnp.float32)).astype(matmul_dtype)          # (D, 4Lp)
    wh_p = jnp.pad(pad_gate_cols(wh.astype(jnp.float32)),
                   ((0, Lp - L), (0, 0))).astype(matmul_dtype)                 # (Lp, 4Lp)
    b_p = jnp.pad(b.astype(jnp.float32).reshape(4, L),
                  ((0, 0), (0, Lp - L))).reshape(1, 4 * Lp)                    # (1, 4Lp)

    # --- time-major input, pre-arranged into per-(batch block, time block) slabs
    # so the kernel gets a contiguous (T_blk*B_blk, D) 2-D operand (one MXU call
    # per slab, no in-kernel reshape).  x is tiny (D-wide), so this wrapper
    # rearrange is negligible vs. the removed gates_x HBM round trip.
    x_tm = jnp.pad(jnp.transpose(x.astype(jnp.float32), (1, 0, 2)),
                   ((0, Sp - S), (0, Bp - B), (0, 0)))                         # (Sp, Bp, D)
    x_slab = (x_tm.reshape(NT, T_blk, NB, B_blk, D)
                  .transpose(2, 0, 1, 3, 4)
                  .reshape(NB, Sp * B_blk, D)
                  .astype(matmul_dtype))                                       # (NB, Sp*B_blk, D)

    h0_p = jnp.pad(h0.astype(jnp.float32), ((0, Bp - B), (0, Lp - L)))
    c0_p = jnp.pad(c0.astype(jnp.float32), ((0, Bp - B), (0, Lp - L)))

    kernel = functools.partial(_lstm_fused_kernel, seq_len=S)

    # TODO(synk): for very large latent on v7x (64 MiB VMEM), single-buffer Wh
    # (pipeline_mode=pl.Buffered(1)) and tile the 4*Lp gate dimension; when
    # NB == 1 on v7x, the gate columns could additionally be split across the
    # two TensorCores via pl.core_map. Unnecessary at these sizes.
    h_hist_p, c_p = pl.pallas_call(
        kernel,
        out_shape=(jax.ShapeDtypeStruct((Sp, Bp, Lp), jnp.float32),
                   jax.ShapeDtypeStruct((Bp, Lp), jnp.float32)),
        grid_spec=pltpu.PrefetchScalarGridSpec(
            num_scalar_prefetch=0,
            grid=(NB, NT),
            in_specs=[
                pl.BlockSpec((None, T_blk * B_blk, D), lambda bb, t: (bb, t, 0)),  # x slab
                pl.BlockSpec((D, 4 * Lp), lambda bb, t: (0, 0)),                   # Wx
                pl.BlockSpec((Lp, 4 * Lp), lambda bb, t: (0, 0)),                  # Wh
                pl.BlockSpec((1, 4 * Lp), lambda bb, t: (0, 0)),                   # bias
                pl.BlockSpec((B_blk, Lp), lambda bb, t: (bb, 0)),                  # h0
                pl.BlockSpec((B_blk, Lp), lambda bb, t: (bb, 0)),                  # c0
            ],
            out_specs=(
                pl.BlockSpec((T_blk, B_blk, Lp), lambda bb, t: (t, bb, 0)),        # h history
                pl.BlockSpec((B_blk, Lp), lambda bb, t: (bb, 0)),                  # final C
            ),
            scratch_shapes=[
                pltpu.VMEM((T_blk * B_blk, 4 * Lp), jnp.float32),   # gates_x slab
                pltpu.VMEM((B_blk, Lp), jnp.float32),               # h carry
                pltpu.VMEM((B_blk, Lp), jnp.float32),               # C carry
            ],
        ),
        compiler_params=pltpu.CompilerParams(
            dimension_semantics=("parallel", "arbitrary"),
            vmem_limit_bytes=48 * 1024 * 1024),
    )(x_slab, wx_p, wh_p, b_p, h0_p, c0_p)

    # TODO(synk): if downstream tolerates it, emit h_hist in bfloat16 to halve
    # the write-back stream (the f32 carry keeps the recurrence exact).
    return h_hist_p[:S, :B, :L], c_p[:B, :L]


def lstm_ref(x, wx, wh, b, h0, c0):
    """Pure-JAX reference mirroring the PyTorch forward exactly (f32)."""
    B, S, D = x.shape
    L = h0.shape[1]
    b2 = b.reshape(1, 4 * L)
    h, c = h0, c0
    hs = []
    for t in range(S):
        gates = x[:, t, :] @ wx + h @ wh + b2
        i_g = jax.nn.sigmoid(gates[:, 0 * L:1 * L])
        f_g = jax.nn.sigmoid(gates[:, 1 * L:2 * L])
        o_g = jax.nn.sigmoid(gates[:, 2 * L:3 * L])
        g_g = jnp.tanh(gates[:, 3 * L:4 * L])
        c = f_g * c + i_g * g_g
        h = o_g * jnp.tanh(c)
        hs.append(h)
    return jnp.stack(hs, axis=0), c


if __name__ == "__main__":
    # Small deterministic problem consistent with the module:
    # x: (batch=2, seq=8, dim=4), latent=32, output=10 (decode head unused by forward).
    batch, seq, dim, latent, output = 2, 8, 4, 32, 10

    key = jax.random.PRNGKey(0)
    kx, kw, kb, kx2 = jax.random.split(key, 4)

    x = jax.random.normal(kx, (batch, seq, dim), dtype=jnp.float32)

    # Deterministic param init (PyTorch Linear-style uniform bound).
    fan_in = dim + latent
    bound = 1.0 / (fan_in ** 0.5)
    # Fused weight for the four gate Linears [i, f, o, in_layer]: (dim+latent, 4*latent)
    W = jax.random.uniform(kw, (fan_in, 4 * latent), jnp.float32, -bound, bound)
    b = jax.random.uniform(kb, (4 * latent,), jnp.float32, -bound, bound)
    wx = W[:dim, :]        # (dim, 4*latent)
    wh = W[dim:, :]        # (latent, 4*latent)

    # TODO(synk): `decode` (out_layer: latent -> output) is a plain Linear not
    # used by forward(); omitted from the kernel.

    h_ref, c_ref = lstm_ref(x, wx, wh, b,
                            jnp.zeros((batch, latent), jnp.float32),
                            jnp.zeros((batch, latent), jnp.float32))

    # Exact-semantics check (f32 matmuls).
    h_f32, c_f32 = lstm_forward(x, wx, wh, b, matmul_dtype=jnp.float32)
    jax.block_until_ready((h_f32, c_f32))
    assert h_f32.shape == (seq, batch, latent)
    assert c_f32.shape == (batch, latent)
    assert jnp.allclose(h_f32, h_ref, atol=1e-5, rtol=1e-5)
    assert jnp.allclose(c_f32, c_ref, atol=1e-5, rtol=1e-5)

    # Performance config (bf16 matmuls, f32 accumulation / cell state).
    h_bf16, c_bf16 = lstm_forward(x, wx, wh, b)     # matmul_dtype=bfloat16 default
    jax.block_until_ready((h_bf16, c_bf16))
    assert jnp.allclose(h_bf16, h_ref, atol=5e-2, rtol=5e-2)
    assert jnp.allclose(c_bf16, c_ref, atol=5e-2, rtol=5e-2)

    # Robustness: batch/seq not multiples of the tiles (padded & masked tail),
    # exercising multiple batch blocks and the padded-sequence C capture.
    b2_, s2_ = 16, 10
    x2 = jax.random.normal(kx2, (b2_, s2_, dim), dtype=jnp.float32)
    h2_ref, c2_ref = lstm_ref(x2, wx, wh, b,
                              jnp.zeros((b2_, latent), jnp.float32),
                              jnp.zeros((b2_, latent), jnp.float32))
    h2, c2 = lstm_forward(x2, wx, wh, b, matmul_dtype=jnp.float32)
    jax.block_until_ready((h2, c2))
    assert h2.shape == (s2_, b2_, latent)
    assert jnp.allclose(h2, h2_ref, atol=1e-5, rtol=1e-5)
    assert jnp.allclose(c2, c2_ref, atol=1e-5, rtol=1e-5)

    print("KERNEL_OK")
</pallas_src>

<mosaic_0001>
module attributes {stable_mosaic.version = 11 : i64} {
  func.func @_lstm_fused_kernel(%arg0: i32, %arg1: i32, %arg2: memref<1x64x4xf32, #tpu.memory_space<vmem>>, %arg3: memref<4x512xf32, #tpu.memory_space<vmem>>, %arg4: memref<128x512xf32, #tpu.memory_space<vmem>>, %arg5: memref<1x512xf32, #tpu.memory_space<vmem>>, %arg6: memref<8x128xf32, #tpu.memory_space<vmem>>, %arg7: memref<8x128xf32, #tpu.memory_space<vmem>>, %arg8: memref<8x8x128xf32, #tpu.memory_space<vmem>>, %arg9: memref<8x128xf32, #tpu.memory_space<vmem>>, %arg10: memref<64x512xf32, #tpu.memory_space<vmem>>, %arg11: memref<8x128xf32, #tpu.memory_space<vmem>>, %arg12: memref<8x128xf32, #tpu.memory_space<vmem>>) attributes {dimension_semantics = [#tpu.dimension_semantics<parallel>, #tpu.dimension_semantics<arbitrary>], iteration_bounds = array<i64: 1, 1>, scalar_prefetch = 0 : i64, scratch_operands = 3 : i64, tpu.core_type = #tpu.core_type<tc>, window_params = [{transform_indices = @transform_0, window_bounds = array<i64: 1, 64, 4>}, {pipeline_mode = #tpu.pipeline_mode<synchronous>, transform_indices = @transform_1, window_bounds = array<i64: 4, 512>}, {pipeline_mode = #tpu.pipeline_mode<synchronous>, transform_indices = @transform_2, window_bounds = array<i64: 128, 512>}, {pipeline_mode = #tpu.pipeline_mode<synchronous>, transform_indices = @transform_3, window_bounds = array<i64: 1, 512>}, {transform_indices = @transform_4, window_bounds = array<i64: 8, 128>}, {transform_indices = @transform_5, window_bounds = array<i64: 8, 128>}, {transform_indices = @transform_6, window_bounds = array<i64: 8, 8, 128>}, {transform_indices = @transform_7, window_bounds = array<i64: 8, 128>}]} {
    %c0_i32 = arith.constant 0 : i32
    %0 = arith.cmpi eq, %arg1, %c0_i32 : i32
    %1 = arith.extui %0 : i1 to i32
    %c0_i32_0 = arith.constant 0 : i32
    %2 = arith.cmpi ne, %1, %c0_i32_0 : i32
    scf.if %2 {
      %c0_149 = arith.constant 0 : index
      %c0_150 = arith.constant 0 : index
      %302 = vector.load %arg6[%c0_149, %c0_150] : memref<8x128xf32, #tpu.memory_space<vmem>>, vector<8x128xf32>
      %c0_151 = arith.constant 0 : index
      %c0_152 = arith.constant 0 : index
      %303 = vector.load %arg11[%c0_151, %c0_152] : memref<8x128xf32, #tpu.memory_space<vmem>>, vector<8x128xf32>
      tpu.vector_store %arg11[%c0_151, %c0_152], %302 {strides = array<i32>} : memref<8x128xf32, #tpu.memory_space<vmem>>, vector<8x128xf32>,
      %c0_153 = arith.constant 0 : index
      %c0_154 = arith.constant 0 : index
      %304 = vector.load %arg7[%c0_153, %c0_154] : memref<8x128xf32, #tpu.memory_space<vmem>>, vector<8x128xf32>
      %c0_155 = arith.constant 0 : index
      %c0_156 = arith.constant 0 : index
      %305 = vector.load %arg12[%c0_155, %c0_156] : memref<8x128xf32, #tpu.memory_space<vmem>>, vector<8x128xf32>
      tpu.vector_store %arg12[%c0_155, %c0_156], %304 {strides = array<i32>} : memref<8x128xf32, #tpu.memory_space<vmem>>, vector<8x128xf32>,
    } else {
    }
    %c0 = arith.constant 0 : index
    %c0_1 = arith.constant 0 : index
    %c0_2 = arith.constant 0 : index
    %3 = vector.load %arg2[%c0, %c0_1, %c0_2] : memref<1x64x4xf32, #tpu.memory_space<vmem>>, vector<1x64x4xf32>
    %4 = vector.shape_cast %3 : vector<1x64x4xf32> to vector<64x4xf32>
    %c0_3 = arith.constant 0 : index
    %c0_4 = arith.constant 0 : index
    %5 = vector.load %arg3[%c0_3, %c0_4] : memref<4x512xf32, #tpu.memory_space<vmem>>, vector<4x512xf32>
    %cst = arith.constant dense<0.000000e+00> : vector<64x512xf32>
    %6 = tpu.matmul %4, %5, %cst {dimension_numbers = #tpu.dot_dimension_numbers<[1], [0], [0], [1], [0, 0, 1, 1], [], []>} : vector<64x4xf32>, vector<4x512xf32>, vector<64x512xf32> -> vector<64x512xf32>
    %c0_5 = arith.constant 0 : index
    %c0_6 = arith.constant 0 : index
    %7 = vector.load %arg5[%c0_5, %c0_6] : memref<1x512xf32, #tpu.memory_space<vmem>>, vector<1x512xf32>
    %8 = vector.broadcast %7 : vector<1x512xf32> to vector<64x512xf32>
    %9 = arith.addf %6, %8 : vector<64x512xf32>
    %c0_7 = arith.constant 0 : index
    %c0_8 = arith.constant 0 : index
    %10 = vector.load %arg10[%c0_7, %c0_8] : memref<64x512xf32, #tpu.memory_space<vmem>>, vector<64x512xf32>
    tpu.vector_store %arg10[%c0_7, %c0_8], %9 {strides = array<i32>} : memref<64x512xf32, #tpu.memory_space<vmem>>, vector<64x512xf32>,
    %c0_9 = arith.constant 0 : index
    %c0_10 = arith.constant 0 : index
    %11 = vector.load %arg10[%c0_9, %c0_10] : memref<64x512xf32, #tpu.memory_space<vmem>>, vector<8x512xf32>
    %c0_11 = arith.constant 0 : index
    %c0_12 = arith.constant 0 : index
    %12 = vector.load %arg11[%c0_11, %c0_12] : memref<8x128xf32, #tpu.memory_space<vmem>>, vector<8x128xf32>
    %c0_13 = arith.constant 0 : index
    %c0_14 = arith.constant 0 : index
    %13 = vector.load %arg4[%c0_13, %c0_14] : memref<128x512xf32, #tpu.memory_space<vmem>>, vector<128x512xf32>
    %cst_15 = arith.constant dense<0.000000e+00> : vector<8x512xf32>
    %14 = tpu.matmul %12, %13, %cst_15 {dimension_numbers = #tpu.dot_dimension_numbers<[1], [0], [0], [1], [0, 0, 1, 1], [], []>} : vector<8x128xf32>, vector<128x512xf32>, vector<8x512xf32> -> vector<8x512xf32>
    %15 = arith.addf %11, %14 : vector<8x512xf32>
    %16 = vector.extract_strided_slice %15 {offsets = [0, 0], sizes = [8, 128], strides = [1, 1]} : vector<8x512xf32> to vector<8x128xf32>
    %17 = arith.negf %16 : vector<8x128xf32>
    %18 = math.exp %17 : vector<8x128xf32>
    %cst_16 = arith.constant 1.000000e+00 : f32
    %19 = vector.broadcast %cst_16 : f32 to vector<8x128xf32>
    %20 = arith.addf %19, %18 : vector<8x128xf32>
    %21 = arith.divf %19, %20 : vector<8x128xf32>
    %22 = vector.extract_strided_slice %15 {offsets = [0, 128], sizes = [8, 128], strides = [1, 1]} : vector<8x512xf32> to vector<8x128xf32>
    %23 = arith.negf %22 : vector<8x128xf32>
    %24 = math.exp %23 : vector<8x128xf32>
    %cst_17 = arith.constant 1.000000e+00 : f32
    %25 = vector.broadcast %cst_17 : f32 to vector<8x128xf32>
    %26 = arith.addf %25, %24 : vector<8x128xf32>
    %27 = arith.divf %25, %26 : vector<8x128xf32>
    %28 = vector.extract_strided_slice %15 {offsets = [0, 256], sizes = [8, 128], strides = [1, 1]} : vector<8x512xf32> to vector<8x128xf32>
    %29 = arith.negf %28 : vector<8x128xf32>
    %30 = math.exp %29 : vector<8x128xf32>
    %cst_18 = arith.constant 1.000000e+00 : f32
    %31 = vector.broadcast %cst_18 : f32 to vector<8x128xf32>
    %32 = arith.addf %31, %30 : vector<8x128xf32>
    %33 = arith.divf %31, %32 : vector<8x128xf32>
    %34 = vector.extract_strided_slice %15 {offsets = [0, 384], sizes = [8, 128], strides = [1, 1]} : vector<8x512xf32> to vector<8x128xf32>
    %35 = math.tanh %34 : vector<8x128xf32>
    %c0_19 = arith.constant 0 : index
    %c0_20 = arith.constant 0 : index
    %36 = vector.load %arg12[%c0_19, %c0_20] : memref<8x128xf32, #tpu.memory_space<vmem>>, vector<8x128xf32>
    %37 = arith.mulf %27, %36 : vector<8x128xf32>
    %38 = arith.mulf %21, %35 : vector<8x128xf32>
    %39 = arith.addf %37, %38 : vector<8x128xf32>
    %40 = math.tanh %39 : vector<8x128xf32>
    %41 = arith.mulf %33, %40 : vector<8x128xf32>
    %c0_21 = arith.constant 0 : index
    %c0_22 = arith.constant 0 : index
    %42 = vector.load %arg12[%c0_21, %c0_22] : memref<8x128xf32, #tpu.memory_space<vmem>>, vector<8x128xf32>
    tpu.vector_store %arg12[%c0_21, %c0_22], %39 {strides = array<i32>} : memref<8x128xf32, #tpu.memory_space<vmem>>, vector<8x128xf32>,
    %c0_23 = arith.constant 0 : index
    %c0_24 = arith.constant 0 : index
    %43 = vector.load %arg11[%c0_23, %c0_24] : memref<8x128xf32, #tpu.memory_space<vmem>>, vector<8x128xf32>
    tpu.vector_store %arg11[%c0_23, %c0_24], %41 {strides = array<i32>} : memref<8x128xf32, #tpu.memory_space<vmem>>, vector<8x128xf32>,
    %c0_25 = arith.constant 0 : index
    %c0_26 = arith.constant 0 : index
    %c0_27 = arith.constant 0 : index
    %44 = vector.load %arg8[%c0_25, %c0_26, %c0_27] : memref<8x8x128xf32, #tpu.memory_space<vmem>>, vector<1x8x128xf32>
    %45 = vector.shape_cast %44 : vector<1x8x128xf32> to vector<8x128xf32>
    %46 = vector.shape_cast %41 : vector<8x128xf32> to vector<1x8x128xf32>
    tpu.vector_store %arg8[%c0_25, %c0_26, %c0_27], %46 {strides = array<i32>} : memref<8x8x128xf32, #tpu.memory_space<vmem>>, vector<1x8x128xf32>,
    %c8 = arith.constant 8 : index
    %c0_28 = arith.constant 0 : index
    %47 = vector.load %arg10[%c8, %c0_28] : memref<64x512xf32, #tpu.memory_space<vmem>>, vector<8x512xf32>
    %c0_29 = arith.constant 0 : index
    %c0_30 = arith.constant 0 : index
    %48 = vector.load %arg11[%c0_29, %c0_30] : memref<8x128xf32, #tpu.memory_space<vmem>>, vector<8x128xf32>
    %c0_31 = arith.constant 0 : index
    %c0_32 = arith.constant 0 : index
    %49 = vector.load %arg4[%c0_31, %c0_32] : memref<128x512xf32, #tpu.memory_space<vmem>>, vector<128x512xf32>
    %cst_33 = arith.constant dense<0.000000e+00> : vector<8x512xf32>
    %50 = tpu.matmul %48, %49, %cst_33 {dimension_numbers = #tpu.dot_dimension_numbers<[1], [0], [0], [1], [0, 0, 1, 1], [], []>} : vector<8x128xf32>, vector<128x512xf32>, vector<8x512xf32> -> vector<8x512xf32>
    %51 = arith.addf %47, %50 : vector<8x512xf32>
    %52 = vector.extract_strided_slice %51 {offsets = [0, 0], sizes = [8, 128], strides = [1, 1]} : vector<8x512xf32> to vector<8x128xf32>
    %53 = arith.negf %52 : vector<8x128xf32>
    %54 = math.exp %53 : vector<8x128xf32>
    %cst_34 = arith.constant 1.000000e+00 : f32
    %55 = vector.broadcast %cst_34 : f32 to vector<8x128xf32>
    %56 = arith.addf %55, %54 : vector<8x128xf32>
    %57 = arith.divf %55, %56 : vector<8x128xf32>
    %58 = vector.extract_strided_slice %51 {offsets = [0, 128], sizes = [8, 128], strides = [1, 1]} : vector<8x512xf32> to vector<8x128xf32>
    %59 = arith.negf %58 : vector<8x128xf32>
    %60 = math.exp %59 : vector<8x128xf32>
    %cst_35 = arith.constant 1.000000e+00 : f32
    %61 = vector.broadcast %cst_35 : f32 to vector<8x128xf32>
    %62 = arith.addf %61, %60 : vector<8x128xf32>
    %63 = arith.divf %61, %62 : vector<8x128xf32>
    %64 = vector.extract_strided_slice %51 {offsets = [0, 256], sizes = [8, 128], strides = [1, 1]} : vector<8x512xf32> to vector<8x128xf32>
    %65 = arith.negf %64 : vector<8x128xf32>
    %66 = math.exp %65 : vector<8x128xf32>
    %cst_36 = arith.constant 1.000000e+00 : f32
    %67 = vector.broadcast %cst_36 : f32 to vector<8x128xf32>
    %68 = arith.addf %67, %66 : vector<8x128xf32>
    %69 = arith.divf %67, %68 : vector<8x128xf32>
    %70 = vector.extract_strided_slice %51 {offsets = [0, 384], sizes = [8, 128], strides = [1, 1]} : vector<8x512xf32> to vector<8x128xf32>
    %71 = math.tanh %70 : vector<8x128xf32>
    %c0_37 = arith.constant 0 : index
    %c0_38 = arith.constant 0 : index
    %72 = vector.load %arg12[%c0_37, %c0_38] : memref<8x128xf32, #tpu.memory_space<vmem>>, vector<8x128xf32>
    %73 = arith.mulf %63, %72 : vector<8x128xf32>
    %74 = arith.mulf %57, %71 : vector<8x128xf32>
    %75 = arith.addf %73, %74 : vector<8x128xf32>
    %76 = math.tanh %75 : vector<8x128xf32>
    %77 = arith.mulf %69, %76 : vector<8x128xf32>
    %c0_39 = arith.constant 0 : index
    %c0_40 = arith.constant 0 : index
    %78 = vector.load %arg12[%c0_39, %c0_40] : memref<8x128xf32, #tpu.memory_space<vmem>>, vector<8x128xf32>
    tpu.vector_store %arg12[%c0_39, %c0_40], %75 {strides = array<i32>} : memref<8x128xf32, #tpu.memory_space<vmem>>, vector<8x128xf32>,
    %c0_41 = arith.constant 0 : index
    %c0_42 = arith.constant 0 : index
    %79 = vector.load %arg11[%c0_41, %c0_42] : memref<8x128xf32, #tpu.memory_space<vmem>>, vector<8x128xf32>
    tpu.vector_store %arg11[%c0_41, %c0_42], %77 {strides = array<i32>} : memref<8x128xf32, #tpu.memory_space<vmem>>, vector<8x128xf32>,
    %c1 = arith.constant 1 : index
    %c0_43 = arith.constant 0 : index
    %c0_44 = arith.constant 0 : index
    %80 = vector.load %arg8[%c1, %c0_43, %c0_44] : memref<8x8x128xf32, #tpu.memory_space<vmem>>, vector<1x8x128xf32>
    %81 = vector.shape_cast %80 : vector<1x8x128xf32> to vector<8x128xf32>
    %82 = vector.shape_cast %77 : vector<8x128xf32> to vector<1x8x128xf32>
    tpu.vector_store %arg8[%c1, %c0_43, %c0_44], %82 {strides = array<i32>} : memref<8x8x128xf32, #tpu.memory_space<vmem>>, vector<1x8x128xf32>,
    %c16 = arith.constant 16 : index
    %c0_45 = arith.constant 0 : index
    %83 = vector.load %arg10[%c16, %c0_45] : memref<64x512xf32, #tpu.memory_space<vmem>>, vector<8x512xf32>
    %c0_46 = arith.constant 0 : index
    %c0_47 = arith.constant 0 : index
    %84 = vector.load %arg11[%c0_46, %c0_47] : memref<8x128xf32, #tpu.memory_space<vmem>>, vector<8x128xf32>
    %c0_48 = arith.constant 0 : index
    %c0_49 = arith.constant 0 : index
    %85 = vector.load %arg4[%c0_48, %c0_49] : memref<128x512xf32, #tpu.memory_space<vmem>>, vector<128x512xf32>
    %cst_50 = arith.constant dense<0.000000e+00> : vector<8x512xf32>
    %86 = tpu.matmul %84, %85, %cst_50 {dimension_numbers = #tpu.dot_dimension_numbers<[1], [0], [0], [1], [0, 0, 1, 1], [], []>} : vector<8x128xf32>, vector<128x512xf32>, vector<8x512xf32> -> vector<8x512xf32>
    %87 = arith.addf %83, %86 : vector<8x512xf32>
    %88 = vector.extract_strided_slice %87 {offsets = [0, 0], sizes = [8, 128], strides = [1, 1]} : vector<8x512xf32> to vector<8x128xf32>
    %89 = arith.negf %88 : vector<8x128xf32>
    %90 = math.exp %89 : vector<8x128xf32>
    %cst_51 = arith.constant 1.000000e+00 : f32
    %91 = vector.broadcast %cst_51 : f32 to vector<8x128xf32>
    %92 = arith.addf %91, %90 : vector<8x128xf32>
    %93 = arith.divf %91, %92 : vector<8x128xf32>
    %94 = vector.extract_strided_slice %87 {offsets = [0, 128], sizes = [8, 128], strides = [1, 1]} : vector<8x512xf32> to vector<8x128xf32>
    %95 = arith.negf %94 : vector<8x128xf32>
    %96 = math.exp %95 : vector<8x128xf32>
    %cst_52 = arith.constant 1.000000e+00 : f32
    %97 = vector.broadcast %cst_52 : f32 to vector<8x128xf32>
    %98 = arith.addf %97, %96 : vector<8x128xf32>
    %99 = arith.divf %97, %98 : vector<8x128xf32>
    %100 = vector.extract_strided_slice %87 {offsets = [0, 256], sizes = [8, 128], strides = [1, 1]} : vector<8x512xf32> to vector<8x128xf32>
    %101 = arith.negf %100 : vector<8x128xf32>
    %102 = math.exp %101 : vector<8x128xf32>
    %cst_53 = arith.constant 1.000000e+00 : f32
    %103 = vector.broadcast %cst_53 : f32 to vector<8x128xf32>
    %104 = arith.addf %103, %102 : vector<8x128xf32>
    %105 = arith.divf %103, %104 : vector<8x128xf32>
    %106 = vector.extract_strided_slice %87 {offsets = [0, 384], sizes = [8, 128], strides = [1, 1]} : vector<8x512xf32> to vector<8x128xf32>
    %107 = math.tanh %106 : vector<8x128xf32>
    %c0_54 = arith.constant 0 : index
    %c0_55 = arith.constant 0 : index
    %108 = vector.load %arg12[%c0_54, %c0_55] : memref<8x128xf32, #tpu.memory_space<vmem>>, vector<8x128xf32>
    %109 = arith.mulf %99, %108 : vector<8x128xf32>
    %110 = arith.mulf %93, %107 : vector<8x128xf32>
    %111 = arith.addf %109, %110 : vector<8x128xf32>
    %112 = math.tanh %111 : vector<8x128xf32>
    %113 = arith.mulf %105, %112 : vector<8x128xf32>
    %c0_56 = arith.constant 0 : index
    %c0_57 = arith.constant 0 : index
    %114 = vector.load %arg12[%c0_56, %c0_57] : memref<8x128xf32, #tpu.memory_space<vmem>>, vector<8x128xf32>
    tpu.vector_store %arg12[%c0_56, %c0_57], %111 {strides = array<i32>} : memref<8x128xf32, #tpu.memory_space<vmem>>, vector<8x128xf32>,
    %c0_58 = arith.constant 0 : index
    %c0_59 = arith.constant 0 : index
    %115 = vector.load %arg11[%c0_58, %c0_59] : memref<8x128xf32, #tpu.memory_space<vmem>>, vector<8x128xf32>
    tpu.vector_store %arg11[%c0_58, %c0_59], %113 {strides = array<i32>} : memref<8x128xf32, #tpu.memory_space<vmem>>, vector<8x128xf32>,
    %c2 = arith.constant 2 : index
    %c0_60 = arith.constant 0 : index
    %c0_61 = arith.constant 0 : index
    %116 = vector.load %arg8[%c2, %c0_60, %c0_61] : memref<8x8x128xf32, #tpu.memory_space<vmem>>, vector<1x8x128xf32>
    %117 = vector.shape_cast %116 : vector<1x8x128xf32> to vector<8x128xf32>
    %118 = vector.shape_cast %113 : vector<8x128xf32> to vector<1x8x128xf32>
    tpu.vector_store %arg8[%c2, %c0_60, %c0_61], %118 {strides = array<i32>} : memref<8x8x128xf32, #tpu.memory_space<vmem>>, vector<1x8x128xf32>,
    %c24 = arith.constant 24 : index
    %c0_62 = arith.constant 0 : index
    %119 = vector.load %arg10[%c24, %c0_62] : memref<64x512xf32, #tpu.memory_space<vmem>>, vector<8x512xf32>
    %c0_63 = arith.constant 0 : index
    %c0_64 = arith.constant 0 : index
    %120 = vector.load %arg11[%c0_63, %c0_64] : memref<8x128xf32, #tpu.memory_space<vmem>>, vector<8x128xf32>
    %c0_65 = arith.constant 0 : index
    %c0_66 = arith.constant 0 : index
    %121 = vector.load %arg4[%c0_65, %c0_66] : memref<128x512xf32, #tpu.memory_space<vmem>>, vector<128x512xf32>
    %cst_67 = arith.constant dense<0.000000e+00> : vector<8x512xf32>
    %122 = tpu.matmul %120, %121, %cst_67 {dimension_numbers = #tpu.dot_dimension_numbers<[1], [0], [0], [1], [0, 0, 1, 1], [], []>} : vector<8x128xf32>, vector<128x512xf32>, vector<8x512xf32> -> vector<8x512xf32>
    %123 = arith.addf %119, %122 : vector<8x512xf32>
    %124 = vector.extract_strided_slice %123 {offsets = [0, 0], sizes = [8, 128], strides = [1, 1]} : vector<8x512xf32> to vector<8x128xf32>
    %125 = arith.negf %124 : vector<8x128xf32>
    %126 = math.exp %125 : vector<8x128xf32>
    %cst_68 = arith.constant 1.000000e+00 : f32
    %127 = vector.broadcast %cst_68 : f32 to vector<8x128xf32>
    %128 = arith.addf %127, %126 : vector<8x128xf32>
    %129 = arith.divf %127, %128 : vector<8x128xf32>
    %130 = vector.extract_strided_slice %123 {offsets = [0, 128], sizes = [8, 128], strides = [1, 1]} : vector<8x512xf32> to vector<8x128xf32>
    %131 = arith.negf %130 : vector<8x128xf32>
    %132 = math.exp %131 : vector<8x128xf32>
    %cst_69 = arith.constant 1.000000e+00 : f32
    %133 = vector.broadcast %cst_69 : f32 to vector<8x128xf32>
    %134 = arith.addf %133, %132 : vector<8x128xf32>
    %135 = arith.divf %133, %134 : vector<8x128xf32>
    %136 = vector.extract_strided_slice %123 {offsets = [0, 256], sizes = [8, 128], strides = [1, 1]} : vector<8x512xf32> to vector<8x128xf32>
    %137 = arith.negf %136 : vector<8x128xf32>
    %138 = math.exp %137 : vector<8x128xf32>
    %cst_70 = arith.constant 1.000000e+00 : f32
    %139 = vector.broadcast %cst_70 : f32 to vector<8x128xf32>
    %140 = arith.addf %139, %138 : vector<8x128xf32>
    %141 = arith.divf %139, %140 : vector<8x128xf32>
    %142 = vector.extract_strided_slice %123 {offsets = [0, 384], sizes = [8, 128], strides = [1, 1]} : vector<8x512xf32> to vector<8x128xf32>
    %143 = math.tanh %142 : vector<8x128xf32>
    %c0_71 = arith.constant 0 : index
    %c0_72 = arith.constant 0 : index
    %144 = vector.load %arg12[%c0_71, %c0_72] : memref<8x128xf32, #tpu.memory_space<vmem>>, vector<8x128xf32>
    %145 = arith.mulf %135, %144 : vector<8x128xf32>
    %146 = arith.mulf %129, %143 : vector<8x128xf32>
    %147 = arith.addf %145, %146 : vector<8x128xf32>
    %148 = math.tanh %147 : vector<8x128xf32>
    %149 = arith.mulf %141, %148 : vector<8x128xf32>
    %c0_73 = arith.constant 0 : index
    %c0_74 = arith.constant 0 : index
    %150 = vector.load %arg12[%c0_73, %c0_74] : memref<8x128xf32, #tpu.memory_space<vmem>>, vector<8x128xf32>
    tpu.vector_store %arg12[%c0_73, %c0_74], %147 {strides = array<i32>} : memref<8x128xf32, #tpu.memory_space<vmem>>, vector<8x128xf32>,
    %c0_75 = arith.constant 0 : index
    %c0_76 = arith.constant 0 : index
    %151 = vector.load %arg11[%c0_75, %c0_76] : memref<8x128xf32, #tpu.memory_space<vmem>>, vector<8x128xf32>
    tpu.vector_store %arg11[%c0_75, %c0_76], %149 {strides = array<i32>} : memref<8x128xf32, #tpu.memory_space<vmem>>, vector<8x128xf32>,
    %c3 = arith.constant 3 : index
    %c0_77 = arith.constant 0 : index
    %c0_78 = arith.constant 0 : index
    %152 = vector.load %arg8[%c3, %c0_77, %c0_78] : memref<8x8x128xf32, #tpu.memory_space<vmem>>, vector<1x8x128xf32>
    %153 = vector.shape_cast %152 : vector<1x8x128xf32> to vector<8x128xf32>
    %154 = vector.shape_cast %149 : vector<8x128xf32> to vector<1x8x128xf32>
    tpu.vector_store %arg8[%c3, %c0_77, %c0_78], %154 {strides = array<i32>} : memref<8x8x128xf32, #tpu.memory_space<vmem>>, vector<1x8x128xf32>,
    %c32 = arith.constant 32 : index
    %c0_79 = arith.constant 0 : index
    %155 = vector.load %arg10[%c32, %c0_79] : memref<64x512xf32, #tpu.memory_space<vmem>>, vector<8x512xf32>
    %c0_80 = arith.constant 0 : index
    %c0_81 = arith.constant 0 : index
    %156 = vector.load %arg11[%c0_80, %c0_81] : memref<8x128xf32, #tpu.memory_space<vmem>>, vector<8x128xf32>
    %c0_82 = arith.constant 0 : index
    %c0_83 = arith.constant 0 : index
    %157 = vector.load %arg4[%c0_82, %c0_83] : memref<128x512xf32, #tpu.memory_space<vmem>>, vector<128x512xf32>
    %cst_84 = arith.constant dense<0.000000e+00> : vector<8x512xf32>
    %158 = tpu.matmul %156, %157, %cst_84 {dimension_numbers = #tpu.dot_dimension_numbers<[1], [0], [0], [1], [0, 0, 1, 1], [], []>} : vector<8x128xf32>, vector<128x512xf32>, vector<8x512xf32> -> vector<8x512xf32>
    %159 = arith.addf %155, %158 : vector<8x512xf32>
    %160 = vector.extract_strided_slice %159 {offsets = [0, 0], sizes = [8, 128], strides = [1, 1]} : vector<8x512xf32> to vector<8x128xf32>
    %161 = arith.negf %160 : vector<8x128xf32>
    %162 = math.exp %161 : vector<8x128xf32>
    %cst_85 = arith.constant 1.000000e+00 : f32
    %163 = vector.broadcast %cst_85 : f32 to vector<8x128xf32>
    %164 = arith.addf %163, %162 : vector<8x128xf32>
    %165 = arith.divf %163, %164 : vector<8x128xf32>
    %166 = vector.extract_strided_slice %159 {offsets = [0, 128], sizes = [8, 128], strides = [1, 1]} : vector<8x512xf32> to vector<8x128xf32>
    %167 = arith.negf %166 : vector<8x128xf32>
    %168 = math.exp %167 : vector<8x128xf32>
    %cst_86 = arith.constant 1.000000e+00 : f32
    %169 = vector.broadcast %cst_86 : f32 to vector<8x128xf32>
    %170 = arith.addf %169, %168 : vector<8x128xf32>
    %171 = arith.divf %169, %170 : vector<8x128xf32>
    %172 = vector.extract_strided_slice %159 {offsets = [0, 256], sizes = [8, 128], strides = [1, 1]} : vector<8x512xf32> to vector<8x128xf32>
    %173 = arith.negf %172 : vector<8x128xf32>
    %174 = math.exp %173 : vector<8x128xf32>
    %cst_87 = arith.constant 1.000000e+00 : f32
    %175 = vector.broadcast %cst_87 : f32 to vector<8x128xf32>
    %176 = arith.addf %175, %174 : vector<8x128xf32>
    %177 = arith.divf %175, %176 : vector<8x128xf32>
    %178 = vector.extract_strided_slice %159 {offsets = [0, 384], sizes = [8, 128], strides = [1, 1]} : vector<8x512xf32> to vector<8x128xf32>
    %179 = math.tanh %178 : vector<8x128xf32>
    %c0_88 = arith.constant 0 : index
    %c0_89 = arith.constant 0 : index
    %180 = vector.load %arg12[%c0_88, %c0_89] : memref<8x128xf32, #tpu.memory_space<vmem>>, vector<8x128xf32>
    %181 = arith.mulf %171, %180 : vector<8x128xf32>
    %182 = arith.mulf %165, %179 : vector<8x128xf32>
    %183 = arith.addf %181, %182 : vector<8x128xf32>
    %184 = math.tanh %183 : vector<8x128xf32>
    %185 = arith.mulf %177, %184 : vector<8x128xf32>
    %c0_90 = arith.constant 0 : index
    %c0_91 = arith.constant 0 : index
    %186 = vector.load %arg12[%c0_90, %c0_91] : memref<8x128xf32, #tpu.memory_space<vmem>>, vector<8x128xf32>
    tpu.vector_store %arg12[%c0_90, %c0_91], %183 {strides = array<i32>} : memref<8x128xf32, #tpu.memory_space<vmem>>, vector<8x128xf32>,
    %c0_92 = arith.constant 0 : index
    %c0_93 = arith.constant 0 : index
    %187 = vector.load %arg11[%c0_92, %c0_93] : memref<8x128xf32, #tpu.memory_space<vmem>>, vector<8x128xf32>
    tpu.vector_store %arg11[%c0_92, %c0_93], %185 {strides = array<i32>} : memref<8x128xf32, #tpu.memory_space<vmem>>, vector<8x128xf32>,
    %c4 = arith.constant 4 : index
    %c0_94 = arith.constant 0 : index
    %c0_95 = arith.constant 0 : index
    %188 = vector.load %arg8[%c4, %c0_94, %c0_95] : memref<8x8x128xf32, #tpu.memory_space<vmem>>, vector<1x8x128xf32>
    %189 = vector.shape_cast %188 : vector<1x8x128xf32> to vector<8x128xf32>
    %190 = vector.shape_cast %185 : vector<8x128xf32> to vector<1x8x128xf32>
    tpu.vector_store %arg8[%c4, %c0_94, %c0_95], %190 {strides = array<i32>} : memref<8x8x128xf32, #tpu.memory_space<vmem>>, vector<1x8x128xf32>,
    %c40 = arith.constant 40 : index
    %c0_96 = arith.constant 0 : index
    %191 = vector.load %arg10[%c40, %c0_96] : memref<64x512xf32, #tpu.memory_space<vmem>>, vector<8x512xf32>
    %c0_97 = arith.constant 0 : index
    %c0_98 = arith.constant 0 : index
    %192 = vector.load %arg11[%c0_97, %c0_98] : memref<8x128xf32, #tpu.memory_space<vmem>>, vector<8x128xf32>
    %c0_99 = arith.constant 0 : index
    %c0_100 = arith.constant 0 : index
    %193 = vector.load %arg4[%c0_99, %c0_100] : memref<128x512xf32, #tpu.memory_space<vmem>>, vector<128x512xf32>
    %cst_101 = arith.constant dense<0.000000e+00> : vector<8x512xf32>
    %194 = tpu.matmul %192, %193, %cst_101 {dimension_numbers = #tpu.dot_dimension_numbers<[1], [0], [0], [1], [0, 0, 1, 1], [], []>} : vector<8x128xf32>, vector<128x512xf32>, vector<8x512xf32> -> vector<8x512xf32>
    %195 = arith.addf %191, %194 : vector<8x512xf32>
    %196 = vector.extract_strided_slice %195 {offsets = [0, 0], sizes = [8, 128], strides = [1, 1]} : vector<8x512xf32> to vector<8x128xf32>
    %197 = arith.negf %196 : vector<8x128xf32>
    %198 = math.exp %197 : vector<8x128xf32>
    %cst_102 = arith.constant 1.000000e+00 : f32
    %199 = vector.broadcast %cst_102 : f32 to vector<8x128xf32>
    %200 = arith.addf %199, %198 : vector<8x128xf32>
    %201 = arith.divf %199, %200 : vector<8x128xf32>
    %202 = vector.extract_strided_slice %195 {offsets = [0, 128], sizes = [8, 128], strides = [1, 1]} : vector<8x512xf32> to vector<8x128xf32>
    %203 = arith.negf %202 : vector<8x128xf32>
    %204 = math.exp %203 : vector<8x128xf32>
    %cst_103 = arith.constant 1.000000e+00 : f32
    %205 = vector.broadcast %cst_103 : f32 to vector<8x128xf32>
    %206 = arith.addf %205, %204 : vector<8x128xf32>
    %207 = arith.divf %205, %206 : vector<8x128xf32>
    %208 = vector.extract_strided_slice %195 {offsets = [0, 256], sizes = [8, 128], strides = [1, 1]} : vector<8x512xf32> to vector<8x128xf32>
    %209 = arith.negf %208 : vector<8x128xf32>
    %210 = math.exp %209 : vector<8x128xf32>
    %cst_104 = arith.constant 1.000000e+00 : f32
    %211 = vector.broadcast %cst_104 : f32 to vector<8x128xf32>
    %212 = arith.addf %211, %210 : vector<8x128xf32>
    %213 = arith.divf %211, %212 : vector<8x128xf32>
    %214 = vector.extract_strided_slice %195 {offsets = [0, 384], sizes = [8, 128], strides = [1, 1]} : vector<8x512xf32> to vector<8x128xf32>
    %215 = math.tanh %214 : vector<8x128xf32>
    %c0_105 = arith.constant 0 : index
    %c0_106 = arith.constant 0 : index
    %216 = vector.load %arg12[%c0_105, %c0_106] : memref<8x128xf32, #tpu.memory_space<vmem>>, vector<8x128xf32>
    %217 = arith.mulf %207, %216 : vector<8x128xf32>
    %218 = arith.mulf %201, %215 : vector<8x128xf32>
    %219 = arith.addf %217, %218 : vector<8x128xf32>
    %220 = math.tanh %219 : vector<8x128xf32>
    %221 = arith.mulf %213, %220 : vector<8x128xf32>
    %c0_107 = arith.constant 0 : index
    %c0_108 = arith.constant 0 : index
    %222 = vector.load %arg12[%c0_107, %c0_108] : memref<8x128xf32, #tpu.memory_space<vmem>>, vector<8x128xf32>
    tpu.vector_store %arg12[%c0_107, %c0_108], %219 {strides = array<i32>} : memref<8x128xf32, #tpu.memory_space<vmem>>, vector<8x128xf32>,
    %c0_109 = arith.constant 0 : index
    %c0_110 = arith.constant 0 : index
    %223 = vector.load %arg11[%c0_109, %c0_110] : memref<8x128xf32, #tpu.memory_space<vmem>>, vector<8x128xf32>
    tpu.vector_store %arg11[%c0_109, %c0_110], %221 {strides = array<i32>} : memref<8x128xf32, #tpu.memory_space<vmem>>, vector<8x128xf32>,
    %c5 = arith.constant 5 : index
    %c0_111 = arith.constant 0 : index
    %c0_112 = arith.constant 0 : index
    %224 = vector.load %arg8[%c5, %c0_111, %c0_112] : memref<8x8x128xf32, #tpu.memory_space<vmem>>, vector<1x8x128xf32>
    %225 = vector.shape_cast %224 : vector<1x8x128xf32> to vector<8x128xf32>
    %226 = vector.shape_cast %221 : vector<8x128xf32> to vector<1x8x128xf32>
    tpu.vector_store %arg8[%c5, %c0_111, %c0_112], %226 {strides = array<i32>} : memref<8x8x128xf32, #tpu.memory_space<vmem>>, vector<1x8x128xf32>,
    %c48 = arith.constant 48 : index
    %c0_113 = arith.constant 0 : index
    %227 = vector.load %arg10[%c48, %c0_113] : memref<64x512xf32, #tpu.memory_space<vmem>>, vector<8x512xf32>
    %c0_114 = arith.constant 0 : index
    %c0_115 = arith.constant 0 : index
    %228 = vector.load %arg11[%c0_114, %c0_115] : memref<8x128xf32, #tpu.memory_space<vmem>>, vector<8x128xf32>
    %c0_116 = arith.constant 0 : index
    %c0_117 = arith.constant 0 : index
    %229 = vector.load %arg4[%c0_116, %c0_117] : memref<128x512xf32, #tpu.memory_space<vmem>>, vector<128x512xf32>
    %cst_118 = arith.constant dense<0.000000e+00> : vector<8x512xf32>
    %230 = tpu.matmul %228, %229, %cst_118 {dimension_numbers = #tpu.dot_dimension_numbers<[1], [0], [0], [1], [0, 0, 1, 1], [], []>} : vector<8x128xf32>, vector<128x512xf32>, vector<8x512xf32> -> vector<8x512xf32>
    %231 = arith.addf %227, %230 : vector<8x512xf32>
    %232 = vector.extract_strided_slice %231 {offsets = [0, 0], sizes = [8, 128], strides = [1, 1]} : vector<8x512xf32> to vector<8x128xf32>
    %233 = arith.negf %232 : vector<8x128xf32>
    %234 = math.exp %233 : vector<8x128xf32>
    %cst_119 = arith.constant 1.000000e+00 : f32
    %235 = vector.broadcast %cst_119 : f32 to vector<8x128xf32>
    %236 = arith.addf %235, %234 : vector<8x128xf32>
    %237 = arith.divf %235, %236 : vector<8x128xf32>
    %238 = vector.extract_strided_slice %231 {offsets = [0, 128], sizes = [8, 128], strides = [1, 1]} : vector<8x512xf32> to vector<8x128xf32>
    %239 = arith.negf %238 : vector<8x128xf32>
    %240 = math.exp %239 : vector<8x128xf32>
    %cst_120 = arith.constant 1.000000e+00 : f32
    %241 = vector.broadcast %cst_120 : f32 to vector<8x128xf32>
    %242 = arith.addf %241, %240 : vector<8x128xf32>
    %243 = arith.divf %241, %242 : vector<8x128xf32>
    %244 = vector.extract_strided_slice %231 {offsets = [0, 256], sizes = [8, 128], strides = [1, 1]} : vector<8x512xf32> to vector<8x128xf32>
    %245 = arith.negf %244 : vector<8x128xf32>
    %246 = math.exp %245 : vector<8x128xf32>
    %cst_121 = arith.constant 1.000000e+00 : f32
    %247 = vector.broadcast %cst_121 : f32 to vector<8x128xf32>
    %248 = arith.addf %247, %246 : vector<8x128xf32>
    %249 = arith.divf %247, %248 : vector<8x128xf32>
    %250 = vector.extract_strided_slice %231 {offsets = [0, 384], sizes = [8, 128], strides = [1, 1]} : vector<8x512xf32> to vector<8x128xf32>
    %251 = math.tanh %250 : vector<8x128xf32>
    %c0_122 = arith.constant 0 : index
    %c0_123 = arith.constant 0 : index
    %252 = vector.load %arg12[%c0_122, %c0_123] : memref<8x128xf32, #tpu.memory_space<vmem>>, vector<8x128xf32>
    %253 = arith.mulf %243, %252 : vector<8x128xf32>
    %254 = arith.mulf %237, %251 : vector<8x128xf32>
    %255 = arith.addf %253, %254 : vector<8x128xf32>
    %256 = math.tanh %255 : vector<8x128xf32>
    %257 = arith.mulf %249, %256 : vector<8x128xf32>
    %c0_124 = arith.constant 0 : index
    %c0_125 = arith.constant 0 : index
    %258 = vector.load %arg12[%c0_124, %c0_125] : memref<8x128xf32, #tpu.memory_space<vmem>>, vector<8x128xf32>
    tpu.vector_store %arg12[%c0_124, %c0_125], %255 {strides = array<i32>} : memref<8x128xf32, #tpu.memory_space<vmem>>, vector<8x128xf32>,
    %c0_126 = arith.constant 0 : index
    %c0_127 = arith.constant 0 : index
    %259 = vector.load %arg11[%c0_126, %c0_127] : memref<8x128xf32, #tpu.memory_space<vmem>>, vector<8x128xf32>
    tpu.vector_store %arg11[%c0_126, %c0_127], %257 {strides = array<i32>} : memref<8x128xf32, #tpu.memory_space<vmem>>, vector<8x128xf32>,
    %c6 = arith.constant 6 : index
    %c0_128 = arith.constant 0 : index
    %c0_129 = arith.constant 0 : index
    %260 = vector.load %arg8[%c6, %c0_128, %c0_129] : memref<8x8x128xf32, #tpu.memory_space<vmem>>, vector<1x8x128xf32>
    %261 = vector.shape_cast %260 : vector<1x8x128xf32> to vector<8x128xf32>
    %262 = vector.shape_cast %257 : vector<8x128xf32> to vector<1x8x128xf32>
    tpu.vector_store %arg8[%c6, %c0_128, %c0_129], %262 {strides = array<i32>} : memref<8x8x128xf32, #tpu.memory_space<vmem>>, vector<1x8x128xf32>,
    %c56 = arith.constant 56 : index
    %c0_130 = arith.constant 0 : index
    %263 = vector.load %arg10[%c56, %c0_130] : memref<64x512xf32, #tpu.memory_space<vmem>>, vector<8x512xf32>
    %c0_131 = arith.constant 0 : index
    %c0_132 = arith.constant 0 : index
    %264 = vector.load %arg11[%c0_131, %c0_132] : memref<8x128xf32, #tpu.memory_space<vmem>>, vector<8x128xf32>
    %c0_133 = arith.constant 0 : index
    %c0_134 = arith.constant 0 : index
    %265 = vector.load %arg4[%c0_133, %c0_134] : memref<128x512xf32, #tpu.memory_space<vmem>>, vector<128x512xf32>
    %cst_135 = arith.constant dense<0.000000e+00> : vector<8x512xf32>
    %266 = tpu.matmul %264, %265, %cst_135 {dimension_numbers = #tpu.dot_dimension_numbers<[1], [0], [0], [1], [0, 0, 1, 1], [], []>} : vector<8x128xf32>, vector<128x512xf32>, vector<8x512xf32> -> vector<8x512xf32>
    %267 = arith.addf %263, %266 : vector<8x512xf32>
    %268 = vector.extract_strided_slice %267 {offsets = [0, 0], sizes = [8, 128], strides = [1, 1]} : vector<8x512xf32> to vector<8x128xf32>
    %269 = arith.negf %268 : vector<8x128xf32>
    %270 = math.exp %269 : vector<8x128xf32>
    %cst_136 = arith.constant 1.000000e+00 : f32
    %271 = vector.broadcast %cst_136 : f32 to vector<8x128xf32>
    %272 = arith.addf %271, %270 : vector<8x128xf32>
    %273 = arith.divf %271, %272 : vector<8x128xf32>
    %274 = vector.extract_strided_slice %267 {offsets = [0, 128], sizes = [8, 128], strides = [1, 1]} : vector<8x512xf32> to vector<8x128xf32>
    %275 = arith.negf %274 : vector<8x128xf32>
    %276 = math.exp %275 : vector<8x128xf32>
    %cst_137 = arith.constant 1.000000e+00 : f32
    %277 = vector.broadcast %cst_137 : f32 to vector<8x128xf32>
    %278 = arith.addf %277, %276 : vector<8x128xf32>
    %279 = arith.divf %277, %278 : vector<8x128xf32>
    %280 = vector.extract_strided_slice %267 {offsets = [0, 256], sizes = [8, 128], strides = [1, 1]} : vector<8x512xf32> to vector<8x128xf32>
    %281 = arith.negf %280 : vector<8x128xf32>
    %282 = math.exp %281 : vector<8x128xf32>
    %cst_138 = arith.constant 1.000000e+00 : f32
    %283 = vector.broadcast %cst_138 : f32 to vector<8x128xf32>
    %284 = arith.addf %283, %282 : vector<8x128xf32>
    %285 = arith.divf %283, %284 : vector<8x128xf32>
    %286 = vector.extract_strided_slice %267 {offsets = [0, 384], sizes = [8, 128], strides = [1, 1]} : vector<8x512xf32> to vector<8x128xf32>
    %287 = math.tanh %286 : vector<8x128xf32>
    %c0_139 = arith.constant 0 : index
    %c0_140 = arith.constant 0 : index
    %288 = vector.load %arg12[%c0_139, %c0_140] : memref<8x128xf32, #tpu.memory_space<vmem>>, vector<8x128xf32>
    %289 = arith.mulf %279, %288 : vector<8x128xf32>
    %290 = arith.mulf %273, %287 : vector<8x128xf32>
    %291 = arith.addf %289, %290 : vector<8x128xf32>
    %292 = math.tanh %291 : vector<8x128xf32>
    %293 = arith.mulf %285, %292 : vector<8x128xf32>
    %c0_141 = arith.constant 0 : index
    %c0_142 = arith.constant 0 : index
    %294 = vector.load %arg12[%c0_141, %c0_142] : memref<8x128xf32, #tpu.memory_space<vmem>>, vector<8x128xf32>
    tpu.vector_store %arg12[%c0_141, %c0_142], %291 {strides = array<i32>} : memref<8x128xf32, #tpu.memory_space<vmem>>, vector<8x128xf32>,
    %c0_143 = arith.constant 0 : index
    %c0_144 = arith.constant 0 : index
    %295 = vector.load %arg11[%c0_143, %c0_144] : memref<8x128xf32, #tpu.memory_space<vmem>>, vector<8x128xf32>
    tpu.vector_store %arg11[%c0_143, %c0_144], %293 {strides = array<i32>} : memref<8x128xf32, #tpu.memory_space<vmem>>, vector<8x128xf32>,
    %c7 = arith.constant 7 : index
    %c0_145 = arith.constant 0 : index
    %c0_146 = arith.constant 0 : index
    %296 = vector.load %arg8[%c7, %c0_145, %c0_146] : memref<8x8x128xf32, #tpu.memory_space<vmem>>, vector<1x8x128xf32>
    %297 = vector.shape_cast %296 : vector<1x8x128xf32> to vector<8x128xf32>
    %298 = vector.shape_cast %293 : vector<8x128xf32> to vector<1x8x128xf32>
    tpu.vector_store %arg8[%c7, %c0_145, %c0_146], %298 {strides = array<i32>} : memref<8x8x128xf32, #tpu.memory_space<vmem>>, vector<1x8x128xf32>,
    %c0_i32_147 = arith.constant 0 : i32
    %299 = arith.cmpi eq, %arg1, %c0_i32_147 : i32
    %300 = arith.extui %299 : i1 to i32
    %c0_i32_148 = arith.constant 0 : i32
    %301 = arith.cmpi ne, %300, %c0_i32_148 : i32
    scf.if %301 {
      %c0_149 = arith.constant 0 : index
      %c0_150 = arith.constant 0 : index
      %302 = vector.load %arg9[%c0_149, %c0_150] : memref<8x128xf32, #tpu.memory_space<vmem>>, vector<8x128xf32>
      tpu.vector_store %arg9[%c0_149, %c0_150], %291 {strides = array<i32>} : memref<8x128xf32, #tpu.memory_space<vmem>>, vector<8x128xf32>,
    } else {
    }
    return
  }
  func.func @transform_0(%arg0: i32, %arg1: i32) -> (i32, i32, i32) {
    %c0_i32 = arith.constant 0 : i32
    %c0_i32_0 = arith.constant 0 : i32
    return %arg0, %arg1, %c0_i32 : i32, i32, i32
  }
  func.func @transform_1(%arg0: i32, %arg1: i32) -> (i32, i32) {
    %c0_i32 = arith.constant 0 : i32
    %c0_i32_0 = arith.constant 0 : i32
    %c0_i32_1 = arith.constant 0 : i32
    return %c0_i32, %c0_i32_0 : i32, i32
  }
  func.func @transform_2(%arg0: i32, %arg1: i32) -> (i32, i32) {
    %c0_i32 = arith.constant 0 : i32
    %c0_i32_0 = arith.constant 0 : i32
    %c0_i32_1 = arith.constant 0 : i32
    return %c0_i32, %c0_i32_0 : i32, i32
  }
  func.func @transform_3(%arg0: i32, %arg1: i32) -> (i32, i32) {
    %c0_i32 = arith.constant 0 : i32
    %c0_i32_0 = arith.constant 0 : i32
    %c0_i32_1 = arith.constant 0 : i32
    return %c0_i32, %c0_i32_0 : i32, i32
  }
  func.func @transform_4(%arg0: i32, %arg1: i32) -> (i32, i32) {
    %c0_i32 = arith.constant 0 : i32
    %c0_i32_0 = arith.constant 0 : i32
    return %arg0, %c0_i32 : i32, i32
  }
  func.func @transform_5(%arg0: i32, %arg1: i32) -> (i32, i32) {
    %c0_i32 = arith.constant 0 : i32
    %c0_i32_0 = arith.constant 0 : i32
    return %arg0, %c0_i32 : i32, i32
  }
  func.func @transform_6(%arg0: i32, %arg1: i32) -> (i32, i32, i32) {
    %c0_i32 = arith.constant 0 : i32
    %c0_i32_0 = arith.constant 0 : i32
    return %arg1, %arg0, %c0_i32 : i32, i32, i32
  }
  func.func @transform_7(%arg0: i32, %arg1: i32) -> (i32, i32) {
    %c0_i32 = arith.constant 0 : i32
    %c0_i32_0 = arith.constant 0 : i32
    return %arg0, %c0_i32 : i32, i32
  }
}

</mosaic_0001>

<llo_original>
// kernel: tpu_custom_call.1
$region0: #{tpu_custom_call.1}
  #allocation0 [shape = 'u32[]', space=smem, size = 0x4, offset = 0x4, fixed_abs, tag = 'smem constant byte address 0x4 - core index']
  #allocation1 [shape = 'u32[144,128]{1,0:T(1,128)}', space=vmem, size = 0x12000, scoped, tag = 'internal scratch']
  #allocation2 [shape = 'f32[64,512]{1,0:T(8,128)}', space=vmem, size = 0x20000, scoped, tag = 'scratch operand']
  #allocation3 [shape = 'f32[8,128]{1,0:T(8,128)}', space=vmem, size = 0x1000, scoped, tag = 'scratch operand']
  #allocation4 [shape = 'f32[8,128]{1,0:T(8,128)}', space=vmem, size = 0x1000, scoped, tag = 'scratch operand']
  %s0 = inlined_call_operand.vmem [shape: f32[1,64,4], index: 0, kind: input, shape index: {}]
  %s1 = inlined_call_operand.vmem [shape: f32[4,512], index: 1, kind: input, shape index: {}]
  %s2 = inlined_call_operand.hbm [shape: f32[128,512], index: 2, kind: input, shape index: {}]
  %s3 = inlined_call_operand.vmem [shape: f32[1,512], index: 3, kind: input, shape index: {}]
  %s4 = inlined_call_operand.vmem [shape: f32[8,128], index: 4, kind: input, shape index: {}]
  %s5 = inlined_call_operand.vmem [shape: f32[8,128], index: 5, kind: input, shape index: {}]
  %s6 = inlined_call_operand.hbm [shape: f32[8,8,128], index: 6, kind: output, shape index: {0}]
  %s7 = inlined_call_operand.hbm [shape: f32[8,128], index: 7, kind: output, shape index: {1}]
  %8 = xla_tuple %s6, %s7
  %s9 = sld [smem:[#allocation0]]
  $region54: #{tpu_custom_call.1} parent=0
    _
  %s11 = ssub.s32 1, %s9
  %s12 = scalar_select 0, %s11, %s9
  $region1: #{tpu_custom_call.1} parent=0
    #allocation5 [shape = 'u8[262144]{0}', space=vmem, size = 0x40000, scoped, tag = 'input window, operand 2, single buffered']
    #allocation6 [shape = 's32[1]{0}', space=sflag, size = 0x4, scoped, tag = 'scoped memory for tpu_custom_call.1']
    #allocation7 [shape = 's32[1]{0}', space=sflag, size = 0x4, scoped, tag = 'scoped memory for tpu_custom_call.1']
    #allocation8 [shape = 'u8[32768]{0}', space=vmem, size = 0x8000, scoped, tag = 'output window, operand 0, single buffered']
    #allocation9 [shape = 'u8[4096]{0}', space=vmem, size = 0x1000, scoped, tag = 'output window, operand 1, single buffered']
    #allocation10 [shape = 's32[1]{0}', space=sflag, size = 0x4, scoped, tag = 'scoped memory for tpu_custom_call.1']
    %13 = vsyncpa [#allocation6], 0
    %14 = vsyncpa [#allocation7], 0
    %15 = vsyncpa [#allocation10], 0
    // Predicated region
    $region2: #{tpu_custom_call.1} parent=1 // pred_check
      _
    $region3: #{tpu_custom_call.1} parent=1 // pred_check_branch
      %17 = sbr.rel (0) target = $region5
    $region4: #{tpu_custom_call.1} parent=1 // pred_region
      _
    $region5: #{tpu_custom_call.1} parent=1 // pred_fallthru
      _
    // Predicated region
    $region6: #{tpu_custom_call.1} parent=1 // pred_check
      _
    $region7: #{tpu_custom_call.1} parent=1 // pred_check_branch
      %19 = sbr.rel (0) target = $region9
    $region8: #{tpu_custom_call.1} parent=1 // pred_region
      _
    $region9: #{tpu_custom_call.1} parent=1 // pred_fallthru
      _
    // Predicated region
    $region10: #{tpu_custom_call.1} parent=1 // pred_check
      _
    $region11: #{tpu_custom_call.1} parent=1 // pred_check_branch
      %21 = sbr.rel (0) target = $region13
    $region12: #{tpu_custom_call.1} parent=1 // pred_region
      %s23 = ssub.s32 8192, 8192
      %24 = vsyncadd [#allocation6], %s23
      %s25 = sshll.u32 [#allocation5], 4
      %s26 = int_to_ptr.vmem [resolvable:$true] %s25
      %31 = dma.hbm_to_vmem [thread:$0]  %s2, 8192, %s26, [#allocation6], 512, 512, 32
    $region13: #{tpu_custom_call.1} parent=1 // pred_fallthru
      _
    // Predicated region
    $region14: #{tpu_custom_call.1} parent=1 // pred_check
      _
    $region15: #{tpu_custom_call.1} parent=1 // pred_check_branch
      %33 = sbr.rel (0) target = $region17
    $region16: #{tpu_custom_call.1} parent=1 // pred_region
      _
    $region17: #{tpu_custom_call.1} parent=1 // pred_fallthru
      _
    // Predicated region
    $region18: #{tpu_custom_call.1} parent=1 // pred_check
      _
    $region19: #{tpu_custom_call.1} parent=1 // pred_check_branch
      %35 = sbr.rel (0) target = $region21
    $region20: #{tpu_custom_call.1} parent=1 // pred_region
      _
    $region21: #{tpu_custom_call.1} parent=1 // pred_fallthru
      _
    // Predicated region
    $region22: #{tpu_custom_call.1} parent=1 // pred_check
      _
    $region23: #{tpu_custom_call.1} parent=1 // pred_check_branch
      %37 = sbr.rel (0) target = $region25
    $region24: #{tpu_custom_call.1} parent=1 // pred_region
      _
    $region25: #{tpu_custom_call.1} parent=1 // pred_fallthru
      _
    // Predicated region
    $region26: #{tpu_custom_call.1} parent=1 // pred_check
      _
    $region27: #{tpu_custom_call.1} parent=1 // pred_check_branch
      %39 = sbr.rel (0) target = $region29
    $region28: #{tpu_custom_call.1} parent=1 // pred_region
      %40 = dma.done [#allocation6], 8192
    $region29: #{tpu_custom_call.1} parent=1 // pred_fallthru
      _
    %p41 = scmp.eq.s32.totalorder 0, 0
    // Predicated region
    $region30: #{tpu_custom_call.1} parent=1 // pred_check
      %p42 = pneg %p41
    $region31: #{tpu_custom_call.1} parent=1 // pred_check_branch
      %44 = sbr.rel (%p42) target = $region33
    $region32: #{tpu_custom_call.1} parent=1 // pred_region
      %v45 = vld [vmem:[%s4] sm:$0xff]
      %46 = vst [vmem:[#allocation3] sm:$0xff] %v45
      %v47 = vld [vmem:[%s5] sm:$0xff]
      %48 = vst [vmem:[#allocation4] sm:$0xff] %v47
    $region33: #{tpu_custom_call.1} parent=1 // pred_fallthru
      _
    %v49 = vld [vmem:[%s0] sm:$0xff]
    %v50 = vld [vmem:[%s0 + $0x8] sm:$0xff]
    %v51 = vld [vmem:[%s0 + $0x10] sm:$0xff]
    %v52 = vld [vmem:[%s0 + $0x18] sm:$0xff]
    %v53 = vld [vmem:[%s0 + $0x20] sm:$0xff]
    %v54 = vld [vmem:[%s0 + $0x28] sm:$0xff]
    %v55 = vld [vmem:[%s0 + $0x30] sm:$0xff]
    %v56 = vld [vmem:[%s0 + $0x38] sm:$0xff]
    %v57 = vld [vmem:[%s1] sm:$0xff]
    %v58 = vld [vmem:[%s1 + $0x8] sm:$0xff]
    %v59 = vld [vmem:[%s3] sm:$0xf]
    %v61 = vlaneseq
    %v62 = vshrl.u32 %v61, 7
    %v63 = vsub.s32 0, %v62
    %v64 = vrot.slane %v59, %v63
    %v65 = vlaneseq
    %v66 = vshrl.u32 %v65, 7
    %v67 = vsub.s32 1, %v66
    %v68 = vrot.slane %v59, %v67
    %v69 = vlaneseq
    %v70 = vshrl.u32 %v69, 7
    %v71 = vsub.s32 2, %v70
    %v72 = vrot.slane %v59, %v71
    %v73 = vlaneseq
    %v74 = vshrl.u32 %v73, 7
    %v75 = vsub.s32 3, %v74
    %v76 = vrot.slane %v59, %v75
    %v83 = vcombine.high %v57, %v57
    %v84 = vcombine.high %v58, %v58
    %vm85 = vcmask 31744
    %v87 = vsel %vm85, %v49, 0
    %v90 = vsel %vm85, %v50, 0
    %v93 = vsel %vm85, %v51, 0
    %v96 = vsel %vm85, %v52, 0
    %v99 = vsel %vm85, %v53, 0
    %v102 = vsel %vm85, %v54, 0
    %v105 = vsel %vm85, %v55, 0
    %v108 = vsel %vm85, %v56, 0
    %vm110 = vcmask 1043456
    %v111 = vsel %vm110, %v57, 0
    %v113 = vsel %vm110, %v83, 0
    %v115 = vsel %vm110, %v58, 0
    %v117 = vsel %vm110, %v84, 0
    %119 = vmatprep.subr.mxu0 %v113
    %120 = vmatpush1.msra.mxu0 %v111
    %121 = vmatprep.subr.mxu0 0.0
    %122 = vmatpush1.msra.mxu0 0.0
    %123 = vmatprep.subr.mxu0 0.0
    %124 = vmatpush1.msra.mxu0 0.0
    %125 = vmatprep.subr.mxu0 0.0
    %126 = vmatpush1.msra.mxu0 0.0
    %127 = vmatprep.subr.mxu0 0.0
    %128 = vmatpush1.msra.mxu0 0.0
    %129 = vmatprep.subr.mxu0 0.0
    %130 = vmatpush1.msra.mxu0 0.0
    %131 = vmatprep.subr.mxu0 0.0
    %132 = vmatpush1.msra.mxu0 0.0
    %133 = vmatprep.subr.mxu0 0.0
    %134 = vmatpush1.msra.mxu0 0.0
    %135 = vmatprep.subr.mxu0 0.0
    %136 = vmatpush1.msra.mxu0 0.0
    %137 = vmatprep.subr.mxu0 0.0
    %138 = vmatpush1.msra.mxu0 0.0
    %139 = vmatprep.subr.mxu0 0.0
    %140 = vmatpush1.msra.mxu0 0.0
    %141 = vmatprep.subr.mxu0 0.0
    %142 = vmatpush1.msra.mxu0 0.0
    %143 = vmatprep.subr.mxu0 0.0
    %144 = vmatpush1.msra.mxu0 0.0
    %145 = vmatprep.subr.mxu0 0.0
    %146 = vmatpush1.msra.mxu0 0.0
    %147 = vmatprep.subr.mxu0 0.0
    %148 = vmatpush1.msra.mxu0 0.0
    %149 = vmatprep.subr.mxu0 0.0
    %150 = vmatpush1.msra.mxu0 0.0
    %151 = vmatprep.subr.mxu0 0.0
    %152 = vmatpush1.msra.mxu0 0.0
    %153 = vmatprep.subr.mxu0 0.0
    %154 = vmatpush1.msra.mxu0 0.0
    %155 = vmatprep.subr.mxu0 0.0
    %156 = vmatpush1.msra.mxu0 0.0
    %157 = vmatprep.subr.mxu0 0.0
    %158 = vmatpush1.msra.mxu0 0.0
    %159 = vmatprep.subr.mxu0 0.0
    %160 = vmatpush1.msra.mxu0 0.0
    %161 = vmatprep.subr.mxu0 0.0
    %162 = vmatpush1.msra.mxu0 0.0
    %163 = vmatprep.subr.mxu0 0.0
    %164 = vmatpush1.msra.mxu0 0.0
    %165 = vmatprep.subr.mxu0 0.0
    %166 = vmatpush1.msra.mxu0 0.0
    %167 = vmatprep.subr.mxu0 0.0
    %168 = vmatpush1.msra.mxu0 0.0
    %169 = vmatprep.subr.mxu0 0.0
    %170 = vmatpush1.msra.mxu0 0.0
    %171 = vmatprep.subr.mxu0 0.0
    %172 = vmatpush1.msra.mxu0 0.0
    %173 = vmatprep.subr.mxu0 0.0
    %174 = vmatpush1.msra.mxu0 0.0
    %175 = vmatprep.subr.mxu0 0.0
    %176 = vmatpush1.msra.mxu0 0.0
    %177 = vmatprep.subr.mxu0 0.0
    %178 = vmatpush1.msra.mxu0 0.0
    %179 = vmatprep.subr.mxu0 0.0
    %180 = vmatpush1.msra.mxu0 0.0
    %181 = vmatprep.subr.mxu0 0.0
    %182 = vmatpush1.msra.mxu0 0.0
    %183 = vmatprep.mubr.f32.mxu0 0.0
    %184 = vmatmul.mubr.f32.gmra.mrb[0].mxu0 %v87
    %v185 = vpop.f32.mrb[0].mxu0
    %v186 = vadd.f32 %v64, %v185
    %v187 = vpop.f32.mrb[0].mxu0
    %v188 = vadd.f32 %v68, %v187
    %189 = vmatprep.mubr.f32.mxu0 0.0
    %190 = vmatmul.mubr.f32.gmra.mrb[0].mxu0 %v90
    %v191 = vpop.f32.mrb[0].mxu0
    %v192 = vadd.f32 %v64, %v191
    %v193 = vpop.f32.mrb[0].mxu0
    %v194 = vadd.f32 %v68, %v193
    %195 = vmatprep.mubr.f32.mxu0 0.0
    %196 = vmatmul.mubr.f32.gmra.mrb[0].mxu0 %v93
    %v197 = vpop.f32.mrb[0].mxu0
    %v198 = vadd.f32 %v64, %v197
    %v199 = vpop.f32.mrb[0].mxu0
    %v200 = vadd.f32 %v68, %v199
    %201 = vmatprep.mubr.f32.mxu0 0.0
    %202 = vmatmul.mubr.f32.gmra.mrb[0].mxu0 %v96
    %v203 = vpop.f32.mrb[0].mxu0
    %v204 = vadd.f32 %v64, %v203
    %v205 = vpop.f32.mrb[0].mxu0
    %v206 = vadd.f32 %v68, %v205
    %207 = vmatprep.mubr.f32.mxu0 0.0
    %208 = vmatmul.mubr.f32.gmra.mrb[0].mxu0 %v99
    %v209 = vpop.f32.mrb[0].mxu0
    %v210 = vadd.f32 %v64, %v209
    %v211 = vpop.f32.mrb[0].mxu0
    %v212 = vadd.f32 %v68, %v211
    %213 = vmatprep.mubr.f32.mxu0 0.0
    %214 = vmatmul.mubr.f32.gmra.mrb[0].mxu0 %v102
    %v215 = vpop.f32.mrb[0].mxu0
    %v216 = vadd.f32 %v64, %v215
    %v217 = vpop.f32.mrb[0].mxu0
    %v218 = vadd.f32 %v68, %v217
    %219 = vmatprep.mubr.f32.mxu0 0.0
    %220 = vmatmul.mubr.f32.gmra.mrb[0].mxu0 %v105
    %v221 = vpop.f32.mrb[0].mxu0
    %v222 = vadd.f32 %v64, %v221
    %v223 = vpop.f32.mrb[0].mxu0
    %v224 = vadd.f32 %v68, %v223
    %225 = vmatprep.mubr.f32.mxu0 0.0
    %226 = vmatmul.mubr.f32.gmra.mrb[0].mxu0 %v108
    %v227 = vpop.f32.mrb[0].mxu0
    %v228 = vadd.f32 %v64, %v227
    %v229 = vpop.f32.mrb[0].mxu0
    %v230 = vadd.f32 %v68, %v229
    %231 = vdwg.mxu0
    %232 = vmatprep.subr.mxu0 %v117
    %233 = vmatpush1.msra.mxu0 %v115
    %234 = vmatprep.subr.mxu0 0.0
    %235 = vmatpush1.msra.mxu0 0.0
    %236 = vmatprep.subr.mxu0 0.0
    %237 = vmatpush1.msra.mxu0 0.0
    %238 = vmatprep.subr.mxu0 0.0
    %239 = vmatpush1.msra.mxu0 0.0
    %240 = vmatprep.subr.mxu0 0.0
    %241 = vmatpush1.msra.mxu0 0.0
    %242 = vmatprep.subr.mxu0 0.0
    %243 = vmatpush1.msra.mxu0 0.0
    %244 = vmatprep.subr.mxu0 0.0
    %245 = vmatpush1.msra.mxu0 0.0
    %246 = vmatprep.subr.mxu0 0.0
    %247 = vmatpush1.msra.mxu0 0.0
    %248 = vmatprep.subr.mxu0 0.0
    %249 = vmatpush1.msra.mxu0 0.0
    %250 = vmatprep.subr.mxu0 0.0
    %251 = vmatpush1.msra.mxu0 0.0
    %252 = vmatprep.subr.mxu0 0.0
    %253 = vmatpush1.msra.mxu0 0.0
    %254 = vmatprep.subr.mxu0 0.0
    %255 = vmatpush1.msra.mxu0 0.0
    %256 = vmatprep.subr.mxu0 0.0
    %257 = vmatpush1.msra.mxu0 0.0
    %258 = vmatprep.subr.mxu0 0.0
    %259 = vmatpush1.msra.mxu0 0.0
    %260 = vmatprep.subr.mxu0 0.0
    %261 = vmatpush1.msra.mxu0 0.0
    %262 = vmatprep.subr.mxu0 0.0
    %263 = vmatpush1.msra.mxu0 0.0
    %264 = vmatprep.subr.mxu0 0.0
    %265 = vmatpush1.msra.mxu0 0.0
    %266 = vmatprep.subr.mxu0 0.0
    %267 = vmatpush1.msra.mxu0 0.0
    %268 = vmatprep.subr.mxu0 0.0
    %269 = vmatpush1.msra.mxu0 0.0
    %270 = vmatprep.subr.mxu0 0.0
    %271 = vmatpush1.msra.mxu0 0.0
    %272 = vmatprep.subr.mxu0 0.0
    %273 = vmatpush1.msra.mxu0 0.0
    %274 = vmatprep.subr.mxu0 0.0
    %275 = vmatpush1.msra.mxu0 0.0
    %276 = vmatprep.subr.mxu0 0.0
    %277 = vmatpush1.msra.mxu0 0.0
    %278 = vmatprep.subr.mxu0 0.0
    %279 = vmatpush1.msra.mxu0 0.0
    %280 = vmatprep.subr.mxu0 0.0
    %281 = vmatpush1.msra.mxu0 0.0
    %282 = vmatprep.subr.mxu0 0.0
    %283 = vmatpush1.msra.mxu0 0.0
    %284 = vmatprep.subr.mxu0 0.0
    %285 = vmatpush1.msra.mxu0 0.0
    %286 = vmatprep.subr.mxu0 0.0
    %287 = vmatpush1.msra.mxu0 0.0
    %288 = vmatprep.subr.mxu0 0.0
    %289 = vmatpush1.msra.mxu0 0.0
    %290 = vmatprep.subr.mxu0 0.0
    %291 = vmatpush1.msra.mxu0 0.0
    %292 = vmatprep.subr.mxu0 0.0
    %293 = vmatpush1.msra.mxu0 0.0
    %294 = vmatprep.subr.mxu0 0.0
    %295 = vmatpush1.msra.mxu0 0.0
    %296 = vmatprep.mubr.f32.mxu0 0.0
    %297 = vmatmul.mubr.f32.gmra.mrb[0].mxu0 %v87
    %v298 = vpop.f32.mrb[0].mxu0
    %v299 = vadd.f32 %v72, %v298
    %v300 = vpop.f32.mrb[0].mxu0
    %v301 = vadd.f32 %v76, %v300
    %302 = vmatprep.mubr.f32.mxu0 0.0
    %303 = vmatmul.mubr.f32.gmra.mrb[0].mxu0 %v90
    %v304 = vpop.f32.mrb[0].mxu0
    %v305 = vadd.f32 %v72, %v304
    %v306 = vpop.f32.mrb[0].mxu0
    %v307 = vadd.f32 %v76, %v306
    %308 = vmatprep.mubr.f32.mxu0 0.0
    %309 = vmatmul.mubr.f32.gmra.mrb[0].mxu0 %v93
    %v310 = vpop.f32.mrb[0].mxu0
    %v311 = vadd.f32 %v72, %v310
    %v312 = vpop.f32.mrb[0].mxu0
    %v313 = vadd.f32 %v76, %v312
    %314 = vmatprep.mubr.f32.mxu0 0.0
    %315 = vmatmul.mubr.f32.gmra.mrb[0].mxu0 %v96
    %v316 = vpop.f32.mrb[0].mxu0
    %v317 = vadd.f32 %v72, %v316
    %v318 = vpop.f32.mrb[0].mxu0
    %v319 = vadd.f32 %v76, %v318
    %320 = vmatprep.mubr.f32.mxu0 0.0
    %321 = vmatmul.mubr.f32.gmra.mrb[0].mxu0 %v99
    %v322 = vpop.f32.mrb[0].mxu0
    %v323 = vadd.f32 %v72, %v322
    %v324 = vpop.f32.mrb[0].mxu0
    %v325 = vadd.f32 %v76, %v324
    %326 = vmatprep.mubr.f32.mxu0 0.0
    %327 = vmatmul.mubr.f32.gmra.mrb[0].mxu0 %v102
    %v328 = vpop.f32.mrb[0].mxu0
    %v329 = vadd.f32 %v72, %v328
    %v330 = vpop.f32.mrb[0].mxu0
    %v331 = vadd.f32 %v76, %v330
    %332 = vmatprep.mubr.f32.mxu0 0.0
    %333 = vmatmul.mubr.f32.gmra.mrb[0].mxu0 %v105
    %v334 = vpop.f32.mrb[0].mxu0
    %v335 = vadd.f32 %v72, %v334
    %v336 = vpop.f32.mrb[0].mxu0
    %v337 = vadd.f32 %v76, %v336
    %338 = vmatprep.mubr.f32.mxu0 0.0
    %339 = vmatmul.mubr.f32.gmra.mrb[0].mxu0 %v108
    %v340 = vpop.f32.mrb[0].mxu0
    %v341 = vadd.f32 %v72, %v340
    %v342 = vpop.f32.mrb[0].mxu0
    %v343 = vadd.f32 %v76, %v342
    %344 = vdwg.mxu0
    %345 = vst [vmem:[#allocation2] sm:$0xff] %v186
    %346 = vst [vmem:[#allocation2 + $0x8] sm:$0xff] %v188
    %347 = vst [vmem:[#allocation2 + $0x10] sm:$0xff] %v299
    %348 = vst [vmem:[#allocation2 + $0x18] sm:$0xff] %v301
    %349 = vst [vmem:[#allocation2 + $0x20] sm:$0xff] %v192
    %350 = vst [vmem:[#allocation2 + $0x28] sm:$0xff] %v194
    %351 = vst [vmem:[#allocation2 + $0x30] sm:$0xff] %v305
    %352 = vst [vmem:[#allocation2 + $0x38] sm:$0xff] %v307
    %353 = vst [vmem:[#allocation2 + $0x40] sm:$0xff] %v198
    %354 = vst [vmem:[#allocation2 + $0x48] sm:$0xff] %v200
    %355 = vst [vmem:[#allocation2 + $0x50] sm:$0xff] %v311
    %356 = vst [vmem:[#allocation2 + $0x58] sm:$0xff] %v313
    %357 = vst [vmem:[#allocation2 + $0x60] sm:$0xff] %v204
    %358 = vst [vmem:[#allocation2 + $0x68] sm:$0xff] %v206
    %359 = vst [vmem:[#allocation2 + $0x70] sm:$0xff] %v317
    %360 = vst [vmem:[#allocation2 + $0x78] sm:$0xff] %v319
    %361 = vst [vmem:[#allocation2 + $0x80] sm:$0xff] %v210
    %362 = vst [vmem:[#allocation2 + $0x88] sm:$0xff] %v212
    %363 = vst [vmem:[#allocation2 + $0x90] sm:$0xff] %v323
    %364 = vst [vmem:[#allocation2 + $0x98] sm:$0xff] %v325
    %365 = vst [vmem:[#allocation2 + $0xa0] sm:$0xff] %v216
    %366 = vst [vmem:[#allocation2 + $0xa8] sm:$0xff] %v218
    %367 = vst [vmem:[#allocation2 + $0xb0] sm:$0xff] %v329
    %368 = vst [vmem:[#allocation2 + $0xb8] sm:$0xff] %v331
    %369 = vst [vmem:[#allocation2 + $0xc0] sm:$0xff] %v222
    %370 = vst [vmem:[#allocation2 + $0xc8] sm:$0xff] %v224
    %371 = vst [vmem:[#allocation2 + $0xd0] sm:$0xff] %v335
    %372 = vst [vmem:[#allocation2 + $0xd8] sm:$0xff] %v337
    %373 = vst [vmem:[#allocation2 + $0xe0] sm:$0xff] %v228
    %374 = vst [vmem:[#allocation2 + $0xe8] sm:$0xff] %v230
    %375 = vst [vmem:[#allocation2 + $0xf0] sm:$0xff] %v341
    %376 = vst [vmem:[#allocation2 + $0xf8] sm:$0xff] %v343
    %v377 = vld [vmem:[#allocation2] sm:$0xff]
    %v378 = vld [vmem:[#allocation2 + $0x8] sm:$0xff]
    %v379 = vld [vmem:[#allocation2 + $0x10] sm:$0xff]
    %v380 = vld [vmem:[#allocation2 + $0x18] sm:$0xff]
    %v381 = vld [vmem:[#allocation3] sm:$0xff]
    %v382 = vld [vmem:[#allocation5] sm:$0xff]
    %v383 = vld [vmem:[#allocation5 + $0x8] sm:$0xff]
    %v384 = vld [vmem:[#allocation5 + $0x10] sm:$0xff]
    %v385 = vld [vmem:[#allocation5 + $0x18] sm:$0xff]
    %v386 = vld [vmem:[#allocation5 + $0x20] sm:$0xff]
    %v387 = vld [vmem:[#allocation5 + $0x28] sm:$0xff]
    %v388 = vld [vmem:[#allocation5 + $0x30] sm:$0xff]
    %v389 = vld [vmem:[#allocation5 + $0x38] sm:$0xff]
    %v390 = vld [vmem:[#allocation5 + $0x40] sm:$0xff]
    %v391 = vld [vmem:[#allocation5 + $0x48] sm:$0xff]
    %v392 = vld [vmem:[#allocation5 + $0x50] sm:$0xff]
    %v393 = vld [vmem:[#allocation5 + $0x58] sm:$0xff]
    %v394 = vld [vmem:[#allocation5 + $0x60] sm:$0xff]
    %v395 = vld [vmem:[#allocation5 + $0x68] sm:$0xff]
    %v396 = vld [vmem:[#allocation5 + $0x70] sm:$0xff]
    %v397 = vld [vmem:[#allocation5 + $0x78] sm:$0xff]
    %v398 = vld [vmem:[#allocation5 + $0x80] sm:$0xff]
    %v399 = vld [vmem:[#allocation5 + $0x88] sm:$0xff]
    %v400 = vld [vmem:[#allocation5 + $0x90] sm:$0xff]
    %v401 = vld [vmem:[#allocation5 + $0x98] sm:$0xff]
    %v402 = vld [vmem:[#allocation5 + $0xa0] sm:$0xff]
    %v403 = vld [vmem:[#allocation5 + $0xa8] sm:$0xff]
    %v404 = vld [vmem:[#allocation5 + $0xb0] sm:$0xff]
    %v405 = vld [vmem:[#allocation5 + $0xb8] sm:$0xff]
    %v406 = vld [vmem:[#allocation5 + $0xc0] sm:$0xff]
    %v407 = vld [vmem:[#allocation5 + $0xc8] sm:$0xff]
    %v408 = vld [vmem:[#allocation5 + $0xd0] sm:$0xff]
    %v409 = vld [vmem:[#allocation5 + $0xd8] sm:$0xff]
    %v410 = vld [vmem:[#allocation5 + $0xe0] sm:$0xff]
    %v411 = vld [vmem:[#allocation5 + $0xe8] sm:$0xff]
    %v412 = vld [vmem:[#allocation5 + $0xf0] sm:$0xff]
    %v413 = vld [vmem:[#allocation5 + $0xf8] sm:$0xff]
    %v414 = vld [vmem:[#allocation5 + $0x100] sm:$0xff]
    %v415 = vld [vmem:[#allocation5 + $0x108] sm:$0xff]
    %v416 = vld [vmem:[#allocation5 + $0x110] sm:$0xff]
    %v417 = vld [vmem:[#allocation5 + $0x118] sm:$0xff]
    %v418 = vld [vmem:[#allocation5 + $0x120] sm:$0xff]
    %v419 = vld [vmem:[#allocation5 + $0x128] sm:$0xff]
    %v420 = vld [vmem:[#allocation5 + $0x130] sm:$0xff]
    %v421 = vld [vmem:[#allocation5 + $0x138] sm:$0xff]
    %v422 = vld [vmem:[#allocation5 + $0x140] sm:$0xff]
    %v423 = vld [vmem:[#allocation5 + $0x148] sm:$0xff]
    %v424 = vld [vmem:[#allocation5 + $0x150] sm:$0xff]
    %v425 = vld [vmem:[#allocation5 + $0x158] sm:$0xff]
    %v426 = vld [vmem:[#allocation5 + $0x160] sm:$0xff]
    %v427 = vld [vmem:[#allocation5 + $0x168] sm:$0xff]
    %v428 = vld [vmem:[#allocation5 + $0x170] sm:$0xff]
    %v429 = vld [vmem:[#allocation5 + $0x178] sm:$0xff]
    %v430 = vld [vmem:[#allocation5 + $0x180] sm:$0xff]
    %v431 = vld [vmem:[#allocation5 + $0x188] sm:$0xff]
    %v432 = vld [vmem:[#allocation5 + $0x190] sm:$0xff]
    %v433 = vld [vmem:[#allocation5 + $0x198] sm:$0xff]
    %v434 = vld [vmem:[#allocation5 + $0x1a0] sm:$0xff]
    %v435 = vld [vmem:[#allocation5 + $0x1a8] sm:$0xff]
    %v436 = vld [vmem:[#allocation5 + $0x1b0] sm:$0xff]
    %v437 = vld [vmem:[#allocation5 + $0x1b8] sm:$0xff]
    %v438 = vld [vmem:[#allocation5 + $0x1c0] sm:$0xff]
    %v439 = vld [vmem:[#allocation5 + $0x1c8] sm:$0xff]
    %v440 = vld [vmem:[#allocation5 + $0x1d0] sm:$0xff]
    %v441 = vld [vmem:[#allocation5 + $0x1d8] sm:$0xff]
    %v442 = vld [vmem:[#allocation5 + $0x1e0] sm:$0xff]
    %v443 = vld [vmem:[#allocation5 + $0x1e8] sm:$0xff]
    %v444 = vld [vmem:[#allocation5 + $0x1f0] sm:$0xff]
    %v445 = vld [vmem:[#allocation5 + $0x1f8] sm:$0xff]
    %446 = vmatprep.subr.mxu0 %v383
    %447 = vmatpush1.msra.mxu0 %v382
    %448 = vmatprep.subr.mxu0 %v387
    %449 = vmatpush1.msra.mxu0 %v386
    %450 = vmatprep.subr.mxu0 %v391
    %451 = vmatpush1.msra.mxu0 %v390
    %452 = vmatprep.subr.mxu0 %v395
    %453 = vmatpush1.msra.mxu0 %v394
    %454 = vmatprep.subr.mxu0 %v399
    %455 = vmatpush1.msra.mxu0 %v398
    %456 = vmatprep.subr.mxu0 %v403
    %457 = vmatpush1.msra.mxu0 %v402
    %458 = vmatprep.subr.mxu0 %v407
    %459 = vmatpush1.msra.mxu0 %v406
    %460 = vmatprep.subr.mxu0 %v411
    %461 = vmatpush1.msra.mxu0 %v410
    %462 = vmatprep.subr.mxu0 %v415
    %463 = vmatpush1.msra.mxu0 %v414
    %464 = vmatprep.subr.mxu0 %v419
    %465 = vmatpush1.msra.mxu0 %v418
    %466 = vmatprep.subr.mxu0 %v423
    %467 = vmatpush1.msra.mxu0 %v422
    %468 = vmatprep.subr.mxu0 %v427
    %469 = vmatpush1.msra.mxu0 %v426
    %470 = vmatprep.subr.mxu0 %v431
    %471 = vmatpush1.msra.mxu0 %v430
    %472 = vmatprep.subr.mxu0 %v435
    %473 = vmatpush1.msra.mxu0 %v434
    %474 = vmatprep.subr.mxu0 %v439
    %475 = vmatpush1.msra.mxu0 %v438
    %476 = vmatprep.subr.mxu0 %v443
    %477 = vmatpush1.msra.mxu0 %v442
    %478 = vmatprep.subr.mxu0 0.0
    %479 = vmatpush1.msra.mxu0 0.0
    %480 = vmatprep.subr.mxu0 0.0
    %481 = vmatpush1.msra.mxu0 0.0
    %482 = vmatprep.subr.mxu0 0.0
    %483 = vmatpush1.msra.mxu0 0.0
    %484 = vmatprep.subr.mxu0 0.0
    %485 = vmatpush1.msra.mxu0 0.0
    %486 = vmatprep.subr.mxu0 0.0
    %487 = vmatpush1.msra.mxu0 0.0
    %488 = vmatprep.subr.mxu0 0.0
    %489 = vmatpush1.msra.mxu0 0.0
    %490 = vmatprep.subr.mxu0 0.0
    %491 = vmatpush1.msra.mxu0 0.0
    %492 = vmatprep.subr.mxu0 0.0
    %493 = vmatpush1.msra.mxu0 0.0
    %494 = vmatprep.subr.mxu0 0.0
    %495 = vmatpush1.msra.mxu0 0.0
    %496 = vmatprep.subr.mxu0 0.0
    %497 = vmatpush1.msra.mxu0 0.0
    %498 = vmatprep.subr.mxu0 0.0
    %499 = vmatpush1.msra.mxu0 0.0
    %500 = vmatprep.subr.mxu0 0.0
    %501 = vmatpush1.msra.mxu0 0.0
    %502 = vmatprep.subr.mxu0 0.0
    %503 = vmatpush1.msra.mxu0 0.0
    %504 = vmatprep.subr.mxu0 0.0
    %505 = vmatpush1.msra.mxu0 0.0
    %506 = vmatprep.subr.mxu0 0.0
    %507 = vmatpush1.msra.mxu0 0.0
    %508 = vmatprep.subr.mxu0 0.0
    %509 = vmatpush1.msra.mxu0 0.0
    %510 = vmatprep.mubr.f32.mxu0 0.0
    %511 = vmatmul.mubr.f32.gmra.mrb[0].mxu0 %v381
    %v512 = vpop.f32.mrb[0].mxu0
    %v513 = vadd.f32 0.0, %v512
    %v514 = vpop.f32.mrb[0].mxu0
    %v515 = vadd.f32 0.0, %v514
    %516 = vdwg.mxu0
    %517 = vmatprep.subr.mxu0 %v385
    %518 = vmatpush1.msra.mxu0 %v384
    %519 = vmatprep.subr.mxu0 %v389
    %520 = vmatpush1.msra.mxu0 %v388
    %521 = vmatprep.subr.mxu0 %v393
    %522 = vmatpush1.msra.mxu0 %v392
    %523 = vmatprep.subr.mxu0 %v397
    %524 = vmatpush1.msra.mxu0 %v396
    %525 = vmatprep.subr.mxu0 %v401
    %526 = vmatpush1.msra.mxu0 %v400
    %527 = vmatprep.subr.mxu0 %v405
    %528 = vmatpush1.msra.mxu0 %v404
    %529 = vmatprep.subr.mxu0 %v409
    %530 = vmatpush1.msra.mxu0 %v408
    %531 = vmatprep.subr.mxu0 %v413
    %532 = vmatpush1.msra.mxu0 %v412
    %533 = vmatprep.subr.mxu0 %v417
    %534 = vmatpush1.msra.mxu0 %v416
    %535 = vmatprep.subr.mxu0 %v421
    %536 = vmatpush1.msra.mxu0 %v420
    %537 = vmatprep.subr.mxu0 %v425
    %538 = vmatpush1.msra.mxu0 %v424
    %539 = vmatprep.subr.mxu0 %v429
    %540 = vmatpush1.msra.mxu0 %v428
    %541 = vmatprep.subr.mxu0 %v433
    %542 = vmatpush1.msra.mxu0 %v432
    %543 = vmatprep.subr.mxu0 %v437
    %544 = vmatpush1.msra.mxu0 %v436
    %545 = vmatprep.subr.mxu0 %v441
    %546 = vmatpush1.msra.mxu0 %v440
    %547 = vmatprep.subr.mxu0 %v445
    %548 = vmatpush1.msra.mxu0 %v444
    %549 = vmatprep.subr.mxu0 0.0
    %550 = vmatpush1.msra.mxu0 0.0
    %551 = vmatprep.subr.mxu0 0.0
    %552 = vmatpush1.msra.mxu0 0.0
    %553 = vmatprep.subr.mxu0 0.0
    %554 = vmatpush1.msra.mxu0 0.0
    %555 = vmatprep.subr.mxu0 0.0
    %556 = vmatpush1.msra.mxu0 0.0
    %557 = vmatprep.subr.mxu0 0.0
    %558 = vmatpush1.msra.mxu0 0.0
    %559 = vmatprep.subr.mxu0 0.0
    %560 = vmatpush1.msra.mxu0 0.0
    %561 = vmatprep.subr.mxu0 0.0
    %562 = vmatpush1.msra.mxu0 0.0
    %563 = vmatprep.subr.mxu0 0.0
    %564 = vmatpush1.msra.mxu0 0.0
    %565 = vmatprep.subr.mxu0 0.0
    %566 = vmatpush1.msra.mxu0 0.0
    %567 = vmatprep.subr.mxu0 0.0
    %568 = vmatpush1.msra.mxu0 0.0
    %569 = vmatprep.subr.mxu0 0.0
    %570 = vmatpush1.msra.mxu0 0.0
    %571 = vmatprep.subr.mxu0 0.0
    %572 = vmatpush1.msra.mxu0 0.0
    %573 = vmatprep.subr.mxu0 0.0
    %574 = vmatpush1.msra.mxu0 0.0
    %575 = vmatprep.subr.mxu0 0.0
    %576 = vmatpush1.msra.mxu0 0.0
    %577 = vmatprep.subr.mxu0 0.0
    %578 = vmatpush1.msra.mxu0 0.0
    %579 = vmatprep.subr.mxu0 0.0
    %580 = vmatpush1.msra.mxu0 0.0
    %581 = vmatprep.mubr.f32.mxu0 0.0
    %582 = vmatmul.mubr.f32.gmra.mrb[0].mxu0 %v381
    %v583 = vpop.f32.mrb[0].mxu0
    %v584 = vadd.f32 0.0, %v583
    %v585 = vpop.f32.mrb[0].mxu0
    %v586 = vadd.f32 0.0, %v585
    %587 = vdwg.mxu0
    %v588 = vadd.f32 %v377, %v513
    %v589 = vadd.f32 %v378, %v515
    %v590 = vadd.f32 %v379, %v584
    %v591 = vadd.f32 %v380, %v586
    %v592 = vxor.u32 %v588, 2147483648
    %v593 = vmul.f32 %v592, 1.442695
    %v594 = vpow.pop %v593
    %v595 = vadd.f32 %v594, 1.0
    %v596 = vrcp.pop %v595
    %v597 = vmul.f32 1.0, %v596
    %v598 = vxor.u32 %v589, 2147483648
    %v599 = vmul.f32 %v598, 1.442695
    %v600 = vpow.pop %v599
    %v601 = vadd.f32 %v600, 1.0
    %v602 = vrcp.pop %v601
    %v603 = vmul.f32 1.0, %v602
    %v604 = vxor.u32 %v590, 2147483648
    %v605 = vmul.f32 %v604, 1.442695
    %v606 = vpow.pop %v605
    %v607 = vadd.f32 %v606, 1.0
    %v608 = vrcp.pop %v607
    %v609 = vmul.f32 1.0, %v608
    %v610 = vtanh.pop %v591
    %v611 = vld [vmem:[#allocation4] sm:$0xff]
    %v612 = vmul.f32 %v603, %v611
    %v613 = vmul.f32 %v597, %v610
    %v614 = vadd.f32 %v612, %v613
    %v615 = vtanh.pop %v614
    %v616 = vmul.f32 %v609, %v615
    %617 = vst [vmem:[#allocation4] sm:$0xff] %v614
    %618 = vst [vmem:[#allocation3] sm:$0xff] %v616
    %619 = vst [vmem:[#allocation8] sm:$0xff] %v616
    %v620 = vld [vmem:[#allocation2 + $0x20] sm:$0xff]
    %v621 = vld [vmem:[#allocation2 + $0x28] sm:$0xff]
    %v622 = vld [vmem:[#allocation2 + $0x30] sm:$0xff]
    %v623 = vld [vmem:[#allocation2 + $0x38] sm:$0xff]
    %v624 = vld [vmem:[#allocation3] sm:$0xff]
    %v625 = vld [vmem:[#allocation5] sm:$0xff]
    %v626 = vld [vmem:[#allocation5 + $0x8] sm:$0xff]
    %v627 = vld [vmem:[#allocation5 + $0x10] sm:$0xff]
    %v628 = vld [vmem:[#allocation5 + $0x18] sm:$0xff]
    %v629 = vld [vmem:[#allocation5 + $0x20] sm:$0xff]
    %v630 = vld [vmem:[#allocation5 + $0x28] sm:$0xff]
    %v631 = vld [vmem:[#allocation5 + $0x30] sm:$0xff]
    %v632 = vld [vmem:[#allocation5 + $0x38] sm:$0xff]
    %v633 = vld [vmem:[#allocation5 + $0x40] sm:$0xff]
    %v634 = vld [vmem:[#allocation5 + $0x48] sm:$0xff]
    %v635 = vld [vmem:[#allocation5 + $0x50] sm:$0xff]
    %v636 = vld [vmem:[#allocation5 + $0x58] sm:$0xff]
    %v637 = vld [vmem:[#allocation5 + $0x60] sm:$0xff]
    %v638 = vld [vmem:[#allocation5 + $0x68] sm:$0xff]
    %v639 = vld [vmem:[#allocation5 + $0x70] sm:$0xff]
    %v640 = vld [vmem:[#allocation5 + $0x78] sm:$0xff]
    %v641 = vld [vmem:[#allocation5 + $0x80] sm:$0xff]
    %v642 = vld [vmem:[#allocation5 + $0x88] sm:$0xff]
    %v643 = vld [vmem:[#allocation5 + $0x90] sm:$0xff]
    %v644 = vld [vmem:[#allocation5 + $0x98] sm:$0xff]
    %v645 = vld [vmem:[#allocation5 + $0xa0] sm:$0xff]
    %v646 = vld [vmem:[#allocation5 + $0xa8] sm:$0xff]
    %v647 = vld [vmem:[#allocation5 + $0xb0] sm:$0xff]
    %v648 = vld [vmem:[#allocation5 + $0xb8] sm:$0xff]
    %v649 = vld [vmem:[#allocation5 + $0xc0] sm:$0xff]
    %v650 = vld [vmem:[#allocation5 + $0xc8] sm:$0xff]
    %v651 = vld [vmem:[#allocation5 + $0xd0] sm:$0xff]
    %v652 = vld [vmem:[#allocation5 + $0xd8] sm:$0xff]
    %v653 = vld [vmem:[#allocation5 + $0xe0] sm:$0xff]
    %v654 = vld [vmem:[#allocation5 + $0xe8] sm:$0xff]
    %v655 = vld [vmem:[#allocation5 + $0xf0] sm:$0xff]
    %v656 = vld [vmem:[#allocation5 + $0xf8] sm:$0xff]
    %v657 = vld [vmem:[#allocation5 + $0x100] sm:$0xff]
    %v658 = vld [vmem:[#allocation5 + $0x108] sm:$0xff]
    %v659 = vld [vmem:[#allocation5 + $0x110] sm:$0xff]
    %v660 = vld [vmem:[#allocation5 + $0x118] sm:$0xff]
    %v661 = vld [vmem:[#allocation5 + $0x120] sm:$0xff]
    %v662 = vld [vmem:[#allocation5 + $0x128] sm:$0xff]
    %v663 = vld [vmem:[#allocation5 + $0x130] sm:$0xff]
    %v664 = vld [vmem:[#allocation5 + $0x138] sm:$0xff]
    %v665 = vld [vmem:[#allocation5 + $0x140] sm:$0xff]
    %v666 = vld [vmem:[#allocation5 + $0x148] sm:$0xff]
    %v667 = vld [vmem:[#allocation5 + $0x150] sm:$0xff]
    %v668 = vld [vmem:[#allocation5 + $0x158] sm:$0xff]
    %v669 = vld [vmem:[#allocation5 + $0x160] sm:$0xff]
    %v670 = vld [vmem:[#allocation5 + $0x168] sm:$0xff]
    %v671 = vld [vmem:[#allocation5 + $0x170] sm:$0xff]
    %v672 = vld [vmem:[#allocation5 + $0x178] sm:$0xff]
    %v673 = vld [vmem:[#allocation5 + $0x180] sm:$0xff]
    %v674 = vld [vmem:[#allocation5 + $0x188] sm:$0xff]
    %v675 = vld [vmem:[#allocation5 + $0x190] sm:$0xff]
    %v676 = vld [vmem:[#allocation5 + $0x198] sm:$0xff]
    %v677 = vld [vmem:[#allocation5 + $0x1a0] sm:$0xff]
    %v678 = vld [vmem:[#allocation5 + $0x1a8] sm:$0xff]
    %v679 = vld [vmem:[#allocation5 + $0x1b0] sm:$0xff]
    %v680 = vld [vmem:[#allocation5 + $0x1b8] sm:$0xff]
    %v681 = vld [vmem:[#allocation5 + $0x1c0] sm:$0xff]
    %v682 = vld [vmem:[#allocation5 + $0x1c8] sm:$0xff]
    %v683 = vld [vmem:[#allocation5 + $0x1d0] sm:$0xff]
    %v684 = vld [vmem:[#allocation5 + $0x1d8] sm:$0xff]
    %v685 = vld [vmem:[#allocation5 + $0x1e0] sm:$0xff]
    %v686 = vld [vmem:[#allocation5 + $0x1e8] sm:$0xff]
    %v687 = vld [vmem:[#allocation5 + $0x1f0] sm:$0xff]
    %v688 = vld [vmem:[#allocation5 + $0x1f8] sm:$0xff]
    %689 = vmatprep.subr.mxu0 %v626
    %690 = vmatpush1.msra.mxu0 %v625
    %691 = vmatprep.subr.mxu0 %v630
    %692 = vmatpush1.msra.mxu0 %v629
    %693 = vmatprep.subr.mxu0 %v634
    %694 = vmatpush1.msra.mxu0 %v633
    %695 = vmatprep.subr.mxu0 %v638
    %696 = vmatpush1.msra.mxu0 %v637
    %697 = vmatprep.subr.mxu0 %v642
    %698 = vmatpush1.msra.mxu0 %v641
    %699 = vmatprep.subr.mxu0 %v646
    %700 = vmatpush1.msra.mxu0 %v645
    %701 = vmatprep.subr.mxu0 %v650
    %702 = vmatpush1.msra.mxu0 %v649
    %703 = vmatprep.subr.mxu0 %v654
    %704 = vmatpush1.msra.mxu0 %v653
    %705 = vmatprep.subr.mxu0 %v658
    %706 = vmatpush1.msra.mxu0 %v657
    %707 = vmatprep.subr.mxu0 %v662
    %708 = vmatpush1.msra.mxu0 %v661
    %709 = vmatprep.subr.mxu0 %v666
    %710 = vmatpush1.msra.mxu0 %v665
    %711 = vmatprep.subr.mxu0 %v670
    %712 = vmatpush1.msra.mxu0 %v669
    %713 = vmatprep.subr.mxu0 %v674
    %714 = vmatpush1.msra.mxu0 %v673
    %715 = vmatprep.subr.mxu0 %v678
    %716 = vmatpush1.msra.mxu0 %v677
    %717 = vmatprep.subr.mxu0 %v682
    %718 = vmatpush1.msra.mxu0 %v681
    %719 = vmatprep.subr.mxu0 %v686
    %720 = vmatpush1.msra.mxu0 %v685
    %721 = vmatprep.subr.mxu0 0.0
    %722 = vmatpush1.msra.mxu0 0.0
    %723 = vmatprep.subr.mxu0 0.0
    %724 = vmatpush1.msra.mxu0 0.0
    %725 = vmatprep.subr.mxu0 0.0
    %726 = vmatpush1.msra.mxu0 0.0
    %727 = vmatprep.subr.mxu0 0.0
    %728 = vmatpush1.msra.mxu0 0.0
    %729 = vmatprep.subr.mxu0 0.0
    %730 = vmatpush1.msra.mxu0 0.0
    %731 = vmatprep.subr.mxu0 0.0
    %732 = vmatpush1.msra.mxu0 0.0
    %733 = vmatprep.subr.mxu0 0.0
    %734 = vmatpush1.msra.mxu0 0.0
    %735 = vmatprep.subr.mxu0 0.0
    %736 = vmatpush1.msra.mxu0 0.0
    %737 = vmatprep.subr.mxu0 0.0
    %738 = vmatpush1.msra.mxu0 0.0
    %739 = vmatprep.subr.mxu0 0.0
    %740 = vmatpush1.msra.mxu0 0.0
    %741 = vmatprep.subr.mxu0 0.0
    %742 = vmatpush1.msra.mxu0 0.0
    %743 = vmatprep.subr.mxu0 0.0
    %744 = vmatpush1.msra.mxu0 0.0
    %745 = vmatprep.subr.mxu0 0.0
    %746 = vmatpush1.msra.mxu0 0.0
    %747 = vmatprep.subr.mxu0 0.0
    %748 = vmatpush1.msra.mxu0 0.0
    %749 = vmatprep.subr.mxu0 0.0
    %750 = vmatpush1.msra.mxu0 0.0
    %751 = vmatprep.subr.mxu0 0.0
    %752 = vmatpush1.msra.mxu0 0.0
    %753 = vmatprep.mubr.f32.mxu0 0.0
    %754 = vmatmul.mubr.f32.gmra.mrb[0].mxu0 %v624
    %v755 = vpop.f32.mrb[0].mxu0
    %v756 = vadd.f32 0.0, %v755
    %v757 = vpop.f32.mrb[0].mxu0
    %v758 = vadd.f32 0.0, %v757
    %759 = vdwg.mxu0
    %760 = vmatprep.subr.mxu0 %v628
    %761 = vmatpush1.msra.mxu0 %v627
    %762 = vmatprep.subr.mxu0 %v632
    %763 = vmatpush1.msra.mxu0 %v631
    %764 = vmatprep.subr.mxu0 %v636
    %765 = vmatpush1.msra.mxu0 %v635
    %766 = vmatprep.subr.mxu0 %v640
    %767 = vmatpush1.msra.mxu0 %v639
    %768 = vmatprep.subr.mxu0 %v644
    %769 = vmatpush1.msra.mxu0 %v643
    %770 = vmatprep.subr.mxu0 %v648
    %771 = vmatpush1.msra.mxu0 %v647
    %772 = vmatprep.subr.mxu0 %v652
    %773 = vmatpush1.msra.mxu0 %v651
    %774 = vmatprep.subr.mxu0 %v656
    %775 = vmatpush1.msra.mxu0 %v655
    %776 = vmatprep.subr.mxu0 %v660
    %777 = vmatpush1.msra.mxu0 %v659
    %778 = vmatprep.subr.mxu0 %v664
    %779 = vmatpush1.msra.mxu0 %v663
    %780 = vmatprep.subr.mxu0 %v668
    %781 = vmatpush1.msra.mxu0 %v667
    %782 = vmatprep.subr.mxu0 %v672
    %783 = vmatpush1.msra.mxu0 %v671
    %784 = vmatprep.subr.mxu0 %v676
    %785 = vmatpush1.msra.mxu0 %v675
    %786 = vmatprep.subr.mxu0 %v680
    %787 = vmatpush1.msra.mxu0 %v679
    %788 = vmatprep.subr.mxu0 %v684
    %789 = vmatpush1.msra.mxu0 %v683
    %790 = vmatprep.subr.mxu0 %v688
    %791 = vmatpush1.msra.mxu0 %v687
    %792 = vmatprep.subr.mxu0 0.0
    %793 = vmatpush1.msra.mxu0 0.0
    %794 = vmatprep.subr.mxu0 0.0
    %795 = vmatpush1.msra.mxu0 0.0
    %796 = vmatprep.subr.mxu0 0.0
    %797 = vmatpush1.msra.mxu0 0.0
    %798 = vmatprep.subr.mxu0 0.0
    %799 = vmatpush1.msra.mxu0 0.0
    %800 = vmatprep.subr.mxu0 0.0
    %801 = vmatpush1.msra.mxu0 0.0
    %802 = vmatprep.subr.mxu0 0.0
    %803 = vmatpush1.msra.mxu0 0.0
    %804 = vmatprep.subr.mxu0 0.0
    %805 = vmatpush1.msra.mxu0 0.0
    %806 = vmatprep.subr.mxu0 0.0
    %807 = vmatpush1.msra.mxu0 0.0
    %808 = vmatprep.subr.mxu0 0.0
    %809 = vmatpush1.msra.mxu0 0.0
    %810 = vmatprep.subr.mxu0 0.0
    %811 = vmatpush1.msra.mxu0 0.0
    %812 = vmatprep.subr.mxu0 0.0
    %813 = vmatpush1.msra.mxu0 0.0
    %814 = vmatprep.subr.mxu0 0.0
    %815 = vmatpush1.msra.mxu0 0.0
    %816 = vmatprep.subr.mxu0 0.0
    %817 = vmatpush1.msra.mxu0 0.0
    %818 = vmatprep.subr.mxu0 0.0
    %819 = vmatpush1.msra.mxu0 0.0
    %820 = vmatprep.subr.mxu0 0.0
    %821 = vmatpush1.msra.mxu0 0.0
    %822 = vmatprep.subr.mxu0 0.0
    %823 = vmatpush1.msra.mxu0 0.0
    %824 = vmatprep.mubr.f32.mxu0 0.0
    %825 = vmatmul.mubr.f32.gmra.mrb[0].mxu0 %v624
    %v826 = vpop.f32.mrb[0].mxu0
    %v827 = vadd.f32 0.0, %v826
    %v828 = vpop.f32.mrb[0].mxu0
    %v829 = vadd.f32 0.0, %v828
    %830 = vdwg.mxu0
    %v831 = vadd.f32 %v620, %v756
    %v832 = vadd.f32 %v621, %v758
    %v833 = vadd.f32 %v622, %v827
    %v834 = vadd.f32 %v623, %v829
    %v835 = vxor.u32 %v831, 2147483648
    %v836 = vmul.f32 %v835, 1.442695
    %v837 = vpow.pop %v836
    %v838 = vadd.f32 %v837, 1.0
    %v839 = vrcp.pop %v838
    %v840 = vmul.f32 1.0, %v839
    %v841 = vxor.u32 %v832, 2147483648
    %v842 = vmul.f32 %v841, 1.442695
    %v843 = vpow.pop %v842
    %v844 = vadd.f32 %v843, 1.0
    %v845 = vrcp.pop %v844
    %v846 = vmul.f32 1.0, %v845
    %v847 = vxor.u32 %v833, 2147483648
    %v848 = vmul.f32 %v847, 1.442695
    %v849 = vpow.pop %v848
    %v850 = vadd.f32 %v849, 1.0
    %v851 = vrcp.pop %v850
    %v852 = vmul.f32 1.0, %v851
    %v853 = vtanh.pop %v834
    %v854 = vld [vmem:[#allocation4] sm:$0xff]
    %v855 = vmul.f32 %v846, %v854
    %v856 = vmul.f32 %v840, %v853
    %v857 = vadd.f32 %v855, %v856
    %v858 = vtanh.pop %v857
    %v859 = vmul.f32 %v852, %v858
    %860 = vst [vmem:[#allocation4] sm:$0xff] %v857
    %861 = vst [vmem:[#allocation3] sm:$0xff] %v859
    %s862 = scalar_lea.vmem [#allocation8], 8
    %863 = vst [vmem:[%s862] sm:$0xff] %v859
    %v864 = vld [vmem:[#allocation2 + $0x40] sm:$0xff]
    %v865 = vld [vmem:[#allocation2 + $0x48] sm:$0xff]
    %v866 = vld [vmem:[#allocation2 + $0x50] sm:$0xff]
    %v867 = vld [vmem:[#allocation2 + $0x58] sm:$0xff]
    %v868 = vld [vmem:[#allocation3] sm:$0xff]
    %v869 = vld [vmem:[#allocation5] sm:$0xff]
    %v870 = vld [vmem:[#allocation5 + $0x8] sm:$0xff]
    %v871 = vld [vmem:[#allocation5 + $0x10] sm:$0xff]
    %v872 = vld [vmem:[#allocation5 + $0x18] sm:$0xff]
    %v873 = vld [vmem:[#allocation5 + $0x20] sm:$0xff]
    %v874 = vld [vmem:[#allocation5 + $0x28] sm:$0xff]
    %v875 = vld [vmem:[#allocation5 + $0x30] sm:$0xff]
    %v876 = vld [vmem:[#allocation5 + $0x38] sm:$0xff]
    %v877 = vld [vmem:[#allocation5 + $0x40] sm:$0xff]
    %v878 = vld [vmem:[#allocation5 + $0x48] sm:$0xff]
    %v879 = vld [vmem:[#allocation5 + $0x50] sm:$0xff]
    %v880 = vld [vmem:[#allocation5 + $0x58] sm:$0xff]
    %v881 = vld [vmem:[#allocation5 + $0x60] sm:$0xff]
    %v882 = vld [vmem:[#allocation5 + $0x68] sm:$0xff]
    %v883 = vld [vmem:[#allocation5 + $0x70] sm:$0xff]
    %v884 = vld [vmem:[#allocation5 + $0x78] sm:$0xff]
    %v885 = vld [vmem:[#allocation5 + $0x80] sm:$0xff]
    %v886 = vld [vmem:[#allocation5 + $0x88] sm:$0xff]
    %v887 = vld [vmem:[#allocation5 + $0x90] sm:$0xff]
    %v888 = vld [vmem:[#allocation5 + $0x98] sm:$0xff]
    %v889 = vld [vmem:[#allocation5 + $0xa0] sm:$0xff]
    %v890 = vld [vmem:[#allocation5 + $0xa8] sm:$0xff]
    %v891 = vld [vmem:[#allocation5 + $0xb0] sm:$0xff]
    %v892 = vld [vmem:[#allocation5 + $0xb8] sm:$0xff]
    %v893 = vld [vmem:[#allocation5 + $0xc0] sm:$0xff]
    %v894 = vld [vmem:[#allocation5 + $0xc8] sm:$0xff]
    %v895 = vld [vmem:[#allocation5 + $0xd0] sm:$0xff]
    %v896 = vld [vmem:[#allocation5 + $0xd8] sm:$0xff]
    %v897 = vld [vmem:[#allocation5 + $0xe0] sm:$0xff]
    %v898 = vld [vmem:[#allocation5 + $0xe8] sm:$0xff]
    %v899 = vld [vmem:[#allocation5 + $0xf0] sm:$0xff]
    %v900 = vld [vmem:[#allocation5 + $0xf8] sm:$0xff]
    %v901 = vld [vmem:[#allocation5 + $0x100] sm:$0xff]
    %v902 = vld [vmem:[#allocation5 + $0x108] sm:$0xff]
    %v903 = vld [vmem:[#allocation5 + $0x110] sm:$0xff]
    %v904 = vld [vmem:[#allocation5 + $0x118] sm:$0xff]
    %v905 = vld [vmem:[#allocation5 + $0x120] sm:$0xff]
    %v906 = vld [vmem:[#allocation5 + $0x128] sm:$0xff]
    %v907 = vld [vmem:[#allocation5 + $0x130] sm:$0xff]
    %v908 = vld [vmem:[#allocation5 + $0x138] sm:$0xff]
    %v909 = vld [vmem:[#allocation5 + $0x140] sm:$0xff]
    %v910 = vld [vmem:[#allocation5 + $0x148] sm:$0xff]
    %v911 = vld [vmem:[#allocation5 + $0x150] sm:$0xff]
    %v912 = vld [vmem:[#allocation5 + $0x158] sm:$0xff]
    %v913 = vld [vmem:[#allocation5 + $0x160] sm:$0xff]
    %v914 = vld [vmem:[#allocation5 + $0x168] sm:$0xff]
    %v915 = vld [vmem:[#allocation5 + $0x170] sm:$0xff]
    %v916 = vld [vmem:[#allocation5 + $0x178] sm:$0xff]
    %v917 = vld [vmem:[#allocation5 + $0x180] sm:$0xff]
    %v918 = vld [vmem:[#allocation5 + $0x188] sm:$0xff]
    %v919 = vld [vmem:[#allocation5 + $0x190] sm:$0xff]
    %v920 = vld [vmem:[#allocation5 + $0x198] sm:$0xff]
    %v921 = vld [vmem:[#allocation5 + $0x1a0] sm:$0xff]
    %v922 = vld [vmem:[#allocation5 + $0x1a8] sm:$0xff]
    %v923 = vld [vmem:[#allocation5 + $0x1b0] sm:$0xff]
    %v924 = vld [vmem:[#allocation5 + $0x1b8] sm:$0xff]
    %v925 = vld [vmem:[#allocation5 + $0x1c0] sm:$0xff]
    %v926 = vld [vmem:[#allocation5 + $0x1c8] sm:$0xff]
    %v927 = vld [vmem:[#allocation5 + $0x1d0] sm:$0xff]
    %v928 = vld [vmem:[#allocation5 + $0x1d8] sm:$0xff]
    %v929 = vld [vmem:[#allocation5 + $0x1e0] sm:$0xff]
    %v930 = vld [vmem:[#allocation5 + $0x1e8] sm:$0xff]
    %v931 = vld [vmem:[#allocation5 + $0x1f0] sm:$0xff]
    %v932 = vld [vmem:[#allocation5 + $0x1f8] sm:$0xff]
    %933 = vmatprep.subr.mxu0 %v870
    %934 = vmatpush1.msra.mxu0 %v869
    %935 = vmatprep.subr.mxu0 %v874
    %936 = vmatpush1.msra.mxu0 %v873
    %937 = vmatprep.subr.mxu0 %v878
    %938 = vmatpush1.msra.mxu0 %v877
    %939 = vmatprep.subr.mxu0 %v882
    %940 = vmatpush1.msra.mxu0 %v881
    %941 = vmatprep.subr.mxu0 %v886
    %942 = vmatpush1.msra.mxu0 %v885
    %943 = vmatprep.subr.mxu0 %v890
    %944 = vmatpush1.msra.mxu0 %v889
    %945 = vmatprep.subr.mxu0 %v894
    %946 = vmatpush1.msra.mxu0 %v893
    %947 = vmatprep.subr.mxu0 %v898
    %948 = vmatpush1.msra.mxu0 %v897
    %949 = vmatprep.subr.mxu0 %v902
    %950 = vmatpush1.msra.mxu0 %v901
    %951 = vmatprep.subr.mxu0 %v906
    %952 = vmatpush1.msra.mxu0 %v905
    %953 = vmatprep.subr.mxu0 %v910
    %954 = vmatpush1.msra.mxu0 %v909
    %955 = vmatprep.subr.mxu0 %v914
    %956 = vmatpush1.msra.mxu0 %v913
    %957 = vmatprep.subr.mxu0 %v918
    %958 = vmatpush1.msra.mxu0 %v917
    %959 = vmatprep.subr.mxu0 %v922
    %960 = vmatpush1.msra.mxu0 %v921
    %961 = vmatprep.subr.mxu0 %v926
    %962 = vmatpush1.msra.mxu0 %v925
    %963 = vmatprep.subr.mxu0 %v930
    %964 = vmatpush1.msra.mxu0 %v929
    %965 = vmatprep.subr.mxu0 0.0
    %966 = vmatpush1.msra.mxu0 0.0
    %967 = vmatprep.subr.mxu0 0.0
    %968 = vmatpush1.msra.mxu0 0.0
    %969 = vmatprep.subr.mxu0 0.0
    %970 = vmatpush1.msra.mxu0 0.0
    %971 = vmatprep.subr.mxu0 0.0
    %972 = vmatpush1.msra.mxu0 0.0
    %973 = vmatprep.subr.mxu0 0.0
    %974 = vmatpush1.msra.mxu0 0.0
    %975 = vmatprep.subr.mxu0 0.0
    %976 = vmatpush1.msra.mxu0 0.0
    %977 = vmatprep.subr.mxu0 0.0
    %978 = vmatpush1.msra.mxu0 0.0
    %979 = vmatprep.subr.mxu0 0.0
    %980 = vmatpush1.msra.mxu0 0.0
    %981 = vmatprep.subr.mxu0 0.0
    %982 = vmatpush1.msra.mxu0 0.0
    %983 = vmatprep.subr.mxu0 0.0
    %984 = vmatpush1.msra.mxu0 0.0
    %985 = vmatprep.subr.mxu0 0.0
    %986 = vmatpush1.msra.mxu0 0.0
    %987 = vmatprep.subr.mxu0 0.0
    %988 = vmatpush1.msra.mxu0 0.0
    %989 = vmatprep.subr.mxu0 0.0
    %990 = vmatpush1.msra.mxu0 0.0
    %991 = vmatprep.subr.mxu0 0.0
    %992 = vmatpush1.msra.mxu0 0.0
    %993 = vmatprep.subr.mxu0 0.0
    %994 = vmatpush1.msra.mxu0 0.0
    %995 = vmatprep.subr.mxu0 0.0
    %996 = vmatpush1.msra.mxu0 0.0
    %997 = vmatprep.mubr.f32.mxu0 0.0
    %998 = vmatmul.mubr.f32.gmra.mrb[0].mxu0 %v868
    %v999 = vpop.f32.mrb[0].mxu0
    %v1000 = vadd.f32 0.0, %v999
    %v1001 = vpop.f32.mrb[0].mxu0
    %v1002 = vadd.f32 0.0, %v1001
    %1003 = vdwg.mxu0
    %1004 = vmatprep.subr.mxu0 %v872
    %1005 = vmatpush1.msra.mxu0 %v871
    %1006 = vmatprep.subr.mxu0 %v876
    %1007 = vmatpush1.msra.mxu0 %v875
    %1008 = vmatprep.subr.mxu0 %v880
    %1009 = vmatpush1.msra.mxu0 %v879
    %1010 = vmatprep.subr.mxu0 %v884
    %1011 = vmatpush1.msra.mxu0 %v883
    %1012 = vmatprep.subr.mxu0 %v888
    %1013 = vmatpush1.msra.mxu0 %v887
    %1014 = vmatprep.subr.mxu0 %v892
    %1015 = vmatpush1.msra.mxu0 %v891
    %1016 = vmatprep.subr.mxu0 %v896
    %1017 = vmatpush1.msra.mxu0 %v895
    %1018 = vmatprep.subr.mxu0 %v900
    %1019 = vmatpush1.msra.mxu0 %v899
    %1020 = vmatprep.subr.mxu0 %v904
    %1021 = vmatpush1.msra.mxu0 %v903
    %1022 = vmatprep.subr.mxu0 %v908
    %1023 = vmatpush1.msra.mxu0 %v907
    %1024 = vmatprep.subr.mxu0 %v912
    %1025 = vmatpush1.msra.mxu0 %v911
    %1026 = vmatprep.subr.mxu0 %v916
    %1027 = vmatpush1.msra.mxu0 %v915
    %1028 = vmatprep.subr.mxu0 %v920
    %1029 = vmatpush1.msra.mxu0 %v919
    %1030 = vmatprep.subr.mxu0 %v924
    %1031 = vmatpush1.msra.mxu0 %v923
    %1032 = vmatprep.subr.mxu0 %v928
    %1033 = vmatpush1.msra.mxu0 %v927
    %1034 = vmatprep.subr.mxu0 %v932
    %1035 = vmatpush1.msra.mxu0 %v931
    %1036 = vmatprep.subr.mxu0 0.0
    %1037 = vmatpush1.msra.mxu0 0.0
    %1038 = vmatprep.subr.mxu0 0.0
    %1039 = vmatpush1.msra.mxu0 0.0
    %1040 = vmatprep.subr.mxu0 0.0
    %1041 = vmatpush1.msra.mxu0 0.0
    %1042 = vmatprep.subr.mxu0 0.0
    %1043 = vmatpush1.msra.mxu0 0.0
    %1044 = vmatprep.subr.mxu0 0.0
    %1045 = vmatpush1.msra.mxu0 0.0
    %1046 = vmatprep.subr.mxu0 0.0
    %1047 = vmatpush1.msra.mxu0 0.0
    %1048 = vmatprep.subr.mxu0 0.0
    %1049 = vmatpush1.msra.mxu0 0.0
    %1050 = vmatprep.subr.mxu0 0.0
    %1051 = vmatpush1.msra.mxu0 0.0
    %1052 = vmatprep.subr.mxu0 0.0
    %1053 = vmatpush1.msra.mxu0 0.0
    %1054 = vmatprep.subr.mxu0 0.0
    %1055 = vmatpush1.msra.mxu0 0.0
    %1056 = vmatprep.subr.mxu0 0.0
    %1057 = vmatpush1.msra.mxu0 0.0
    %1058 = vmatprep.subr.mxu0 0.0
    %1059 = vmatpush1.msra.mxu0 0.0
    %1060 = vmatprep.subr.mxu0 0.0
    %1061 = vmatpush1.msra.mxu0 0.0
    %1062 = vmatprep.subr.mxu0 0.0
    %1063 = vmatpush1.msra.mxu0 0.0
    %1064 = vmatprep.subr.mxu0 0.0
    %1065 = vmatpush1.msra.mxu0 0.0
    %1066 = vmatprep.subr.mxu0 0.0
    %1067 = vmatpush1.msra.mxu0 0.0
    %1068 = vmatprep.mubr.f32.mxu0 0.0
    %1069 = vmatmul.mubr.f32.gmra.mrb[0].mxu0 %v868
    %v1070 = vpop.f32.mrb[0].mxu0
    %v1071 = vadd.f32 0.0, %v1070
    %v1072 = vpop.f32.mrb[0].mxu0
    %v1073 = vadd.f32 0.0, %v1072
    %1074 = vdwg.mxu0
    %v1075 = vadd.f32 %v864, %v1000
    %v1076 = vadd.f32 %v865, %v1002
    %v1077 = vadd.f32 %v866, %v1071
    %v1078 = vadd.f32 %v867, %v1073
    %v1079 = vxor.u32 %v1075, 2147483648
    %v1080 = vmul.f32 %v1079, 1.442695
    %v1081 = vpow.pop %v1080
    %v1082 = vadd.f32 %v1081, 1.0
    %v1083 = vrcp.pop %v1082
    %v1084 = vmul.f32 1.0, %v1083
    %v1085 = vxor.u32 %v1076, 2147483648
    %v1086 = vmul.f32 %v1085, 1.442695
    %v1087 = vpow.pop %v1086
    %v1088 = vadd.f32 %v1087, 1.0
    %v1089 = vrcp.pop %v1088
    %v1090 = vmul.f32 1.0, %v1089
    %v1091 = vxor.u32 %v1077, 2147483648
    %v1092 = vmul.f32 %v1091, 1.442695
    %v1093 = vpow.pop %v1092
    %v1094 = vadd.f32 %v1093, 1.0
    %v1095 = vrcp.pop %v1094
    %v1096 = vmul.f32 1.0, %v1095
    %v1097 = vtanh.pop %v1078
    %v1098 = vld [vmem:[#allocation4] sm:$0xff]
    %v1099 = vmul.f32 %v1090, %v1098
    %v1100 = vmul.f32 %v1084, %v1097
    %v1101 = vadd.f32 %v1099, %v1100
    %v1102 = vtanh.pop %v1101
    %v1103 = vmul.f32 %v1096, %v1102
    %1104 = vst [vmem:[#allocation4] sm:$0xff] %v1101
    %1105 = vst [vmem:[#allocation3] sm:$0xff] %v1103
    %s1106 = scalar_lea.vmem [#allocation8], 16
    %1107 = vst [vmem:[%s1106] sm:$0xff] %v1103
    %v1108 = vld [vmem:[#allocation2 + $0x60] sm:$0xff]
    %v1109 = vld [vmem:[#allocation2 + $0x68] sm:$0xff]
    %v1110 = vld [vmem:[#allocation2 + $0x70] sm:$0xff]
    %v1111 = vld [vmem:[#allocation2 + $0x78] sm:$0xff]
    %v1112 = vld [vmem:[#allocation3] sm:$0xff]
    %v1113 = vld [vmem:[#allocation5] sm:$0xff]
    %v1114 = vld [vmem:[#allocation5 + $0x8] sm:$0xff]
    %v1115 = vld [vmem:[#allocation5 + $0x10] sm:$0xff]
    %v1116 = vld [vmem:[#allocation5 + $0x18] sm:$0xff]
    %v1117 = vld [vmem:[#allocation5 + $0x20] sm:$0xff]
    %v1118 = vld [vmem:[#allocation5 + $0x28] sm:$0xff]
    %v1119 = vld [vmem:[#allocation5 + $0x30] sm:$0xff]
    %v1120 = vld [vmem:[#allocation5 + $0x38] sm:$0xff]
    %v1121 = vld [vmem:[#allocation5 + $0x40] sm:$0xff]
    %v1122 = vld [vmem:[#allocation5 + $0x48] sm:$0xff]
    %v1123 = vld [vmem:[#allocation5 + $0x50] sm:$0xff]
    %v1124 = vld [vmem:[#allocation5 + $0x58] sm:$0xff]
    %v1125 = vld [vmem:[#allocation5 + $0x60] sm:$0xff]
    %v1126 = vld [vmem:[#allocation5 + $0x68] sm:$0xff]
    %v1127 = vld [vmem:[#allocation5 + $0x70] sm:$0xff]
    %v1128 = vld [vmem:[#allocation5 + $0x78] sm:$0xff]
    %v1129 = vld [vmem:[#allocation5 + $0x80] sm:$0xff]
    %v1130 = vld [vmem:[#allocation5 + $0x88] sm:$0xff]
    %v1131 = vld [vmem:[#allocation5 + $0x90] sm:$0xff]
    %v1132 = vld [vmem:[#allocation5 + $0x98] sm:$0xff]
    %v1133 = vld [vmem:[#allocation5 + $0xa0] sm:$0xff]
    %v1134 = vld [vmem:[#allocation5 + $0xa8] sm:$0xff]
    %v1135 = vld [vmem:[#allocation5 + $0xb0] sm:$0xff]
    %v1136 = vld [vmem:[#allocation5 + $0xb8] sm:$0xff]
    %v1137 = vld [vmem:[#allocation5 + $0xc0] sm:$0xff]
    %v1138 = vld [vmem:[#allocation5 + $0xc8] sm:$0xff]
    %v1139 = vld [vmem:[#allocation5 + $0xd0] sm:$0xff]
    %v1140 = vld [vmem:[#allocation5 + $0xd8] sm:$0xff]
    %v1141 = vld [vmem:[#allocation5 + $0xe0] sm:$0xff]
    %v1142 = vld [vmem:[#allocation5 + $0xe8] sm:$0xff]
    %v1143 = vld [vmem:[#allocation5 + $0xf0] sm:$0xff]
    %v1144 = vld [vmem:[#allocation5 + $0xf8] sm:$0xff]
    %v1145 = vld [vmem:[#allocation5 + $0x100] sm:$0xff]
    %v1146 = vld [vmem:[#allocation5 + $0x108] sm:$0xff]
    %v1147 = vld [vmem:[#allocation5 + $0x110] sm:$0xff]
    %v1148 = vld [vmem:[#allocation5 + $0x118] sm:$0xff]
    %v1149 = vld [vmem:[#allocation5 + $0x120] sm:$0xff]
    %v1150 = vld [vmem:[#allocation5 + $0x128] sm:$0xff]
    %v1151 = vld [vmem:[#allocation5 + $0x130] sm:$0xff]
    %v1152 = vld [vmem:[#allocation5 + $0x138] sm:$0xff]
    %v1153 = vld [vmem:[#allocation5 + $0x140] sm:$0xff]
    %v1154 = vld [vmem:[#allocation5 + $0x148] sm:$0xff]
    %v1155 = vld [vmem:[#allocation5 + $0x150] sm:$0xff]
    %v1156 = vld [vmem:[#allocation5 + $0x158] sm:$0xff]
    %v1157 = vld [vmem:[#allocation5 + $0x160] sm:$0xff]
    %v1158 = vld [vmem:[#allocation5 + $0x168] sm:$0xff]
    %v1159 = vld [vmem:[#allocation5 + $0x170] sm:$0xff]
    %v1160 = vld [vmem:[#allocation5 + $0x178] sm:$0xff]
    %v1161 = vld [vmem:[#allocation5 + $0x180] sm:$0xff]
    %v1162 = vld [vmem:[#allocation5 + $0x188] sm:$0xff]
    %v1163 = vld [vmem:[#allocation5 + $0x190] sm:$0xff]
    %v1164 = vld [vmem:[#allocation5 + $0x198] sm:$0xff]
    %v1165 = vld [vmem:[#allocation5 + $0x1a0] sm:$0xff]
    %v1166 = vld [vmem:[#allocation5 + $0x1a8] sm:$0xff]
    %v1167 = vld [vmem:[#allocation5 + $0x1b0] sm:$0xff]
    %v1168 = vld [vmem:[#allocation5 + $0x1b8] sm:$0xff]
    %v1169 = vld [vmem:[#allocation5 + $0x1c0] sm:$0xff]
    %v1170 = vld [vmem:[#allocation5 + $0x1c8] sm:$0xff]
    %v1171 = vld [vmem:[#allocation5 + $0x1d0] sm:$0xff]
    %v1172 = vld [vmem:[#allocation5 + $0x1d8] sm:$0xff]
    %v1173 = vld [vmem:[#allocation5 + $0x1e0] sm:$0xff]
    %v1174 = vld [vmem:[#allocation5 + $0x1e8] sm:$0xff]
    %v1175 = vld [vmem:[#allocation5 + $0x1f0] sm:$0xff]
    %v1176 = vld [vmem:[#allocation5 + $0x1f8] sm:$0xff]
    %1177 = vmatprep.subr.mxu0 %v1114
    %1178 = vmatpush1.msra.mxu0 %v1113
    %1179 = vmatprep.subr.mxu0 %v1118
    %1180 = vmatpush1.msra.mxu0 %v1117
    %1181 = vmatprep.subr.mxu0 %v1122
    %1182 = vmatpush1.msra.mxu0 %v1121
    %1183 = vmatprep.subr.mxu0 %v1126
    %1184 = vmatpush1.msra.mxu0 %v1125
    %1185 = vmatprep.subr.mxu0 %v1130
    %1186 = vmatpush1.msra.mxu0 %v1129
    %1187 = vmatprep.subr.mxu0 %v1134
    %1188 = vmatpush1.msra.mxu0 %v1133
    %1189 = vmatprep.subr.mxu0 %v1138
    %1190 = vmatpush1.msra.mxu0 %v1137
    %1191 = vmatprep.subr.mxu0 %v1142
    %1192 = vmatpush1.msra.mxu0 %v1141
    %1193 = vmatprep.subr.mxu0 %v1146
    %1194 = vmatpush1.msra.mxu0 %v1145
    %1195 = vmatprep.subr.mxu0 %v1150
    %1196 = vmatpush1.msra.mxu0 %v1149
    %1197 = vmatprep.subr.mxu0 %v1154
    %1198 = vmatpush1.msra.mxu0 %v1153
    %1199 = vmatprep.subr.mxu0 %v1158
    %1200 = vmatpush1.msra.mxu0 %v1157
    %1201 = vmatprep.subr.mxu0 %v1162
    %1202 = vmatpush1.msra.mxu0 %v1161
    %1203 = vmatprep.subr.mxu0 %v1166
    %1204 = vmatpush1.msra.mxu0 %v1165
    %1205 = vmatprep.subr.mxu0 %v1170
    %1206 = vmatpush1.msra.mxu0 %v1169
    %1207 = vmatprep.subr.mxu0 %v1174
    %1208 = vmatpush1.msra.mxu0 %v1173
    %1209 = vmatprep.subr.mxu0 0.0
    %1210 = vmatpush1.msra.mxu0 0.0
    %1211 = vmatprep.subr.mxu0 0.0
    %1212 = vmatpush1.msra.mxu0 0.0
    %1213 = vmatprep.subr.mxu0 0.0
    %1214 = vmatpush1.msra.mxu0 0.0
    %1215 = vmatprep.subr.mxu0 0.0
    %1216 = vmatpush1.msra.mxu0 0.0
    %1217 = vmatprep.subr.mxu0 0.0
    %1218 = vmatpush1.msra.mxu0 0.0
    %1219 = vmatprep.subr.mxu0 0.0
    %1220 = vmatpush1.msra.mxu0 0.0
    %1221 = vmatprep.subr.mxu0 0.0
    %1222 = vmatpush1.msra.mxu0 0.0
    %1223 = vmatprep.subr.mxu0 0.0
    %1224 = vmatpush1.msra.mxu0 0.0
    %1225 = vmatprep.subr.mxu0 0.0
    %1226 = vmatpush1.msra.mxu0 0.0
    %1227 = vmatprep.subr.mxu0 0.0
    %1228 = vmatpush1.msra.mxu0 0.0
    %1229 = vmatprep.subr.mxu0 0.0
    %1230 = vmatpush1.msra.mxu0 0.0
    %1231 = vmatprep.subr.mxu0 0.0
    %1232 = vmatpush1.msra.mxu0 0.0
    %1233 = vmatprep.subr.mxu0 0.0
    %1234 = vmatpush1.msra.mxu0 0.0
    %1235 = vmatprep.subr.mxu0 0.0
    %1236 = vmatpush1.msra.mxu0 0.0
    %1237 = vmatprep.subr.mxu0 0.0
    %1238 = vmatpush1.msra.mxu0 0.0
    %1239 = vmatprep.subr.mxu0 0.0
    %1240 = vmatpush1.msra.mxu0 0.0
    %1241 = vmatprep.mubr.f32.mxu0 0.0
    %1242 = vmatmul.mubr.f32.gmra.mrb[0].mxu0 %v1112
    %v1243 = vpop.f32.mrb[0].mxu0
    %v1244 = vadd.f32 0.0, %v1243
    %v1245 = vpop.f32.mrb[0].mxu0
    %v1246 = vadd.f32 0.0, %v1245
    %1247 = vdwg.mxu0
    %1248 = vmatprep.subr.mxu0 %v1116
    %1249 = vmatpush1.msra.mxu0 %v1115
    %1250 = vmatprep.subr.mxu0 %v1120
    %1251 = vmatpush1.msra.mxu0 %v1119
    %1252 = vmatprep.subr.mxu0 %v1124
    %1253 = vmatpush1.msra.mxu0 %v1123
    %1254 = vmatprep.subr.mxu0 %v1128
    %1255 = vmatpush1.msra.mxu0 %v1127
    %1256 = vmatprep.subr.mxu0 %v1132
    %1257 = vmatpush1.msra.mxu0 %v1131
    %1258 = vmatprep.subr.mxu0 %v1136
    %1259 = vmatpush1.msra.mxu0 %v1135
    %1260 = vmatprep.subr.mxu0 %v1140
    %1261 = vmatpush1.msra.mxu0 %v1139
    %1262 = vmatprep.subr.mxu0 %v1144
    %1263 = vmatpush1.msra.mxu0 %v1143
    %1264 = vmatprep.subr.mxu0 %v1148
    %1265 = vmatpush1.msra.mxu0 %v1147
    %1266 = vmatprep.subr.mxu0 %v1152
    %1267 = vmatpush1.msra.mxu0 %v1151
    %1268 = vmatprep.subr.mxu0 %v1156
    %1269 = vmatpush1.msra.mxu0 %v1155
    %1270 = vmatprep.subr.mxu0 %v1160
    %1271 = vmatpush1.msra.mxu0 %v1159
    %1272 = vmatprep.subr.mxu0 %v1164
    %1273 = vmatpush1.msra.mxu0 %v1163
    %1274 = vmatprep.subr.mxu0 %v1168
    %1275 = vmatpush1.msra.mxu0 %v1167
    %1276 = vmatprep.subr.mxu0 %v1172
    %1277 = vmatpush1.msra.mxu0 %v1171
    %1278 = vmatprep.subr.mxu0 %v1176
    %1279 = vmatpush1.msra.mxu0 %v1175
    %1280 = vmatprep.subr.mxu0 0.0
    %1281 = vmatpush1.msra.mxu0 0.0
    %1282 = vmatprep.subr.mxu0 0.0
    %1283 = vmatpush1.msra.mxu0 0.0
    %1284 = vmatprep.subr.mxu0 0.0
    %1285 = vmatpush1.msra.mxu0 0.0
    %1286 = vmatprep.subr.mxu0 0.0
    %1287 = vmatpush1.msra.mxu0 0.0
    %1288 = vmatprep.subr.mxu0 0.0
    %1289 = vmatpush1.msra.mxu0 0.0
    %1290 = vmatprep.subr.mxu0 0.0
    %1291 = vmatpush1.msra.mxu0 0.0
    %1292 = vmatprep.subr.mxu0 0.0
    %1293 = vmatpush1.msra.mxu0 0.0
    %1294 = vmatprep.subr.mxu0 0.0
    %1295 = vmatpush1.msra.mxu0 0.0
    %1296 = vmatprep.subr.mxu0 0.0
    %1297 = vmatpush1.msra.mxu0 0.0
    %1298 = vmatprep.subr.mxu0 0.0
    %1299 = vmatpush1.msra.mxu0 0.0
    %1300 = vmatprep.subr.mxu0 0.0
    %1301 = vmatpush1.msra.mxu0 0.0
    %1302 = vmatprep.subr.mxu0 0.0
    %1303 = vmatpush1.msra.mxu0 0.0
    %1304 = vmatprep.subr.mxu0 0.0
    %1305 = vmatpush1.msra.mxu0 0.0
    %1306 = vmatprep.subr.mxu0 0.0
    %1307 = vmatpush1.msra.mxu0 0.0
    %1308 = vmatprep.subr.mxu0 0.0
    %1309 = vmatpush1.msra.mxu0 0.0
    %1310 = vmatprep.subr.mxu0 0.0
    %1311 = vmatpush1.msra.mxu0 0.0
    %1312 = vmatprep.mubr.f32.mxu0 0.0
    %1313 = vmatmul.mubr.f32.gmra.mrb[0].mxu0 %v1112
    %v1314 = vpop.f32.mrb[0].mxu0
    %v1315 = vadd.f32 0.0, %v1314
    %v1316 = vpop.f32.mrb[0].mxu0
    %v1317 = vadd.f32 0.0, %v1316
    %1318 = vdwg.mxu0
    %v1319 = vadd.f32 %v1108, %v1244
    %v1320 = vadd.f32 %v1109, %v1246
    %v1321 = vadd.f32 %v1110, %v1315
    %v1322 = vadd.f32 %v1111, %v1317
    %v1323 = vxor.u32 %v1319, 2147483648
    %v1324 = vmul.f32 %v1323, 1.442695
    %v1325 = vpow.pop %v1324
    %v1326 = vadd.f32 %v1325, 1.0
    %v1327 = vrcp.pop %v1326
    %v1328 = vmul.f32 1.0, %v1327
    %v1329 = vxor.u32 %v1320, 2147483648
    %v1330 = vmul.f32 %v1329, 1.442695
    %v1331 = vpow.pop %v1330
    %v1332 = vadd.f32 %v1331, 1.0
    %v1333 = vrcp.pop %v1332
    %v1334 = vmul.f32 1.0, %v1333
    %v1335 = vxor.u32 %v1321, 2147483648
    %v1336 = vmul.f32 %v1335, 1.442695
    %v1337 = vpow.pop %v1336
    %v1338 = vadd.f32 %v1337, 1.0
    %v1339 = vrcp.pop %v1338
    %v1340 = vmul.f32 1.0, %v1339
    %v1341 = vtanh.pop %v1322
    %v1342 = vld [vmem:[#allocation4] sm:$0xff]
    %v1343 = vmul.f32 %v1334, %v1342
    %v1344 = vmul.f32 %v1328, %v1341
    %v1345 = vadd.f32 %v1343, %v1344
    %v1346 = vtanh.pop %v1345
    %v1347 = vmul.f32 %v1340, %v1346
    %1348 = vst [vmem:[#allocation4] sm:$0xff] %v1345
    %1349 = vst [vmem:[#allocation3] sm:$0xff] %v1347
    %s1350 = scalar_lea.vmem [#allocation8], 24
    %1351 = vst [vmem:[%s1350] sm:$0xff] %v1347
    %v1352 = vld [vmem:[#allocation2 + $0x80] sm:$0xff]
    %v1353 = vld [vmem:[#allocation2 + $0x88] sm:$0xff]
    %v1354 = vld [vmem:[#allocation2 + $0x90] sm:$0xff]
    %v1355 = vld [vmem:[#allocation2 + $0x98] sm:$0xff]
    %v1356 = vld [vmem:[#allocation3] sm:$0xff]
    %v1357 = vld [vmem:[#allocation5] sm:$0xff]
    %v1358 = vld [vmem:[#allocation5 + $0x8] sm:$0xff]
    %v1359 = vld [vmem:[#allocation5 + $0x10] sm:$0xff]
    %v1360 = vld [vmem:[#allocation5 + $0x18] sm:$0xff]
    %v1361 = vld [vmem:[#allocation5 + $0x20] sm:$0xff]
    %v1362 = vld [vmem:[#allocation5 + $0x28] sm:$0xff]
    %v1363 = vld [vmem:[#allocation5 + $0x30] sm:$0xff]
    %v1364 = vld [vmem:[#allocation5 + $0x38] sm:$0xff]
    %v1365 = vld [vmem:[#allocation5 + $0x40] sm:$0xff]
    %v1366 = vld [vmem:[#allocation5 + $0x48] sm:$0xff]
    %v1367 = vld [vmem:[#allocation5 + $0x50] sm:$0xff]
    %v1368 = vld [vmem:[#allocation5 + $0x58] sm:$0xff]
    %v1369 = vld [vmem:[#allocation5 + $0x60] sm:$0xff]
    %v1370 = vld [vmem:[#allocation5 + $0x68] sm:$0xff]
    %v1371 = vld [vmem:[#allocation5 + $0x70] sm:$0xff]
    %v1372 = vld [vmem:[#allocation5 + $0x78] sm:$0xff]
    %v1373 = vld [vmem:[#allocation5 + $0x80] sm:$0xff]
    %v1374 = vld [vmem:[#allocation5 + $0x88] sm:$0xff]
    %v1375 = vld [vmem:[#allocation5 + $0x90] sm:$0xff]
    %v1376 = vld [vmem:[#allocation5 + $0x98] sm:$0xff]
    %v1377 = vld [vmem:[#allocation5 + $0xa0] sm:$0xff]
    %v1378 = vld [vmem:[#allocation5 + $0xa8] sm:$0xff]
    %v1379 = vld [vmem:[#allocation5 + $0xb0] sm:$0xff]
    %v1380 = vld [vmem:[#allocation5 + $0xb8] sm:$0xff]
    %v1381 = vld [vmem:[#allocation5 + $0xc0] sm:$0xff]
    %v1382 = vld [vmem:[#allocation5 + $0xc8] sm:$0xff]
    %v1383 = vld [vmem:[#allocation5 + $0xd0] sm:$0xff]
    %v1384 = vld [vmem:[#allocation5 + $0xd8] sm:$0xff]
    %v1385 = vld [vmem:[#allocation5 + $0xe0] sm:$0xff]
    %v1386 = vld [vmem:[#allocation5 + $0xe8] sm:$0xff]
    %v1387 = vld [vmem:[#allocation5 + $0xf0] sm:$0xff]
    %v1388 = vld [vmem:[#allocation5 + $0xf8] sm:$0xff]
    %v1389 = vld [vmem:[#allocation5 + $0x100] sm:$0xff]
    %v1390 = vld [vmem:[#allocation5 + $0x108] sm:$0xff]
    %v1391 = vld [vmem:[#allocation5 + $0x110] sm:$0xff]
    %v1392 = vld [vmem:[#allocation5 + $0x118] sm:$0xff]
    %v1393 = vld [vmem:[#allocation5 + $0x120] sm:$0xff]
    %v1394 = vld [vmem:[#allocation5 + $0x128] sm:$0xff]
    %v1395 = vld [vmem:[#allocation5 + $0x130] sm:$0xff]
    %v1396 = vld [vmem:[#allocation5 + $0x138] sm:$0xff]
    %v1397 = vld [vmem:[#allocation5 + $0x140] sm:$0xff]
    %v1398 = vld [vmem:[#allocation5 + $0x148] sm:$0xff]
    %v1399 = vld [vmem:[#allocation5 + $0x150] sm:$0xff]
    %v1400 = vld [vmem:[#allocation5 + $0x158] sm:$0xff]
    %v1401 = vld [vmem:[#allocation5 + $0x160] sm:$0xff]
    %v1402 = vld [vmem:[#allocation5 + $0x168] sm:$0xff]
    %v1403 = vld [vmem:[#allocation5 + $0x170] sm:$0xff]
    %v1404 = vld [vmem:[#allocation5 + $0x178] sm:$0xff]
    %v1405 = vld [vmem:[#allocation5 + $0x180] sm:$0xff]
    %v1406 = vld [vmem:[#allocation5 + $0x188] sm:$0xff]
    %v1407 = vld [vmem:[#allocation5 + $0x190] sm:$0xff]
    %v1408 = vld [vmem:[#allocation5 + $0x198] sm:$0xff]
    %v1409 = vld [vmem:[#allocation5 + $0x1a0] sm:$0xff]
    %v1410 = vld [vmem:[#allocation5 + $0x1a8] sm:$0xff]
    %v1411 = vld [vmem:[#allocation5 + $0x1b0] sm:$0xff]
    %v1412 = vld [vmem:[#allocation5 + $0x1b8] sm:$0xff]
    %v1413 = vld [vmem:[#allocation5 + $0x1c0] sm:$0xff]
    %v1414 = vld [vmem:[#allocation5 + $0x1c8] sm:$0xff]
    %v1415 = vld [vmem:[#allocation5 + $0x1d0] sm:$0xff]
    %v1416 = vld [vmem:[#allocation5 + $0x1d8] sm:$0xff]
    %v1417 = vld [vmem:[#allocation5 + $0x1e0] sm:$0xff]
    %v1418 = vld [vmem:[#allocation5 + $0x1e8] sm:$0xff]
    %v1419 = vld [vmem:[#allocation5 + $0x1f0] sm:$0xff]
    %v1420 = vld [vmem:[#allocation5 + $0x1f8] sm:$0xff]
    %1421 = vmatprep.subr.mxu0 %v1358
    %1422 = vmatpush1.msra.mxu0 %v1357
    %1423 = vmatprep.subr.mxu0 %v1362
    %1424 = vmatpush1.msra.mxu0 %v1361
    %1425 = vmatprep.subr.mxu0 %v1366
    %1426 = vmatpush1.msra.mxu0 %v1365
    %1427 = vmatprep.subr.mxu0 %v1370
    %1428 = vmatpush1.msra.mxu0 %v1369
    %1429 = vmatprep.subr.mxu0 %v1374
    %1430 = vmatpush1.msra.mxu0 %v1373
    %1431 = vmatprep.subr.mxu0 %v1378
    %1432 = vmatpush1.msra.mxu0 %v1377
    %1433 = vmatprep.subr.mxu0 %v1382
    %1434 = vmatpush1.msra.mxu0 %v1381
    %1435 = vmatprep.subr.mxu0 %v1386
    %1436 = vmatpush1.msra.mxu0 %v1385
    %1437 = vmatprep.subr.mxu0 %v1390
    %1438 = vmatpush1.msra.mxu0 %v1389
    %1439 = vmatprep.subr.mxu0 %v1394
    %1440 = vmatpush1.msra.mxu0 %v1393
    %1441 = vmatprep.subr.mxu0 %v1398
    %1442 = vmatpush1.msra.mxu0 %v1397
    %1443 = vmatprep.subr.mxu0 %v1402
    %1444 = vmatpush1.msra.mxu0 %v1401
    %1445 = vmatprep.subr.mxu0 %v1406
    %1446 = vmatpush1.msra.mxu0 %v1405
    %1447 = vmatprep.subr.mxu0 %v1410
    %1448 = vmatpush1.msra.mxu0 %v1409
    %1449 = vmatprep.subr.mxu0 %v1414
    %1450 = vmatpush1.msra.mxu0 %v1413
    %1451 = vmatprep.subr.mxu0 %v1418
    %1452 = vmatpush1.msra.mxu0 %v1417
    %1453 = vmatprep.subr.mxu0 0.0
    %1454 = vmatpush1.msra.mxu0 0.0
    %1455 = vmatprep.subr.mxu0 0.0
    %1456 = vmatpush1.msra.mxu0 0.0
    %1457 = vmatprep.subr.mxu0 0.0
    %1458 = vmatpush1.msra.mxu0 0.0
    %1459 = vmatprep.subr.mxu0 0.0
    %1460 = vmatpush1.msra.mxu0 0.0
    %1461 = vmatprep.subr.mxu0 0.0
    %1462 = vmatpush1.msra.mxu0 0.0
    %1463 = vmatprep.subr.mxu0 0.0
    %1464 = vmatpush1.msra.mxu0 0.0
    %1465 = vmatprep.subr.mxu0 0.0
    %1466 = vmatpush1.msra.mxu0 0.0
    %1467 = vmatprep.subr.mxu0 0.0
    %1468 = vmatpush1.msra.mxu0 0.0
    %1469 = vmatprep.subr.mxu0 0.0
    %1470 = vmatpush1.msra.mxu0 0.0
    %1471 = vmatprep.subr.mxu0 0.0
    %1472 = vmatpush1.msra.mxu0 0.0
    %1473 = vmatprep.subr.mxu0 0.0
    %1474 = vmatpush1.msra.mxu0 0.0
    %1475 = vmatprep.subr.mxu0 0.0
    %1476 = vmatpush1.msra.mxu0 0.0
    %1477 = vmatprep.subr.mxu0 0.0
    %1478 = vmatpush1.msra.mxu0 0.0
    %1479 = vmatprep.subr.mxu0 0.0
    %1480 = vmatpush1.msra.mxu0 0.0
    %1481 = vmatprep.subr.mxu0 0.0
    %1482 = vmatpush1.msra.mxu0 0.0
    %1483 = vmatprep.subr.mxu0 0.0
    %1484 = vmatpush1.msra.mxu0 0.0
    %1485 = vmatprep.mubr.f32.mxu0 0.0
    %1486 = vmatmul.mubr.f32.gmra.mrb[0].mxu0 %v1356
    %v1487 = vpop.f32.mrb[0].mxu0
    %v1488 = vadd.f32 0.0, %v1487
    %v1489 = vpop.f32.mrb[0].mxu0
    %v1490 = vadd.f32 0.0, %v1489
    %1491 = vdwg.mxu0
    %1492 = vmatprep.subr.mxu0 %v1360
    %1493 = vmatpush1.msra.mxu0 %v1359
    %1494 = vmatprep.subr.mxu0 %v1364
    %1495 = vmatpush1.msra.mxu0 %v1363
    %1496 = vmatprep.subr.mxu0 %v1368
    %1497 = vmatpush1.msra.mxu0 %v1367
    %1498 = vmatprep.subr.mxu0 %v1372
    %1499 = vmatpush1.msra.mxu0 %v1371
    %1500 = vmatprep.subr.mxu0 %v1376
    %1501 = vmatpush1.msra.mxu0 %v1375
    %1502 = vmatprep.subr.mxu0 %v1380
    %1503 = vmatpush1.msra.mxu0 %v1379
    %1504 = vmatprep.subr.mxu0 %v1384
    %1505 = vmatpush1.msra.mxu0 %v1383
    %1506 = vmatprep.subr.mxu0 %v1388
    %1507 = vmatpush1.msra.mxu0 %v1387
    %1508 = vmatprep.subr.mxu0 %v1392
    %1509 = vmatpush1.msra.mxu0 %v1391
    %1510 = vmatprep.subr.mxu0 %v1396
    %1511 = vmatpush1.msra.mxu0 %v1395
    %1512 = vmatprep.subr.mxu0 %v1400
    %1513 = vmatpush1.msra.mxu0 %v1399
    %1514 = vmatprep.subr.mxu0 %v1404
    %1515 = vmatpush1.msra.mxu0 %v1403
    %1516 = vmatprep.subr.mxu0 %v1408
    %1517 = vmatpush1.msra.mxu0 %v1407
    %1518 = vmatprep.subr.mxu0 %v1412
    %1519 = vmatpush1.msra.mxu0 %v1411
    %1520 = vmatprep.subr.mxu0 %v1416
    %1521 = vmatpush1.msra.mxu0 %v1415
    %1522 = vmatprep.subr.mxu0 %v1420
    %1523 = vmatpush1.msra.mxu0 %v1419
    %1524 = vmatprep.subr.mxu0 0.0
    %1525 = vmatpush1.msra.mxu0 0.0
    %1526 = vmatprep.subr.mxu0 0.0
    %1527 = vmatpush1.msra.mxu0 0.0
    %1528 = vmatprep.subr.mxu0 0.0
    %1529 = vmatpush1.msra.mxu0 0.0
    %1530 = vmatprep.subr.mxu0 0.0
    %1531 = vmatpush1.msra.mxu0 0.0
    %1532 = vmatprep.subr.mxu0 0.0
    %1533 = vmatpush1.msra.mxu0 0.0
    %1534 = vmatprep.subr.mxu0 0.0
    %1535 = vmatpush1.msra.mxu0 0.0
    %1536 = vmatprep.subr.mxu0 0.0
    %1537 = vmatpush1.msra.mxu0 0.0
    %1538 = vmatprep.subr.mxu0 0.0
    %1539 = vmatpush1.msra.mxu0 0.0
    %1540 = vmatprep.subr.mxu0 0.0
    %1541 = vmatpush1.msra.mxu0 0.0
    %1542 = vmatprep.subr.mxu0 0.0
    %1543 = vmatpush1.msra.mxu0 0.0
    %1544 = vmatprep.subr.mxu0 0.0
    %1545 = vmatpush1.msra.mxu0 0.0
    %1546 = vmatprep.subr.mxu0 0.0
    %1547 = vmatpush1.msra.mxu0 0.0
    %1548 = vmatprep.subr.mxu0 0.0
    %1549 = vmatpush1.msra.mxu0 0.0
    %1550 = vmatprep.subr.mxu0 0.0
    %1551 = vmatpush1.msra.mxu0 0.0
    %1552 = vmatprep.subr.mxu0 0.0
    %1553 = vmatpush1.msra.mxu0 0.0
    %1554 = vmatprep.subr.mxu0 0.0
    %1555 = vmatpush1.msra.mxu0 0.0
    %1556 = vmatprep.mubr.f32.mxu0 0.0
    %1557 = vmatmul.mubr.f32.gmra.mrb[0].mxu0 %v1356
    %v1558 = vpop.f32.mrb[0].mxu0
    %v1559 = vadd.f32 0.0, %v1558
    %v1560 = vpop.f32.mrb[0].mxu0
    %v1561 = vadd.f32 0.0, %v1560
    %1562 = vdwg.mxu0
    %v1563 = vadd.f32 %v1352, %v1488
    %v1564 = vadd.f32 %v1353, %v1490
    %v1565 = vadd.f32 %v1354, %v1559
    %v1566 = vadd.f32 %v1355, %v1561
    %v1567 = vxor.u32 %v1563, 2147483648
    %v1568 = vmul.f32 %v1567, 1.442695
    %v1569 = vpow.pop %v1568
    %v1570 = vadd.f32 %v1569, 1.0
    %v1571 = vrcp.pop %v1570
    %v1572 = vmul.f32 1.0, %v1571
    %v1573 = vxor.u32 %v1564, 2147483648
    %v1574 = vmul.f32 %v1573, 1.442695
    %v1575 = vpow.pop %v1574
    %v1576 = vadd.f32 %v1575, 1.0
    %v1577 = vrcp.pop %v1576
    %v1578 = vmul.f32 1.0, %v1577
    %v1579 = vxor.u32 %v1565, 2147483648
    %v1580 = vmul.f32 %v1579, 1.442695
    %v1581 = vpow.pop %v1580
    %v1582 = vadd.f32 %v1581, 1.0
    %v1583 = vrcp.pop %v1582
    %v1584 = vmul.f32 1.0, %v1583
    %v1585 = vtanh.pop %v1566
    %v1586 = vld [vmem:[#allocation4] sm:$0xff]
    %v1587 = vmul.f32 %v1578, %v1586
    %v1588 = vmul.f32 %v1572, %v1585
    %v1589 = vadd.f32 %v1587, %v1588
    %v1590 = vtanh.pop %v1589
    %v1591 = vmul.f32 %v1584, %v1590
    %1592 = vst [vmem:[#allocation4] sm:$0xff] %v1589
    %1593 = vst [vmem:[#allocation3] sm:$0xff] %v1591
    %s1594 = scalar_lea.vmem [#allocation8], 32
    %1595 = vst [vmem:[%s1594] sm:$0xff] %v1591
    %v1596 = vld [vmem:[#allocation2 + $0xa0] sm:$0xff]
    %v1597 = vld [vmem:[#allocation2 + $0xa8] sm:$0xff]
    %v1598 = vld [vmem:[#allocation2 + $0xb0] sm:$0xff]
    %v1599 = vld [vmem:[#allocation2 + $0xb8] sm:$0xff]
    %v1600 = vld [vmem:[#allocation3] sm:$0xff]
    %v1601 = vld [vmem:[#allocation5] sm:$0xff]
    %v1602 = vld [vmem:[#allocation5 + $0x8] sm:$0xff]
    %v1603 = vld [vmem:[#allocation5 + $0x10] sm:$0xff]
    %v1604 = vld [vmem:[#allocation5 + $0x18] sm:$0xff]
    %v1605 = vld [vmem:[#allocation5 + $0x20] sm:$0xff]
    %v1606 = vld [vmem:[#allocation5 + $0x28] sm:$0xff]
    %v1607 = vld [vmem:[#allocation5 + $0x30] sm:$0xff]
    %v1608 = vld [vmem:[#allocation5 + $0x38] sm:$0xff]
    %v1609 = vld [vmem:[#allocation5 + $0x40] sm:$0xff]
    %v1610 = vld [vmem:[#allocation5 + $0x48] sm:$0xff]
    %v1611 = vld [vmem:[#allocation5 + $0x50] sm:$0xff]
    %v1612 = vld [vmem:[#allocation5 + $0x58] sm:$0xff]
    %v1613 = vld [vmem:[#allocation5 + $0x60] sm:$0xff]
    %v1614 = vld [vmem:[#allocation5 + $0x68] sm:$0xff]
    %v1615 = vld [vmem:[#allocation5 + $0x70] sm:$0xff]
    %v1616 = vld [vmem:[#allocation5 + $0x78] sm:$0xff]
    %v1617 = vld [vmem:[#allocation5 + $0x80] sm:$0xff]
    %v1618 = vld [vmem:[#allocation5 + $0x88] sm:$0xff]
    %v1619 = vld [vmem:[#allocation5 + $0x90] sm:$0xff]
    %v1620 = vld [vmem:[#allocation5 + $0x98] sm:$0xff]
    %v1621 = vld [vmem:[#allocation5 + $0xa0] sm:$0xff]
    %v1622 = vld [vmem:[#allocation5 + $0xa8] sm:$0xff]
    %v1623 = vld [vmem:[#allocation5 + $0xb0] sm:$0xff]
    %v1624 = vld [vmem:[#allocation5 + $0xb8] sm:$0xff]
    %v1625 = vld [vmem:[#allocation5 + $0xc0] sm:$0xff]
    %v1626 = vld [vmem:[#allocation5 + $0xc8] sm:$0xff]
    %v1627 = vld [vmem:[#allocation5 + $0xd0] sm:$0xff]
    %v1628 = vld [vmem:[#allocation5 + $0xd8] sm:$0xff]
    %v1629 = vld [vmem:[#allocation5 + $0xe0] sm:$0xff]
    %v1630 = vld [vmem:[#allocation5 + $0xe8] sm:$0xff]
    %v1631 = vld [vmem:[#allocation5 + $0xf0] sm:$0xff]
    %v1632 = vld [vmem:[#allocation5 + $0xf8] sm:$0xff]
    %v1633 = vld [vmem:[#allocation5 + $0x100] sm:$0xff]
    %v1634 = vld [vmem:[#allocation5 + $0x108] sm:$0xff]
    %v1635 = vld [vmem:[#allocation5 + $0x110] sm:$0xff]
    %v1636 = vld [vmem:[#allocation5 + $0x118] sm:$0xff]
    %v1637 = vld [vmem:[#allocation5 + $0x120] sm:$0xff]
    %v1638 = vld [vmem:[#allocation5 + $0x128] sm:$0xff]
    %v1639 = vld [vmem:[#allocation5 + $0x130] sm:$0xff]
    %v1640 = vld [vmem:[#allocation5 + $0x138] sm:$0xff]
    %v1641 = vld [vmem:[#allocation5 + $0x140] sm:$0xff]
    %v1642 = vld [vmem:[#allocation5 + $0x148] sm:$0xff]
    %v1643 = vld [vmem:[#allocation5 + $0x150] sm:$0xff]
    %v1644 = vld [vmem:[#allocation5 + $0x158] sm:$0xff]
    %v1645 = vld [vmem:[#allocation5 + $0x160] sm:$0xff]
    %v1646 = vld [vmem:[#allocation5 + $0x168] sm:$0xff]
    %v1647 = vld [vmem:[#allocation5 + $0x170] sm:$0xff]
    %v1648 = vld [vmem:[#allocation5 + $0x178] sm:$0xff]
    %v1649 = vld [vmem:[#allocation5 + $0x180] sm:$0xff]
    %v1650 = vld [vmem:[#allocation5 + $0x188] sm:$0xff]
    %v1651 = vld [vmem:[#allocation5 + $0x190] sm:$0xff]
    %v1652 = vld [vmem:[#allocation5 + $0x198] sm:$0xff]
    %v1653 = vld [vmem:[#allocation5 + $0x1a0] sm:$0xff]
    %v1654 = vld [vmem:[#allocation5 + $0x1a8] sm:$0xff]
    %v1655 = vld [vmem:[#allocation5 + $0x1b0] sm:$0xff]
    %v1656 = vld [vmem:[#allocation5 + $0x1b8] sm:$0xff]
    %v1657 = vld [vmem:[#allocation5 + $0x1c0] sm:$0xff]
    %v1658 = vld [vmem:[#allocation5 + $0x1c8] sm:$0xff]
    %v1659 = vld [vmem:[#allocation5 + $0x1d0] sm:$0xff]
    %v1660 = vld [vmem:[#allocation5 + $0x1d8] sm:$0xff]
    %v1661 = vld [vmem:[#allocation5 + $0x1e0] sm:$0xff]
    %v1662 = vld [vmem:[#allocation5 + $0x1e8] sm:$0xff]
    %v1663 = vld [vmem:[#allocation5 + $0x1f0] sm:$0xff]
    %v1664 = vld [vmem:[#allocation5 + $0x1f8] sm:$0xff]
    %1665 = vmatprep.subr.mxu0 %v1602
    %1666 = vmatpush1.msra.mxu0 %v1601
    %1667 = vmatprep.subr.mxu0 %v1606
    %1668 = vmatpush1.msra.mxu0 %v1605
    %1669 = vmatprep.subr.mxu0 %v1610
    %1670 = vmatpush1.msra.mxu0 %v1609
    %1671 = vmatprep.subr.mxu0 %v1614
    %1672 = vmatpush1.msra.mxu0 %v1613
    %1673 = vmatprep.subr.mxu0 %v1618
    %1674 = vmatpush1.msra.mxu0 %v1617
    %1675 = vmatprep.subr.mxu0 %v1622
    %1676 = vmatpush1.msra.mxu0 %v1621
    %1677 = vmatprep.subr.mxu0 %v1626
    %1678 = vmatpush1.msra.mxu0 %v1625
    %1679 = vmatprep.subr.mxu0 %v1630
    %1680 = vmatpush1.msra.mxu0 %v1629
    %1681 = vmatprep.subr.mxu0 %v1634
    %1682 = vmatpush1.msra.mxu0 %v1633
    %1683 = vmatprep.subr.mxu0 %v1638
    %1684 = vmatpush1.msra.mxu0 %v1637
    %1685 = vmatprep.subr.mxu0 %v1642
    %1686 = vmatpush1.msra.mxu0 %v1641
    %1687 = vmatprep.subr.mxu0 %v1646
    %1688 = vmatpush1.msra.mxu0 %v1645
    %1689 = vmatprep.subr.mxu0 %v1650
    %1690 = vmatpush1.msra.mxu0 %v1649
    %1691 = vmatprep.subr.mxu0 %v1654
    %1692 = vmatpush1.msra.mxu0 %v1653
    %1693 = vmatprep.subr.mxu0 %v1658
    %1694 = vmatpush1.msra.mxu0 %v1657
    %1695 = vmatprep.subr.mxu0 %v1662
    %1696 = vmatpush1.msra.mxu0 %v1661
    %1697 = vmatprep.subr.mxu0 0.0
    %1698 = vmatpush1.msra.mxu0 0.0
    %1699 = vmatprep.subr.mxu0 0.0
    %1700 = vmatpush1.msra.mxu0 0.0
    %1701 = vmatprep.subr.mxu0 0.0
    %1702 = vmatpush1.msra.mxu0 0.0
    %1703 = vmatprep.subr.mxu0 0.0
    %1704 = vmatpush1.msra.mxu0 0.0
    %1705 = vmatprep.subr.mxu0 0.0
    %1706 = vmatpush1.msra.mxu0 0.0
    %1707 = vmatprep.subr.mxu0 0.0
    %1708 = vmatpush1.msra.mxu0 0.0
    %1709 = vmatprep.subr.mxu0 0.0
    %1710 = vmatpush1.msra.mxu0 0.0
    %1711 = vmatprep.subr.mxu0 0.0
    %1712 = vmatpush1.msra.mxu0 0.0
    %1713 = vmatprep.subr.mxu0 0.0
    %1714 = vmatpush1.msra.mxu0 0.0
    %1715 = vmatprep.subr.mxu0 0.0
    %1716 = vmatpush1.msra.mxu0 0.0
    %1717 = vmatprep.subr.mxu0 0.0
    %1718 = vmatpush1.msra.mxu0 0.0
    %1719 = vmatprep.subr.mxu0 0.0
    %1720 = vmatpush1.msra.mxu0 0.0
    %1721 = vmatprep.subr.mxu0 0.0
    %1722 = vmatpush1.msra.mxu0 0.0
    %1723 = vmatprep.subr.mxu0 0.0
    %1724 = vmatpush1.msra.mxu0 0.0
    %1725 = vmatprep.subr.mxu0 0.0
    %1726 = vmatpush1.msra.mxu0 0.0
    %1727 = vmatprep.subr.mxu0 0.0
    %1728 = vmatpush1.msra.mxu0 0.0
    %1729 = vmatprep.mubr.f32.mxu0 0.0
    %1730 = vmatmul.mubr.f32.gmra.mrb[0].mxu0 %v1600
    %v1731 = vpop.f32.mrb[0].mxu0
    %v1732 = vadd.f32 0.0, %v1731
    %v1733 = vpop.f32.mrb[0].mxu0
    %v1734 = vadd.f32 0.0, %v1733
    %1735 = vdwg.mxu0
    %1736 = vmatprep.subr.mxu0 %v1604
    %1737 = vmatpush1.msra.mxu0 %v1603
    %1738 = vmatprep.subr.mxu0 %v1608
    %1739 = vmatpush1.msra.mxu0 %v1607
    %1740 = vmatprep.subr.mxu0 %v1612
    %1741 = vmatpush1.msra.mxu0 %v1611
    %1742 = vmatprep.subr.mxu0 %v1616
    %1743 = vmatpush1.msra.mxu0 %v1615
    %1744 = vmatprep.subr.mxu0 %v1620
    %1745 = vmatpush1.msra.mxu0 %v1619
    %1746 = vmatprep.subr.mxu0 %v1624
    %1747 = vmatpush1.msra.mxu0 %v1623
    %1748 = vmatprep.subr.mxu0 %v1628
    %1749 = vmatpush1.msra.mxu0 %v1627
    %1750 = vmatprep.subr.mxu0 %v1632
    %1751 = vmatpush1.msra.mxu0 %v1631
    %1752 = vmatprep.subr.mxu0 %v1636
    %1753 = vmatpush1.msra.mxu0 %v1635
    %1754 = vmatprep.subr.mxu0 %v1640
    %1755 = vmatpush1.msra.mxu0 %v1639
    %1756 = vmatprep.subr.mxu0 %v1644
    %1757 = vmatpush1.msra.mxu0 %v1643
    %1758 = vmatprep.subr.mxu0 %v1648
    %1759 = vmatpush1.msra.mxu0 %v1647
    %1760 = vmatprep.subr.mxu0 %v1652
    %1761 = vmatpush1.msra.mxu0 %v1651
    %1762 = vmatprep.subr.mxu0 %v1656
    %1763 = vmatpush1.msra.mxu0 %v1655
    %1764 = vmatprep.subr.mxu0 %v1660
    %1765 = vmatpush1.msra.mxu0 %v1659
    %1766 = vmatprep.subr.mxu0 %v1664
    %1767 = vmatpush1.msra.mxu0 %v1663
    %1768 = vmatprep.subr.mxu0 0.0
    %1769 = vmatpush1.msra.mxu0 0.0
    %1770 = vmatprep.subr.mxu0 0.0
    %1771 = vmatpush1.msra.mxu0 0.0
    %1772 = vmatprep.subr.mxu0 0.0
    %1773 = vmatpush1.msra.mxu0 0.0
    %1774 = vmatprep.subr.mxu0 0.0
    %1775 = vmatpush1.msra.mxu0 0.0
    %1776 = vmatprep.subr.mxu0 0.0
    %1777 = vmatpush1.msra.mxu0 0.0
    %1778 = vmatprep.subr.mxu0 0.0
    %1779 = vmatpush1.msra.mxu0 0.0
    %1780 = vmatprep.subr.mxu0 0.0
    %1781 = vmatpush1.msra.mxu0 0.0
    %1782 = vmatprep.subr.mxu0 0.0
    %1783 = vmatpush1.msra.mxu0 0.0
    %1784 = vmatprep.subr.mxu0 0.0
    %1785 = vmatpush1.msra.mxu0 0.0
    %1786 = vmatprep.subr.mxu0 0.0
    %1787 = vmatpush1.msra.mxu0 0.0
    %1788 = vmatprep.subr.mxu0 0.0
    %1789 = vmatpush1.msra.mxu0 0.0
    %1790 = vmatprep.subr.mxu0 0.0
    %1791 = vmatpush1.msra.mxu0 0.0
    %1792 = vmatprep.subr.mxu0 0.0
    %1793 = vmatpush1.msra.mxu0 0.0
    %1794 = vmatprep.subr.mxu0 0.0
    %1795 = vmatpush1.msra.mxu0 0.0
    %1796 = vmatprep.subr.mxu0 0.0
    %1797 = vmatpush1.msra.mxu0 0.0
    %1798 = vmatprep.subr.mxu0 0.0
    %1799 = vmatpush1.msra.mxu0 0.0
    %1800 = vmatprep.mubr.f32.mxu0 0.0
    %1801 = vmatmul.mubr.f32.gmra.mrb[0].mxu0 %v1600
    %v1802 = vpop.f32.mrb[0].mxu0
    %v1803 = vadd.f32 0.0, %v1802
    %v1804 = vpop.f32.mrb[0].mxu0
    %v1805 = vadd.f32 0.0, %v1804
    %1806 = vdwg.mxu0
    %v1807 = vadd.f32 %v1596, %v1732
    %v1808 = vadd.f32 %v1597, %v1734
    %v1809 = vadd.f32 %v1598, %v1803
    %v1810 = vadd.f32 %v1599, %v1805
    %v1811 = vxor.u32 %v1807, 2147483648
    %v1812 = vmul.f32 %v1811, 1.442695
    %v1813 = vpow.pop %v1812
    %v1814 = vadd.f32 %v1813, 1.0
    %v1815 = vrcp.pop %v1814
    %v1816 = vmul.f32 1.0, %v1815
    %v1817 = vxor.u32 %v1808, 2147483648
    %v1818 = vmul.f32 %v1817, 1.442695
    %v1819 = vpow.pop %v1818
    %v1820 = vadd.f32 %v1819, 1.0
    %v1821 = vrcp.pop %v1820
    %v1822 = vmul.f32 1.0, %v1821
    %v1823 = vxor.u32 %v1809, 2147483648
    %v1824 = vmul.f32 %v1823, 1.442695
    %v1825 = vpow.pop %v1824
    %v1826 = vadd.f32 %v1825, 1.0
    %v1827 = vrcp.pop %v1826
    %v1828 = vmul.f32 1.0, %v1827
    %v1829 = vtanh.pop %v1810
    %v1830 = vld [vmem:[#allocation4] sm:$0xff]
    %v1831 = vmul.f32 %v1822, %v1830
    %v1832 = vmul.f32 %v1816, %v1829
    %v1833 = vadd.f32 %v1831, %v1832
    %v1834 = vtanh.pop %v1833
    %v1835 = vmul.f32 %v1828, %v1834
    %1836 = vst [vmem:[#allocation4] sm:$0xff] %v1833
    %1837 = vst [vmem:[#allocation3] sm:$0xff] %v1835
    %s1838 = scalar_lea.vmem [#allocation8], 40
    %1839 = vst [vmem:[%s1838] sm:$0xff] %v1835
    %v1840 = vld [vmem:[#allocation2 + $0xc0] sm:$0xff]
    %v1841 = vld [vmem:[#allocation2 + $0xc8] sm:$0xff]
    %v1842 = vld [vmem:[#allocation2 + $0xd0] sm:$0xff]
    %v1843 = vld [vmem:[#allocation2 + $0xd8] sm:$0xff]
    %v1844 = vld [vmem:[#allocation3] sm:$0xff]
    %v1845 = vld [vmem:[#allocation5] sm:$0xff]
    %v1846 = vld [vmem:[#allocation5 + $0x8] sm:$0xff]
    %v1847 = vld [vmem:[#allocation5 + $0x10] sm:$0xff]
    %v1848 = vld [vmem:[#allocation5 + $0x18] sm:$0xff]
    %v1849 = vld [vmem:[#allocation5 + $0x20] sm:$0xff]
    %v1850 = vld [vmem:[#allocation5 + $0x28] sm:$0xff]
    %v1851 = vld [vmem:[#allocation5 + $0x30] sm:$0xff]
    %v1852 = vld [vmem:[#allocation5 + $0x38] sm:$0xff]
    %v1853 = vld [vmem:[#allocation5 + $0x40] sm:$0xff]
    %v1854 = vld [vmem:[#allocation5 + $0x48] sm:$0xff]
    %v1855 = vld [vmem:[#allocation5 + $0x50] sm:$0xff]
    %v1856 = vld [vmem:[#allocation5 + $0x58] sm:$0xff]
    %v1857 = vld [vmem:[#allocation5 + $0x60] sm:$0xff]
    %v1858 = vld [vmem:[#allocation5 + $0x68] sm:$0xff]
    %v1859 = vld [vmem:[#allocation5 + $0x70] sm:$0xff]
    %v1860 = vld [vmem:[#allocation5 + $0x78] sm:$0xff]
    %v1861 = vld [vmem:[#allocation5 + $0x80] sm:$0xff]
    %v1862 = vld [vmem:[#allocation5 + $0x88] sm:$0xff]
    %v1863 = vld [vmem:[#allocation5 + $0x90] sm:$0xff]
    %v1864 = vld [vmem:[#allocation5 + $0x98] sm:$0xff]
    %v1865 = vld [vmem:[#allocation5 + $0xa0] sm:$0xff]
    %v1866 = vld [vmem:[#allocation5 + $0xa8] sm:$0xff]
    %v1867 = vld [vmem:[#allocation5 + $0xb0] sm:$0xff]
    %v1868 = vld [vmem:[#allocation5 + $0xb8] sm:$0xff]
    %v1869 = vld [vmem:[#allocation5 + $0xc0] sm:$0xff]
    %v1870 = vld [vmem:[#allocation5 + $0xc8] sm:$0xff]
    %v1871 = vld [vmem:[#allocation5 + $0xd0] sm:$0xff]
    %v1872 = vld [vmem:[#allocation5 + $0xd8] sm:$0xff]
    %v1873 = vld [vmem:[#allocation5 + $0xe0] sm:$0xff]
    %v1874 = vld [vmem:[#allocation5 + $0xe8] sm:$0xff]
    %v1875 = vld [vmem:[#allocation5 + $0xf0] sm:$0xff]
    %v1876 = vld [vmem:[#allocation5 + $0xf8] sm:$0xff]
    %v1877 = vld [vmem:[#allocation5 + $0x100] sm:$0xff]
    %v1878 = vld [vmem:[#allocation5 + $0x108] sm:$0xff]
    %v1879 = vld [vmem:[#allocation5 + $0x110] sm:$0xff]
    %v1880 = vld [vmem:[#allocation5 + $0x118] sm:$0xff]
    %v1881 = vld [vmem:[#allocation5 + $0x120] sm:$0xff]
    %v1882 = vld [vmem:[#allocation5 + $0x128] sm:$0xff]
    %v1883 = vld [vmem:[#allocation5 + $0x130] sm:$0xff]
    %v1884 = vld [vmem:[#allocation5 + $0x138] sm:$0xff]
    %v1885 = vld [vmem:[#allocation5 + $0x140] sm:$0xff]
    %v1886 = vld [vmem:[#allocation5 + $0x148] sm:$0xff]
    %v1887 = vld [vmem:[#allocation5 + $0x150] sm:$0xff]
    %v1888 = vld [vmem:[#allocation5 + $0x158] sm:$0xff]
    %v1889 = vld [vmem:[#allocation5 + $0x160] sm:$0xff]
    %v1890 = vld [vmem:[#allocation5 + $0x168] sm:$0xff]
    %v1891 = vld [vmem:[#allocation5 + $0x170] sm:$0xff]
    %v1892 = vld [vmem:[#allocation5 + $0x178] sm:$0xff]
    %v1893 = vld [vmem:[#allocation5 + $0x180] sm:$0xff]
    %v1894 = vld [vmem:[#allocation5 + $0x188] sm:$0xff]
    %v1895 = vld [vmem:[#allocation5 + $0x190] sm:$0xff]
    %v1896 = vld [vmem:[#allocation5 + $0x198] sm:$0xff]
    %v1897 = vld [vmem:[#allocation5 + $0x1a0] sm:$0xff]
    %v1898 = vld [vmem:[#allocation5 + $0x1a8] sm:$0xff]
    %v1899 = vld [vmem:[#allocation5 + $0x1b0] sm:$0xff]
    %v1900 = vld [vmem:[#allocation5 + $0x1b8] sm:$0xff]
    %v1901 = vld [vmem:[#allocation5 + $0x1c0] sm:$0xff]
    %v1902 = vld [vmem:[#allocation5 + $0x1c8] sm:$0xff]
    %v1903 = vld [vmem:[#allocation5 + $0x1d0] sm:$0xff]
    %v1904 = vld [vmem:[#allocation5 + $0x1d8] sm:$0xff]
    %v1905 = vld [vmem:[#allocation5 + $0x1e0] sm:$0xff]
    %v1906 = vld [vmem:[#allocation5 + $0x1e8] sm:$0xff]
    %v1907 = vld [vmem:[#allocation5 + $0x1f0] sm:$0xff]
    %v1908 = vld [vmem:[#allocation5 + $0x1f8] sm:$0xff]
    %1909 = vmatprep.subr.mxu0 %v1846
    %1910 = vmatpush1.msra.mxu0 %v1845
    %1911 = vmatprep.subr.mxu0 %v1850
    %1912 = vmatpush1.msra.mxu0 %v1849
    %1913 = vmatprep.subr.mxu0 %v1854
    %1914 = vmatpush1.msra.mxu0 %v1853
    %1915 = vmatprep.subr.mxu0 %v1858
    %1916 = vmatpush1.msra.mxu0 %v1857
    %1917 = vmatprep.subr.mxu0 %v1862
    %1918 = vmatpush1.msra.mxu0 %v1861
    %1919 = vmatprep.subr.mxu0 %v1866
    %1920 = vmatpush1.msra.mxu0 %v1865
    %1921 = vmatprep.subr.mxu0 %v1870
    %1922 = vmatpush1.msra.mxu0 %v1869
    %1923 = vmatprep.subr.mxu0 %v1874
    %1924 = vmatpush1.msra.mxu0 %v1873
    %1925 = vmatprep.subr.mxu0 %v1878
    %1926 = vmatpush1.msra.mxu0 %v1877
    %1927 = vmatprep.subr.mxu0 %v1882
    %1928 = vmatpush1.msra.mxu0 %v1881
    %1929 = vmatprep.subr.mxu0 %v1886
    %1930 = vmatpush1.msra.mxu0 %v1885
    %1931 = vmatprep.subr.mxu0 %v1890
    %1932 = vmatpush1.msra.mxu0 %v1889
    %1933 = vmatprep.subr.mxu0 %v1894
    %1934 = vmatpush1.msra.mxu0 %v1893
    %1935 = vmatprep.subr.mxu0 %v1898
    %1936 = vmatpush1.msra.mxu0 %v1897
    %1937 = vmatprep.subr.mxu0 %v1902
    %1938 = vmatpush1.msra.mxu0 %v1901
    %1939 = vmatprep.subr.mxu0 %v1906
    %1940 = vmatpush1.msra.mxu0 %v1905
    %1941 = vmatprep.subr.mxu0 0.0
    %1942 = vmatpush1.msra.mxu0 0.0
    %1943 = vmatprep.subr.mxu0 0.0
    %1944 = vmatpush1.msra.mxu0 0.0
    %1945 = vmatprep.subr.mxu0 0.0
    %1946 = vmatpush1.msra.mxu0 0.0
    %1947 = vmatprep.subr.mxu0 0.0
    %1948 = vmatpush1.msra.mxu0 0.0
    %1949 = vmatprep.subr.mxu0 0.0
    %1950 = vmatpush1.msra.mxu0 0.0
    %1951 = vmatprep.subr.mxu0 0.0
    %1952 = vmatpush1.msra.mxu0 0.0
    %1953 = vmatprep.subr.mxu0 0.0
    %1954 = vmatpush1.msra.mxu0 0.0
    %1955 = vmatprep.subr.mxu0 0.0
    %1956 = vmatpush1.msra.mxu0 0.0
    %1957 = vmatprep.subr.mxu0 0.0
    %1958 = vmatpush1.msra.mxu0 0.0
    %1959 = vmatprep.subr.mxu0 0.0
    %1960 = vmatpush1.msra.mxu0 0.0
    %1961 = vmatprep.subr.mxu0 0.0
    %1962 = vmatpush1.msra.mxu0 0.0
    %1963 = vmatprep.subr.mxu0 0.0
    %1964 = vmatpush1.msra.mxu0 0.0
    %1965 = vmatprep.subr.mxu0 0.0
    %1966 = vmatpush1.msra.mxu0 0.0
    %1967 = vmatprep.subr.mxu0 0.0
    %1968 = vmatpush1.msra.mxu0 0.0
    %1969 = vmatprep.subr.mxu0 0.0
    %1970 = vmatpush1.msra.mxu0 0.0
    %1971 = vmatprep.subr.mxu0 0.0
    %1972 = vmatpush1.msra.mxu0 0.0
    %1973 = vmatprep.mubr.f32.mxu0 0.0
    %1974 = vmatmul.mubr.f32.gmra.mrb[0].mxu0 %v1844
    %v1975 = vpop.f32.mrb[0].mxu0
    %v1976 = vadd.f32 0.0, %v1975
    %v1977 = vpop.f32.mrb[0].mxu0
    %v1978 = vadd.f32 0.0, %v1977
    %1979 = vdwg.mxu0
    %1980 = vmatprep.subr.mxu0 %v1848
    %1981 = vmatpush1.msra.mxu0 %v1847
    %1982 = vmatprep.subr.mxu0 %v1852
    %1983 = vmatpush1.msra.mxu0 %v1851
    %1984 = vmatprep.subr.mxu0 %v1856
    %1985 = vmatpush1.msra.mxu0 %v1855
    %1986 = vmatprep.subr.mxu0 %v1860
    %1987 = vmatpush1.msra.mxu0 %v1859
    %1988 = vmatprep.subr.mxu0 %v1864
    %1989 = vmatpush1.msra.mxu0 %v1863
    %1990 = vmatprep.subr.mxu0 %v1868
    %1991 = vmatpush1.msra.mxu0 %v1867
    %1992 = vmatprep.subr.mxu0 %v1872
    %1993 = vmatpush1.msra.mxu0 %v1871
    %1994 = vmatprep.subr.mxu0 %v1876
    %1995 = vmatpush1.msra.mxu0 %v1875
    %1996 = vmatprep.subr.mxu0 %v1880
    %1997 = vmatpush1.msra.mxu0 %v1879
    %1998 = vmatprep.subr.mxu0 %v1884
    %1999 = vmatpush1.msra.mxu0 %v1883
    %2000 = vmatprep.subr.mxu0 %v1888
    %2001 = vmatpush1.msra.mxu0 %v1887
    %2002 = vmatprep.subr.mxu0 %v1892
    %2003 = vmatpush1.msra.mxu0 %v1891
    %2004 = vmatprep.subr.mxu0 %v1896
    %2005 = vmatpush1.msra.mxu0 %v1895
    %2006 = vmatprep.subr.mxu0 %v1900
    %2007 = vmatpush1.msra.mxu0 %v1899
    %2008 = vmatprep.subr.mxu0 %v1904
    %2009 = vmatpush1.msra.mxu0 %v1903
    %2010 = vmatprep.subr.mxu0 %v1908
    %2011 = vmatpush1.msra.mxu0 %v1907
    %2012 = vmatprep.subr.mxu0 0.0
    %2013 = vmatpush1.msra.mxu0 0.0
    %2014 = vmatprep.subr.mxu0 0.0
    %2015 = vmatpush1.msra.mxu0 0.0
    %2016 = vmatprep.subr.mxu0 0.0
    %2017 = vmatpush1.msra.mxu0 0.0
    %2018 = vmatprep.subr.mxu0 0.0
    %2019 = vmatpush1.msra.mxu0 0.0
    %2020 = vmatprep.subr.mxu0 0.0
    %2021 = vmatpush1.msra.mxu0 0.0
    %2022 = vmatprep.subr.mxu0 0.0
    %2023 = vmatpush1.msra.mxu0 0.0
    %2024 = vmatprep.subr.mxu0 0.0
    %2025 = vmatpush1.msra.mxu0 0.0
    %2026 = vmatprep.subr.mxu0 0.0
    %2027 = vmatpush1.msra.mxu0 0.0
    %2028 = vmatprep.subr.mxu0 0.0
    %2029 = vmatpush1.msra.mxu0 0.0
    %2030 = vmatprep.subr.mxu0 0.0
    %2031 = vmatpush1.msra.mxu0 0.0
    %2032 = vmatprep.subr.mxu0 0.0
    %2033 = vmatpush1.msra.mxu0 0.0
    %2034 = vmatprep.subr.mxu0 0.0
    %2035 = vmatpush1.msra.mxu0 0.0
    %2036 = vmatprep.subr.mxu0 0.0
    %2037 = vmatpush1.msra.mxu0 0.0
    %2038 = vmatprep.subr.mxu0 0.0
    %2039 = vmatpush1.msra.mxu0 0.0
    %2040 = vmatprep.subr.mxu0 0.0
    %2041 = vmatpush1.msra.mxu0 0.0
    %2042 = vmatprep.subr.mxu0 0.0
    %2043 = vmatpush1.msra.mxu0 0.0
    %2044 = vmatprep.mubr.f32.mxu0 0.0
    %2045 = vmatmul.mubr.f32.gmra.mrb[0].mxu0 %v1844
    %v2046 = vpop.f32.mrb[0].mxu0
    %v2047 = vadd.f32 0.0, %v2046
    %v2048 = vpop.f32.mrb[0].mxu0
    %v2049 = vadd.f32 0.0, %v2048
    %2050 = vdwg.mxu0
    %v2051 = vadd.f32 %v1840, %v1976
    %v2052 = vadd.f32 %v1841, %v1978
    %v2053 = vadd.f32 %v1842, %v2047
    %v2054 = vadd.f32 %v1843, %v2049
    %v2055 = vxor.u32 %v2051, 2147483648
    %v2056 = vmul.f32 %v2055, 1.442695
    %v2057 = vpow.pop %v2056
    %v2058 = vadd.f32 %v2057, 1.0
    %v2059 = vrcp.pop %v2058
    %v2060 = vmul.f32 1.0, %v2059
    %v2061 = vxor.u32 %v2052, 2147483648
    %v2062 = vmul.f32 %v2061, 1.442695
    %v2063 = vpow.pop %v2062
    %v2064 = vadd.f32 %v2063, 1.0
    %v2065 = vrcp.pop %v2064
    %v2066 = vmul.f32 1.0, %v2065
    %v2067 = vxor.u32 %v2053, 2147483648
    %v2068 = vmul.f32 %v2067, 1.442695
    %v2069 = vpow.pop %v2068
    %v2070 = vadd.f32 %v2069, 1.0
    %v2071 = vrcp.pop %v2070
    %v2072 = vmul.f32 1.0, %v2071
    %v2073 = vtanh.pop %v2054
    %v2074 = vld [vmem:[#allocation4] sm:$0xff]
    %v2075 = vmul.f32 %v2066, %v2074
    %v2076 = vmul.f32 %v2060, %v2073
    %v2077 = vadd.f32 %v2075, %v2076
    %v2078 = vtanh.pop %v2077
    %v2079 = vmul.f32 %v2072, %v2078
    %2080 = vst [vmem:[#allocation4] sm:$0xff] %v2077
    %2081 = vst [vmem:[#allocation3] sm:$0xff] %v2079
    %s2082 = scalar_lea.vmem [#allocation8], 48
    %2083 = vst [vmem:[%s2082] sm:$0xff] %v2079
    %v2084 = vld [vmem:[#allocation2 + $0xe0] sm:$0xff]
    %v2085 = vld [vmem:[#allocation2 + $0xe8] sm:$0xff]
    %v2086 = vld [vmem:[#allocation2 + $0xf0] sm:$0xff]
    %v2087 = vld [vmem:[#allocation2 + $0xf8] sm:$0xff]
    %v2088 = vld [vmem:[#allocation3] sm:$0xff]
    %v2089 = vld [vmem:[#allocation5] sm:$0xff]
    %v2090 = vld [vmem:[#allocation5 + $0x8] sm:$0xff]
    %v2091 = vld [vmem:[#allocation5 + $0x10] sm:$0xff]
    %v2092 = vld [vmem:[#allocation5 + $0x18] sm:$0xff]
    %v2093 = vld [vmem:[#allocation5 + $0x20] sm:$0xff]
    %v2094 = vld [vmem:[#allocation5 + $0x28] sm:$0xff]
    %v2095 = vld [vmem:[#allocation5 + $0x30] sm:$0xff]
    %v2096 = vld [vmem:[#allocation5 + $0x38] sm:$0xff]
    %v2097 = vld [vmem:[#allocation5 + $0x40] sm:$0xff]
    %v2098 = vld [vmem:[#allocation5 + $0x48] sm:$0xff]
    %v2099 = vld [vmem:[#allocation5 + $0x50] sm:$0xff]
    %v2100 = vld [vmem:[#allocation5 + $0x58] sm:$0xff]
    %v2101 = vld [vmem:[#allocation5 + $0x60] sm:$0xff]
    %v2102 = vld [vmem:[#allocation5 + $0x68] sm:$0xff]
    %v2103 = vld [vmem:[#allocation5 + $0x70] sm:$0xff]
    %v2104 = vld [vmem:[#allocation5 + $0x78] sm:$0xff]
    %v2105 = vld [vmem:[#allocation5 + $0x80] sm:$0xff]
    %v2106 = vld [vmem:[#allocation5 + $0x88] sm:$0xff]
    %v2107 = vld [vmem:[#allocation5 + $0x90] sm:$0xff]
    %v2108 = vld [vmem:[#allocation5 + $0x98] sm:$0xff]
    %v2109 = vld [vmem:[#allocation5 + $0xa0] sm:$0xff]
    %v2110 = vld [vmem:[#allocation5 + $0xa8] sm:$0xff]
    %v2111 = vld [vmem:[#allocation5 + $0xb0] sm:$0xff]
    %v2112 = vld [vmem:[#allocation5 + $0xb8] sm:$0xff]
    %v2113 = vld [vmem:[#allocation5 + $0xc0] sm:$0xff]
    %v2114 = vld [vmem:[#allocation5 + $0xc8] sm:$0xff]
    %v2115 = vld [vmem:[#allocation5 + $0xd0] sm:$0xff]
    %v2116 = vld [vmem:[#allocation5 + $0xd8] sm:$0xff]
    %v2117 = vld [vmem:[#allocation5 + $0xe0] sm:$0xff]
    %v2118 = vld [vmem:[#allocation5 + $0xe8] sm:$0xff]
    %v2119 = vld [vmem:[#allocation5 + $0xf0] sm:$0xff]
    %v2120 = vld [vmem:[#allocation5 + $0xf8] sm:$0xff]
    %v2121 = vld [vmem:[#allocation5 + $0x100] sm:$0xff]
    %v2122 = vld [vmem:[#allocation5 + $0x108] sm:$0xff]
    %v2123 = vld [vmem:[#allocation5 + $0x110] sm:$0xff]
    %v2124 = vld [vmem:[#allocation5 + $0x118] sm:$0xff]
    %v2125 = vld [vmem:[#allocation5 + $0x120] sm:$0xff]
    %v2126 = vld [vmem:[#allocation5 + $0x128] sm:$0xff]
    %v2127 = vld [vmem:[#allocation5 + $0x130] sm:$0xff]
    %v2128 = vld [vmem:[#allocation5 + $0x138] sm:$0xff]
    %v2129 = vld [vmem:[#allocation5 + $0x140] sm:$0xff]
    %v2130 = vld [vmem:[#allocation5 + $0x148] sm:$0xff]
    %v2131 = vld [vmem:[#allocation5 + $0x150] sm:$0xff]
    %v2132 = vld [vmem:[#allocation5 + $0x158] sm:$0xff]
    %v2133 = vld [vmem:[#allocation5 + $0x160] sm:$0xff]
    %v2134 = vld [vmem:[#allocation5 + $0x168] sm:$0xff]
    %v2135 = vld [vmem:[#allocation5 + $0x170] sm:$0xff]
    %v2136 = vld [vmem:[#allocation5 + $0x178] sm:$0xff]
    %v2137 = vld [vmem:[#allocation5 + $0x180] sm:$0xff]
    %v2138 = vld [vmem:[#allocation5 + $0x188] sm:$0xff]
    %v2139 = vld [vmem:[#allocation5 + $0x190] sm:$0xff]
    %v2140 = vld [vmem:[#allocation5 + $0x198] sm:$0xff]
    %v2141 = vld [vmem:[#allocation5 + $0x1a0] sm:$0xff]
    %v2142 = vld [vmem:[#allocation5 + $0x1a8] sm:$0xff]
    %v2143 = vld [vmem:[#allocation5 + $0x1b0] sm:$0xff]
    %v2144 = vld [vmem:[#allocation5 + $0x1b8] sm:$0xff]
    %v2145 = vld [vmem:[#allocation5 + $0x1c0] sm:$0xff]
    %v2146 = vld [vmem:[#allocation5 + $0x1c8] sm:$0xff]
    %v2147 = vld [vmem:[#allocation5 + $0x1d0] sm:$0xff]
    %v2148 = vld [vmem:[#allocation5 + $0x1d8] sm:$0xff]
    %v2149 = vld [vmem:[#allocation5 + $0x1e0] sm:$0xff]
    %v2150 = vld [vmem:[#allocation5 + $0x1e8] sm:$0xff]
    %v2151 = vld [vmem:[#allocation5 + $0x1f0] sm:$0xff]
    %v2152 = vld [vmem:[#allocation5 + $0x1f8] sm:$0xff]
    %2153 = vmatprep.subr.mxu0 %v2090
    %2154 = vmatpush1.msra.mxu0 %v2089
    %2155 = vmatprep.subr.mxu0 %v2094
    %2156 = vmatpush1.msra.mxu0 %v2093
    %2157 = vmatprep.subr.mxu0 %v2098
    %2158 = vmatpush1.msra.mxu0 %v2097
    %2159 = vmatprep.subr.mxu0 %v2102
    %2160 = vmatpush1.msra.mxu0 %v2101
    %2161 = vmatprep.subr.mxu0 %v2106
    %2162 = vmatpush1.msra.mxu0 %v2105
    %2163 = vmatprep.subr.mxu0 %v2110
    %2164 = vmatpush1.msra.mxu0 %v2109
    %2165 = vmatprep.subr.mxu0 %v2114
    %2166 = vmatpush1.msra.mxu0 %v2113
    %2167 = vmatprep.subr.mxu0 %v2118
    %2168 = vmatpush1.msra.mxu0 %v2117
    %2169 = vmatprep.subr.mxu0 %v2122
    %2170 = vmatpush1.msra.mxu0 %v2121
    %2171 = vmatprep.subr.mxu0 %v2126
    %2172 = vmatpush1.msra.mxu0 %v2125
    %2173 = vmatprep.subr.mxu0 %v2130
    %2174 = vmatpush1.msra.mxu0 %v2129
    %2175 = vmatprep.subr.mxu0 %v2134
    %2176 = vmatpush1.msra.mxu0 %v2133
    %2177 = vmatprep.subr.mxu0 %v2138
    %2178 = vmatpush1.msra.mxu0 %v2137
    %2179 = vmatprep.subr.mxu0 %v2142
    %2180 = vmatpush1.msra.mxu0 %v2141
    %2181 = vmatprep.subr.mxu0 %v2146
    %2182 = vmatpush1.msra.mxu0 %v2145
    %2183 = vmatprep.subr.mxu0 %v2150
    %2184 = vmatpush1.msra.mxu0 %v2149
    %2185 = vmatprep.subr.mxu0 0.0
    %2186 = vmatpush1.msra.mxu0 0.0
    %2187 = vmatprep.subr.mxu0 0.0
    %2188 = vmatpush1.msra.mxu0 0.0
    %2189 = vmatprep.subr.mxu0 0.0
    %2190 = vmatpush1.msra.mxu0 0.0
    %2191 = vmatprep.subr.mxu0 0.0
    %2192 = vmatpush1.msra.mxu0 0.0
    %2193 = vmatprep.subr.mxu0 0.0
    %2194 = vmatpush1.msra.mxu0 0.0
    %2195 = vmatprep.subr.mxu0 0.0
    %2196 = vmatpush1.msra.mxu0 0.0
    %2197 = vmatprep.subr.mxu0 0.0
    %2198 = vmatpush1.msra.mxu0 0.0
    %2199 = vmatprep.subr.mxu0 0.0
    %2200 = vmatpush1.msra.mxu0 0.0
    %2201 = vmatprep.subr.mxu0 0.0
    %2202 = vmatpush1.msra.mxu0 0.0
    %2203 = vmatprep.subr.mxu0 0.0
    %2204 = vmatpush1.msra.mxu0 0.0
    %2205 = vmatprep.subr.mxu0 0.0
    %2206 = vmatpush1.msra.mxu0 0.0
    %2207 = vmatprep.subr.mxu0 0.0
    %2208 = vmatpush1.msra.mxu0 0.0
    %2209 = vmatprep.subr.mxu0 0.0
    %2210 = vmatpush1.msra.mxu0 0.0
    %2211 = vmatprep.subr.mxu0 0.0
    %2212 = vmatpush1.msra.mxu0 0.0
    %2213 = vmatprep.subr.mxu0 0.0
    %2214 = vmatpush1.msra.mxu0 0.0
    %2215 = vmatprep.subr.mxu0 0.0
    %2216 = vmatpush1.msra.mxu0 0.0
    %2217 = vmatprep.mubr.f32.mxu0 0.0
    %2218 = vmatmul.mubr.f32.gmra.mrb[0].mxu0 %v2088
    %v2219 = vpop.f32.mrb[0].mxu0
    %v2220 = vadd.f32 0.0, %v2219
    %v2221 = vpop.f32.mrb[0].mxu0
    %v2222 = vadd.f32 0.0, %v2221
    %2223 = vdwg.mxu0
    %2224 = vmatprep.subr.mxu0 %v2092
    %2225 = vmatpush1.msra.mxu0 %v2091
    %2226 = vmatprep.subr.mxu0 %v2096
    %2227 = vmatpush1.msra.mxu0 %v2095
    %2228 = vmatprep.subr.mxu0 %v2100
    %2229 = vmatpush1.msra.mxu0 %v2099
    %2230 = vmatprep.subr.mxu0 %v2104
    %2231 = vmatpush1.msra.mxu0 %v2103
    %2232 = vmatprep.subr.mxu0 %v2108
    %2233 = vmatpush1.msra.mxu0 %v2107
    %2234 = vmatprep.subr.mxu0 %v2112
    %2235 = vmatpush1.msra.mxu0 %v2111
    %2236 = vmatprep.subr.mxu0 %v2116
    %2237 = vmatpush1.msra.mxu0 %v2115
    %2238 = vmatprep.subr.mxu0 %v2120
    %2239 = vmatpush1.msra.mxu0 %v2119
    %2240 = vmatprep.subr.mxu0 %v2124
    %2241 = vmatpush1.msra.mxu0 %v2123
    %2242 = vmatprep.subr.mxu0 %v2128
    %2243 = vmatpush1.msra.mxu0 %v2127
    %2244 = vmatprep.subr.mxu0 %v2132
    %2245 = vmatpush1.msra.mxu0 %v2131
    %2246 = vmatprep.subr.mxu0 %v2136
    %2247 = vmatpush1.msra.mxu0 %v2135
    %2248 = vmatprep.subr.mxu0 %v2140
    %2249 = vmatpush1.msra.mxu0 %v2139
    %2250 = vmatprep.subr.mxu0 %v2144
    %2251 = vmatpush1.msra.mxu0 %v2143
    %2252 = vmatprep.subr.mxu0 %v2148
    %2253 = vmatpush1.msra.mxu0 %v2147
    %2254 = vmatprep.subr.mxu0 %v2152
    %2255 = vmatpush1.msra.mxu0 %v2151
    %2256 = vmatprep.subr.mxu0 0.0
    %2257 = vmatpush1.msra.mxu0 0.0
    %2258 = vmatprep.subr.mxu0 0.0
    %2259 = vmatpush1.msra.mxu0 0.0
    %2260 = vmatprep.subr.mxu0 0.0
    %2261 = vmatpush1.msra.mxu0 0.0
    %2262 = vmatprep.subr.mxu0 0.0
    %2263 = vmatpush1.msra.mxu0 0.0
    %2264 = vmatprep.subr.mxu0 0.0
    %2265 = vmatpush1.msra.mxu0 0.0
    %2266 = vmatprep.subr.mxu0 0.0
    %2267 = vmatpush1.msra.mxu0 0.0
    %2268 = vmatprep.subr.mxu0 0.0
    %2269 = vmatpush1.msra.mxu0 0.0
    %2270 = vmatprep.subr.mxu0 0.0
    %2271 = vmatpush1.msra.mxu0 0.0
    %2272 = vmatprep.subr.mxu0 0.0
    %2273 = vmatpush1.msra.mxu0 0.0
    %2274 = vmatprep.subr.mxu0 0.0
    %2275 = vmatpush1.msra.mxu0 0.0
    %2276 = vmatprep.subr.mxu0 0.0
    %2277 = vmatpush1.msra.mxu0 0.0
    %2278 = vmatprep.subr.mxu0 0.0
    %2279 = vmatpush1.msra.mxu0 0.0
    %2280 = vmatprep.subr.mxu0 0.0
    %2281 = vmatpush1.msra.mxu0 0.0
    %2282 = vmatprep.subr.mxu0 0.0
    %2283 = vmatpush1.msra.mxu0 0.0
    %2284 = vmatprep.subr.mxu0 0.0
    %2285 = vmatpush1.msra.mxu0 0.0
    %2286 = vmatprep.subr.mxu0 0.0
    %2287 = vmatpush1.msra.mxu0 0.0
    %2288 = vmatprep.mubr.f32.mxu0 0.0
    %2289 = vmatmul.mubr.f32.gmra.mrb[0].mxu0 %v2088
    %v2290 = vpop.f32.mrb[0].mxu0
    %v2291 = vadd.f32 0.0, %v2290
    %v2292 = vpop.f32.mrb[0].mxu0
    %v2293 = vadd.f32 0.0, %v2292
    %2294 = vdwg.mxu0
    %v2295 = vadd.f32 %v2084, %v2220
    %v2296 = vadd.f32 %v2085, %v2222
    %v2297 = vadd.f32 %v2086, %v2291
    %v2298 = vadd.f32 %v2087, %v2293
    %v2299 = vxor.u32 %v2295, 2147483648
    %v2300 = vmul.f32 %v2299, 1.442695
    %v2301 = vpow.pop %v2300
    %v2302 = vadd.f32 %v2301, 1.0
    %v2303 = vrcp.pop %v2302
    %v2304 = vmul.f32 1.0, %v2303
    %v2305 = vxor.u32 %v2296, 2147483648
    %v2306 = vmul.f32 %v2305, 1.442695
    %v2307 = vpow.pop %v2306
    %v2308 = vadd.f32 %v2307, 1.0
    %v2309 = vrcp.pop %v2308
    %v2310 = vmul.f32 1.0, %v2309
    %v2311 = vxor.u32 %v2297, 2147483648
    %v2312 = vmul.f32 %v2311, 1.442695
    %v2313 = vpow.pop %v2312
    %v2314 = vadd.f32 %v2313, 1.0
    %v2315 = vrcp.pop %v2314
    %v2316 = vmul.f32 1.0, %v2315
    %v2317 = vtanh.pop %v2298
    %v2318 = vld [vmem:[#allocation4] sm:$0xff]
    %v2319 = vmul.f32 %v2310, %v2318
    %v2320 = vmul.f32 %v2304, %v2317
    %v2321 = vadd.f32 %v2319, %v2320
    %v2322 = vtanh.pop %v2321
    %v2323 = vmul.f32 %v2316, %v2322
    %2324 = vst [vmem:[#allocation4] sm:$0xff] %v2321
    %2325 = vst [vmem:[#allocation3] sm:$0xff] %v2323
    %s2326 = scalar_lea.vmem [#allocation8], 56
    %2327 = vst [vmem:[%s2326] sm:$0xff] %v2323
    // Predicated region
    $region34: #{tpu_custom_call.1} parent=1 // pred_check
      %p2328 = pneg %p41
    $region35: #{tpu_custom_call.1} parent=1 // pred_check_branch
      %2330 = sbr.rel (%p2328) target = $region37
    $region36: #{tpu_custom_call.1} parent=1 // pred_region
      %2331 = vst [vmem:[#allocation9] sm:$0xff] %v2321
    $region37: #{tpu_custom_call.1} parent=1 // pred_fallthru
      _
    // Predicated region
    $region38: #{tpu_custom_call.1} parent=1 // pred_check
      _
    $region39: #{tpu_custom_call.1} parent=1 // pred_check_branch
      %2333 = sbr.rel (0) target = $region41
    $region40: #{tpu_custom_call.1} parent=1 // pred_region
      %s2335 = ssub.s32 1024, 1024
      %2336 = vsyncadd [#allocation7], %s2335
      %s2337 = sshll.u32 [#allocation8], 4
      %s2338 = int_to_ptr.vmem [resolvable:$true] %s2337
      %2343 = dma.vmem_to_hbm [thread:$0]  %s2338, 1024, %s6, [#allocation7], 128, 128, 8
    $region41: #{tpu_custom_call.1} parent=1 // pred_fallthru
      _
    // Predicated region
    $region42: #{tpu_custom_call.1} parent=1 // pred_check
      _
    $region43: #{tpu_custom_call.1} parent=1 // pred_check_branch
      %2345 = sbr.rel (0) target = $region45
    $region44: #{tpu_custom_call.1} parent=1 // pred_region
      %s2347 = ssub.s32 128, 128
      %2348 = vsyncadd [#allocation10], %s2347
      %s2350 = sshll.u32 [#allocation9], 4
      %s2351 = int_to_ptr.vmem [resolvable:$true] %s2350
      %2353 = dma.vmem_to_hbm [thread:$0]  %s2351, 128, %s7, [#allocation10]
    $region45: #{tpu_custom_call.1} parent=1 // pred_fallthru
      _
    // Predicated region
    $region46: #{tpu_custom_call.1} parent=1 // pred_check
      _
    $region47: #{tpu_custom_call.1} parent=1 // pred_check_branch
      %2355 = sbr.rel (0) target = $region49
    $region48: #{tpu_custom_call.1} parent=1 // pred_region
      %2356 = dma.done [#allocation7], 1024
    $region49: #{tpu_custom_call.1} parent=1 // pred_fallthru
      _
    // Predicated region
    $region50: #{tpu_custom_call.1} parent=1 // pred_check
      _
    $region51: #{tpu_custom_call.1} parent=1 // pred_check_branch
      %2358 = sbr.rel (0) target = $region53
    $region52: #{tpu_custom_call.1} parent=1 // pred_region
      %2359 = dma.done [#allocation10], 128
    $region53: #{tpu_custom_call.1} parent=1 // pred_fallthru
      _
    %2360 = vsyncpa [#allocation6], 1
    %2361 = vsyncpa [#allocation7], 1
    %2362 = vsyncpa [#allocation10], 1

</llo_original>
